<compile_context>
chip_gen: v5e
topology: v5e:2x2
jax: 0.10.0
libtpu: 0.0.40
codegen_flags: <defaults>
</compile_context>

<pallas_src>
import jax
import jax.numpy as jnp
from jax import lax
from jax.experimental import pallas as pl
from jax.experimental.pallas import tpu as pltpu

SELU_ALPHA = 1.6732632423543772848170429916717
SELU_SCALE = 1.0507009873554804934193349852946
BN_EPS = 1e-5


def _round16(c):
    return max(16, ((c + 15) // 16) * 16)


# --------------------------------------------------------------------------- #
# Fused Pallas kernel: whole C3 block for a block of Nb images
# --------------------------------------------------------------------------- #
def _c3_kernel(x_ref,                 # (Nb, H, W, CK)  bf16 — c1 real channels, zero-padded
               w12_ref, b12_ref,      # (CK, 2CK) bf16, (1, 2CK) f32 — fused cv1 | cv2
               wm1_ref, bm1_ref,      # (2CK, CK) bf16, (1, CK) f32  — m.cv1 (1x1)
               wm2_ref, bm2_ref,      # (9, CK, 2CK) bf16, (1, 2CK) f32 — m.cv2 (3x3 taps)
               w3_ref, b3_ref,        # (2CK, CK) bf16, (1, CK) f32  — cv3 on combined layout
               o_ref,                 # (Nb, H, W, CK) bf16
               pad_ref):              # VMEM scratch (Nb, H+2, W+2, CK) bf16 (halo)
    Nb, H, W, CK = x_ref.shape
    C2K = w12_ref.shape[1]            # == 2 * CK
    M = Nb * H * W

    def mm(a, w):
        # bf16 x bf16 -> f32 on the MXU
        return jnp.dot(a, w, preferred_element_type=jnp.float32)

    def bias_selu(y, b_ref):
        y = y + b_ref[...]
        # padded lanes have zero weight cols + zero bias, and SELU(0)=0, so they stay 0
        return SELU_SCALE * jnp.where(y > 0, y, SELU_ALPHA * (jnp.exp(y) - 1.0))

    x = x_ref[...].reshape(M, CK)                               # bf16 (M, CK)

    # Fused cv1 | cv2 (both 1x1 Conv+BN+SELU):
    #   lanes [0:c_]      = cv1(x)   (feeds the bottleneck + residual)
    #   lanes [CK:CK+c_]  = cv2(x)   (feeds cv3's second half)
    ac = bias_selu(mm(x, w12_ref[...]), b12_ref)                # f32 (M, 2CK)

    # Bottleneck m.cv1 (1x1). Rows [CK:] of wm1 are zero, so only the cv1 half contributes.
    b1 = bias_selu(mm(ac.astype(jnp.bfloat16), wm1_ref[...]), bm1_ref)   # f32 (M, CK)

    # Bottleneck m.cv2 (3x3, pad=1): halo scratch + 9 per-tap matmuls accumulated in f32.
    # Only the 1-pixel border is re-zeroed each step (interior always overwritten; scratch
    # is per-core under megacore so a one-time program_id==0 zero would be unsafe).
    pad_ref[:, 0:1, :, :] = jnp.zeros((Nb, 1, W + 2, CK), jnp.bfloat16)
    pad_ref[:, H + 1:H + 2, :, :] = jnp.zeros((Nb, 1, W + 2, CK), jnp.bfloat16)
    pad_ref[:, :, 0:1, :] = jnp.zeros((Nb, H + 2, 1, CK), jnp.bfloat16)
    pad_ref[:, :, W + 1:W + 2, :] = jnp.zeros((Nb, H + 2, 1, CK), jnp.bfloat16)
    pad_ref[:, 1:H + 1, 1:W + 1, :] = b1.astype(jnp.bfloat16).reshape(Nb, H, W, CK)

    acc = jnp.zeros((M, C2K), jnp.float32)
    for dy in range(3):
        for dx in range(3):
            tap = pad_ref[:, dy:dy + H, dx:dx + W, :].reshape(M, CK)     # bf16 (M, CK)
            acc = acc + mm(tap, wm2_ref[dy * 3 + dx])
    b2 = bias_selu(acc, bm2_ref)                                # f32 (M, 2CK); lanes [CK:] == 0

    # Residual add + implicit concat in one add:
    #   lanes [0:c_]     = cv1(x) + bottleneck(cv1(x))  == m
    #   lanes [CK:CK+c_] = cv2(x)                        == c
    m_comb = ac + b2

    # cv3 (1x1 over concat([m, c])) as a single matmul on the combined lane layout.
    y = bias_selu(mm(m_comb.astype(jnp.bfloat16), w3_ref[...]), b3_ref)  # f32 (M, CK)

    o_ref[...] = y.reshape(Nb, H, W, CK).astype(o_ref.dtype)


def c3_pallas(x, w12, b12, wm1, bm1, wm2, bm2, w3, b3, nb):
    N, H, W, ck = x.shape
    steps = N // nb

    def full(arr):  # whole-array block, grid-invariant
        return pl.BlockSpec(arr.shape, lambda n, _nd=arr.ndim: (0,) * _nd)

    # VMEM budget derived from actual buffer sizes (with headroom), not a hard-coded value.
    blk = nb * H * W * ck
    est = (4 * blk * 2                              # x + out blocks, double-buffered, bf16
           + nb * (H + 2) * (W + 2) * ck * 2        # halo scratch
           + 28 * blk * 4)                          # f32 intermediates headroom
    vmem_limit = int(min(max(4 * est, 16 << 20), 32 << 20))

    return pl.pallas_call(
        _c3_kernel,
        out_shape=jax.ShapeDtypeStruct((N, H, W, ck), jnp.bfloat16),
        grid=(steps,),
        in_specs=[
            pl.BlockSpec((nb, H, W, ck), lambda n: (n, 0, 0, 0)),
            full(w12), full(b12), full(wm1), full(bm1),
            full(wm2), full(bm2), full(w3), full(b3),
        ],
        out_specs=pl.BlockSpec((nb, H, W, ck), lambda n: (n, 0, 0, 0)),
        scratch_shapes=[pltpu.VMEM((nb, H + 2, W + 2, ck), jnp.bfloat16)],
        compiler_params=pltpu.CompilerParams(
            dimension_semantics=("parallel",),
            vmem_limit_bytes=vmem_limit),
    )(x, w12, b12, wm1, bm1, wm2, bm2, w3, b3)


# --------------------------------------------------------------------------- #
# Host-side parameter folding (BN scale into weights, packed lane layouts)
# --------------------------------------------------------------------------- #
def _bn_fold(bn):
    gamma, beta, mean, var = bn
    s = gamma / jnp.sqrt(var + BN_EPS)
    return s, beta - mean * s


def _fold_1x1(w_oihw, bn):
    s, b = _bn_fold(bn)
    return (w_oihw[:, :, 0, 0] * s[:, None]).T, b       # (ci, co) with BN scale folded, bias


def _pack_cv12(p, c1, c_, ck):
    w1, b1 = _fold_1x1(p["cv1_w"], p["cv1_bn"])
    w2, b2 = _fold_1x1(p["cv2_w"], p["cv2_bn"])
    w = jnp.zeros((ck, 2 * ck), jnp.float32)
    w = w.at[:c1, :c_].set(w1).at[:c1, ck:ck + c_].set(w2)
    b = jnp.zeros((1, 2 * ck), jnp.float32)
    b = b.at[0, :c_].set(b1).at[0, ck:ck + c_].set(b2)
    return w.astype(jnp.bfloat16), b


def _pack_m_cv1(p, c_, ck):
    w1, b1 = _fold_1x1(p["m_cv1_w"], p["m_cv1_bn"])
    w = jnp.zeros((2 * ck, ck), jnp.float32).at[:c_, :c_].set(w1)
    b = jnp.zeros((1, ck), jnp.float32).at[0, :c_].set(b1)
    return w.astype(jnp.bfloat16), b


def _pack_m_cv2(p, c_, ck):
    s, b0 = _bn_fold(p["m_cv2_bn"])
    wf = p["m_cv2_w"] * s[:, None, None, None]           # (c_, c_, 3, 3) OIHW, BN folded
    w = jnp.zeros((9, ck, 2 * ck), jnp.float32)
    for dy in range(3):
        for dx in range(3):
            w = w.at[dy * 3 + dx, :c_, :c_].set(wf[:, :, dy, dx].T)
    b = jnp.zeros((1, 2 * ck), jnp.float32).at[0, :c_].set(b0)
    return w.astype(jnp.bfloat16), b


def _pack_cv3(p, c_, c2, ck):
    w3, b3 = _fold_1x1(p["cv3_w"], p["cv3_bn"])          # (2*c_, c2)
    w = jnp.zeros((2 * ck, ck), jnp.float32)
    w = w.at[:c_, :c2].set(w3[:c_]).at[ck:ck + c_, :c2].set(w3[c_:])
    b = jnp.zeros((1, ck), jnp.float32).at[0, :c2].set(b3)
    return w.astype(jnp.bfloat16), b


def _pick_batch_block(N, H, W, ck):
    # Fold batch to amortize per-grid-step overhead, but keep >= 2 grid steps when N >= 2
    # so both v7x TensorCores get a "parallel" step; cap by a per-step VMEM budget.
    per_img = H * W * ck * (4 * 2 + 28 * 4) + (H + 2) * (W + 2) * ck * 2
    cap = max(1, (12 << 20) // max(per_img, 1))
    nb = min(cap, max(1, N // 2)) if N >= 2 else max(1, N)
    nb = max(1, int(nb))
    while N % nb:
        nb -= 1
    return nb


def c3_forward(x_nchw, p):
    N, c1, H, W = x_nchw.shape
    c2 = p["cv3_w"].shape[0]
    c_ = p["cv1_w"].shape[0]
    ck = max(_round16(c1), _round16(c_), _round16(c2))   # bf16 sublane-pack channel width

    x = jnp.transpose(x_nchw, (0, 2, 3, 1)).astype(jnp.bfloat16)       # NCHW -> NHWC
    x = jnp.pad(x, ((0, 0), (0, 0), (0, 0), (0, ck - c1)))             # K padded once, host-side

    w12, b12 = _pack_cv12(p, c1, c_, ck)
    wm1, bm1 = _pack_m_cv1(p, c_, ck)
    wm2, bm2 = _pack_m_cv2(p, c_, ck)
    w3, b3 = _pack_cv3(p, c_, c2, ck)

    nb = _pick_batch_block(N, H, W, ck)
    out = c3_pallas(x, w12, b12, wm1, bm1, wm2, bm2, w3, b3, nb)       # (N, H, W, ck) bf16
    out = out[..., :c2].astype(jnp.float32)                            # drop lane padding
    return jnp.transpose(out, (0, 3, 1, 2))                            # NHWC -> NCHW


# --------------------------------------------------------------------------- #
# Pure-JAX f32 reference (lax convs) for a correctness check
# --------------------------------------------------------------------------- #
def _ref_conv(x_nhwc, w_oihw, bn, pad):
    y = lax.conv_general_dilated(
        x_nhwc, jnp.transpose(w_oihw, (2, 3, 1, 0)), (1, 1),
        [(pad, pad), (pad, pad)], dimension_numbers=("NHWC", "HWIO", "NHWC"))
    s, b = _bn_fold(bn)
    return jax.nn.selu(y * s + b)


def c3_reference(x_nchw, p):
    x = jnp.transpose(x_nchw, (0, 2, 3, 1))
    a = _ref_conv(x, p["cv1_w"], p["cv1_bn"], 0)
    b2 = _ref_conv(_ref_conv(a, p["m_cv1_w"], p["m_cv1_bn"], 0),
                   p["m_cv2_w"], p["m_cv2_bn"], 1)
    m_out = a + b2                                             # shortcut (c_ == c_)
    c = _ref_conv(x, p["cv2_w"], p["cv2_bn"], 0)
    out = _ref_conv(jnp.concatenate([m_out, c], axis=-1), p["cv3_w"], p["cv3_bn"], 0)
    return jnp.transpose(out, (0, 3, 1, 2))


# --------------------------------------------------------------------------- #
def make_params(key, c1, c2, e=0.5):
    c_ = int(c2 * e)
    ks = jax.random.split(key, 10)

    def bn_params(k, c):
        k1, k2, k3, k4 = jax.random.split(k, 4)
        return (1.0 + 0.1 * jax.random.normal(k1, (c,), jnp.float32),
                0.1 * jax.random.normal(k2, (c,), jnp.float32),
                0.1 * jax.random.normal(k3, (c,), jnp.float32),
                1.0 + 0.1 * jax.random.uniform(k4, (c,), jnp.float32))

    return {
        # Conv2d weights in PyTorch OIHW layout (Conv uses bias=False)
        "cv1_w": 0.1 * jax.random.normal(ks[0], (c_, c1, 1, 1), jnp.float32),
        "cv1_bn": bn_params(ks[1], c_),
        "cv2_w": 0.1 * jax.random.normal(ks[2], (c_, c1, 1, 1), jnp.float32),
        "cv2_bn": bn_params(ks[3], c_),
        "cv3_w": 0.1 * jax.random.normal(ks[4], (c2, 2 * c_, 1, 1), jnp.float32),
        "cv3_bn": bn_params(ks[5], c2),
        "m_cv1_w": 0.1 * jax.random.normal(ks[6], (c_, c_, 1, 1), jnp.float32),
        "m_cv1_bn": bn_params(ks[7], c_),
        "m_cv2_w": 0.1 * jax.random.normal(ks[8], (c_, c_, 3, 3), jnp.float32),
        "m_cv2_bn": bn_params(ks[9], c_),
    }


if __name__ == "__main__":
    # C3(c1=8, c2=8, n=1, shortcut=True)  ->  c_ = 4
    c1 = c2 = 8
    N, H, W = 2, 16, 16

    key = jax.random.PRNGKey(0)
    kx, kp = jax.random.split(key)
    x = jax.random.normal(kx, (N, c1, H, W), jnp.float32)      # NCHW, like PyTorch
    params = make_params(kp, c1, c2)

    out = jax.block_until_ready(jax.jit(c3_forward)(x, params))
    ref = jax.block_until_ready(c3_reference(x, params))

    assert out.shape == (N, c2, H, W), out.shape
    err = float(jnp.max(jnp.abs(out - ref)))
    # bf16 MXU operands + bf16 output vs an f32 lax reference -> modest tolerance
    assert jnp.allclose(out, ref, rtol=2e-2, atol=2e-2), err

    print("KERNEL_OK")
</pallas_src>

<mosaic_0001>
module attributes {stable_mosaic.version = 11 : i64} {
  func.func @_c3_kernel(%arg0: i32, %arg1: memref<1x16x16x16xbf16, #tpu.memory_space<vmem>>, %arg2: memref<16x32xbf16, #tpu.memory_space<vmem>>, %arg3: memref<1x32xf32, #tpu.memory_space<vmem>>, %arg4: memref<32x16xbf16, #tpu.memory_space<vmem>>, %arg5: memref<1x16xf32, #tpu.memory_space<vmem>>, %arg6: memref<9x16x32xbf16, #tpu.memory_space<vmem>>, %arg7: memref<1x32xf32, #tpu.memory_space<vmem>>, %arg8: memref<32x16xbf16, #tpu.memory_space<vmem>>, %arg9: memref<1x16xf32, #tpu.memory_space<vmem>>, %arg10: memref<1x16x16x16xbf16, #tpu.memory_space<vmem>>, %arg11: memref<1x18x18x16xbf16, #tpu.memory_space<vmem>>) attributes {dimension_semantics = [#tpu.dimension_semantics<parallel>], iteration_bounds = array<i64: 2>, scalar_prefetch = 0 : i64, scratch_operands = 1 : i64, tpu.core_type = #tpu.core_type<tc>, window_params = [{transform_indices = @transform_0, window_bounds = array<i64: 1, 16, 16, 16>}, {pipeline_mode = #tpu.pipeline_mode<synchronous>, transform_indices = @transform_1, window_bounds = array<i64: 16, 32>}, {pipeline_mode = #tpu.pipeline_mode<synchronous>, transform_indices = @transform_2, window_bounds = array<i64: 1, 32>}, {pipeline_mode = #tpu.pipeline_mode<synchronous>, transform_indices = @transform_3, window_bounds = array<i64: 32, 16>}, {pipeline_mode = #tpu.pipeline_mode<synchronous>, transform_indices = @transform_4, window_bounds = array<i64: 1, 16>}, {pipeline_mode = #tpu.pipeline_mode<synchronous>, transform_indices = @transform_5, window_bounds = array<i64: 9, 16, 32>}, {pipeline_mode = #tpu.pipeline_mode<synchronous>, transform_indices = @transform_6, window_bounds = array<i64: 1, 32>}, {pipeline_mode = #tpu.pipeline_mode<synchronous>, transform_indices = @transform_7, window_bounds = array<i64: 32, 16>}, {pipeline_mode = #tpu.pipeline_mode<synchronous>, transform_indices = @transform_8, window_bounds = array<i64: 1, 16>}, {transform_indices = @transform_9, window_bounds = array<i64: 1, 16, 16, 16>}]} {
    %c0 = arith.constant 0 : index
    %c0_0 = arith.constant 0 : index
    %c0_1 = arith.constant 0 : index
    %c0_2 = arith.constant 0 : index
    %0 = vector.load %arg1[%c0, %c0_0, %c0_1, %c0_2] : memref<1x16x16x16xbf16, #tpu.memory_space<vmem>>, vector<1x16x16x16xbf16>
    %1 = vector.shape_cast %0 : vector<1x16x16x16xbf16> to vector<256x16xbf16>
    %c0_3 = arith.constant 0 : index
    %c0_4 = arith.constant 0 : index
    %2 = vector.load %arg2[%c0_3, %c0_4] : memref<16x32xbf16, #tpu.memory_space<vmem>>, vector<16x32xbf16>
    %cst = arith.constant dense<0.000000e+00> : vector<256x32xf32>
    %3 = tpu.matmul %1, %2, %cst {dimension_numbers = #tpu.dot_dimension_numbers<[1], [0], [0], [1], [0, 0, 1, 1], [], []>} : vector<256x16xbf16>, vector<16x32xbf16>, vector<256x32xf32> -> vector<256x32xf32>
    %c0_5 = arith.constant 0 : index
    %c0_6 = arith.constant 0 : index
    %4 = vector.load %arg3[%c0_5, %c0_6] : memref<1x32xf32, #tpu.memory_space<vmem>>, vector<1x32xf32>
    %5 = vector.broadcast %4 : vector<1x32xf32> to vector<256x32xf32>
    %6 = arith.addf %3, %5 : vector<256x32xf32>
    %cst_7 = arith.constant 0.000000e+00 : f32
    %7 = vector.broadcast %cst_7 : f32 to vector<256x32xf32>
    %8 = arith.cmpf ogt, %6, %7 : vector<256x32xf32>
    %9 = math.exp %6 : vector<256x32xf32>
    %cst_8 = arith.constant 1.000000e+00 : f32
    %10 = vector.broadcast %cst_8 : f32 to vector<256x32xf32>
    %11 = arith.subf %9, %10 : vector<256x32xf32>
    %cst_9 = arith.constant 1.67326319 : f32
    %12 = vector.broadcast %cst_9 : f32 to vector<256x32xf32>
    %13 = arith.mulf %12, %11 : vector<256x32xf32>
    %14 = arith.select %8, %6, %13 : vector<256x32xi1>, vector<256x32xf32>
    %cst_10 = arith.constant 1.05070102 : f32
    %15 = vector.broadcast %cst_10 : f32 to vector<256x32xf32>
    %16 = arith.mulf %15, %14 : vector<256x32xf32>
    %17 = arith.truncf %16 : vector<256x32xf32> to vector<256x32xbf16>
    %c0_11 = arith.constant 0 : index
    %c0_12 = arith.constant 0 : index
    %18 = vector.load %arg4[%c0_11, %c0_12] : memref<32x16xbf16, #tpu.memory_space<vmem>>, vector<32x16xbf16>
    %cst_13 = arith.constant dense<0.000000e+00> : vector<256x16xf32>
    %19 = tpu.matmul %17, %18, %cst_13 {dimension_numbers = #tpu.dot_dimension_numbers<[1], [0], [0], [1], [0, 0, 1, 1], [], []>} : vector<256x32xbf16>, vector<32x16xbf16>, vector<256x16xf32> -> vector<256x16xf32>
    %c0_14 = arith.constant 0 : index
    %c0_15 = arith.constant 0 : index
    %20 = vector.load %arg5[%c0_14, %c0_15] : memref<1x16xf32, #tpu.memory_space<vmem>>, vector<1x16xf32>
    %21 = vector.broadcast %20 : vector<1x16xf32> to vector<256x16xf32>
    %22 = arith.addf %19, %21 : vector<256x16xf32>
    %cst_16 = arith.constant 0.000000e+00 : f32
    %23 = vector.broadcast %cst_16 : f32 to vector<256x16xf32>
    %24 = arith.cmpf ogt, %22, %23 : vector<256x16xf32>
    %25 = math.exp %22 : vector<256x16xf32>
    %cst_17 = arith.constant 1.000000e+00 : f32
    %26 = vector.broadcast %cst_17 : f32 to vector<256x16xf32>
    %27 = arith.subf %25, %26 : vector<256x16xf32>
    %cst_18 = arith.constant 1.67326319 : f32
    %28 = vector.broadcast %cst_18 : f32 to vector<256x16xf32>
    %29 = arith.mulf %28, %27 : vector<256x16xf32>
    %30 = arith.select %24, %22, %29 : vector<256x16xi1>, vector<256x16xf32>
    %cst_19 = arith.constant 1.05070102 : f32
    %31 = vector.broadcast %cst_19 : f32 to vector<256x16xf32>
    %32 = arith.mulf %31, %30 : vector<256x16xf32>
    %cst_20 = arith.constant 0.000000e+00 : bf16
    %33 = vector.broadcast %cst_20 : bf16 to vector<1x1x18x16xbf16>
    %c0_21 = arith.constant 0 : index
    %c0_22 = arith.constant 0 : index
    %c0_23 = arith.constant 0 : index
    %c0_24 = arith.constant 0 : index
    %34 = vector.load %arg11[%c0_21, %c0_22, %c0_23, %c0_24] : memref<1x18x18x16xbf16, #tpu.memory_space<vmem>>, vector<1x1x18x16xbf16>
    tpu.vector_store %arg11[%c0_21, %c0_22, %c0_23, %c0_24], %33 {strides = array<i32>} : memref<1x18x18x16xbf16, #tpu.memory_space<vmem>>, vector<1x1x18x16xbf16>,
    %cst_25 = arith.constant 0.000000e+00 : bf16
    %35 = vector.broadcast %cst_25 : bf16 to vector<1x1x18x16xbf16>
    %c0_26 = arith.constant 0 : index
    %c17 = arith.constant 17 : index
    %c0_27 = arith.constant 0 : index
    %c0_28 = arith.constant 0 : index
    %36 = vector.load %arg11[%c0_26, %c17, %c0_27, %c0_28] : memref<1x18x18x16xbf16, #tpu.memory_space<vmem>>, vector<1x1x18x16xbf16>
    tpu.vector_store %arg11[%c0_26, %c17, %c0_27, %c0_28], %35 {strides = array<i32>} : memref<1x18x18x16xbf16, #tpu.memory_space<vmem>>, vector<1x1x18x16xbf16>,
    %cst_29 = arith.constant 0.000000e+00 : bf16
    %37 = vector.broadcast %cst_29 : bf16 to vector<1x18x1x16xbf16>
    %c0_30 = arith.constant 0 : index
    %c0_31 = arith.constant 0 : index
    %c0_32 = arith.constant 0 : index
    %c0_33 = arith.constant 0 : index
    %38 = vector.load %arg11[%c0_30, %c0_31, %c0_32, %c0_33] : memref<1x18x18x16xbf16, #tpu.memory_space<vmem>>, vector<1x18x1x16xbf16>
    tpu.vector_store %arg11[%c0_30, %c0_31, %c0_32, %c0_33], %37 {strides = array<i32>} : memref<1x18x18x16xbf16, #tpu.memory_space<vmem>>, vector<1x18x1x16xbf16>,
    %cst_34 = arith.constant 0.000000e+00 : bf16
    %39 = vector.broadcast %cst_34 : bf16 to vector<1x18x1x16xbf16>
    %c0_35 = arith.constant 0 : index
    %c0_36 = arith.constant 0 : index
    %c17_37 = arith.constant 17 : index
    %c0_38 = arith.constant 0 : index
    %40 = vector.load %arg11[%c0_35, %c0_36, %c17_37, %c0_38] : memref<1x18x18x16xbf16, #tpu.memory_space<vmem>>, vector<1x18x1x16xbf16>
    tpu.vector_store %arg11[%c0_35, %c0_36, %c17_37, %c0_38], %39 {strides = array<i32>} : memref<1x18x18x16xbf16, #tpu.memory_space<vmem>>, vector<1x18x1x16xbf16>,
    %41 = arith.truncf %32 : vector<256x16xf32> to vector<256x16xbf16>
    %42 = vector.shape_cast %41 : vector<256x16xbf16> to vector<1x16x16x16xbf16>
    %c0_39 = arith.constant 0 : index
    %c1 = arith.constant 1 : index
    %c1_40 = arith.constant 1 : index
    %c0_41 = arith.constant 0 : index
    %43 = vector.load %arg11[%c0_39, %c1, %c1_40, %c0_41] : memref<1x18x18x16xbf16, #tpu.memory_space<vmem>>, vector<1x16x16x16xbf16>
    tpu.vector_store %arg11[%c0_39, %c1, %c1_40, %c0_41], %42 {strides = array<i32>} : memref<1x18x18x16xbf16, #tpu.memory_space<vmem>>, vector<1x16x16x16xbf16>,
    %cst_42 = arith.constant 0.000000e+00 : f32
    %44 = vector.broadcast %cst_42 : f32 to vector<256x32xf32>
    %c0_43 = arith.constant 0 : index
    %c0_44 = arith.constant 0 : index
    %c0_45 = arith.constant 0 : index
    %c0_46 = arith.constant 0 : index
    %45 = vector.load %arg11[%c0_43, %c0_44, %c0_45, %c0_46] : memref<1x18x18x16xbf16, #tpu.memory_space<vmem>>, vector<1x16x16x16xbf16>
    %46 = vector.shape_cast %45 : vector<1x16x16x16xbf16> to vector<256x16xbf16>
    %c0_47 = arith.constant 0 : index
    %c0_48 = arith.constant 0 : index
    %c0_49 = arith.constant 0 : index
    %47 = vector.load %arg6[%c0_47, %c0_48, %c0_49] : memref<9x16x32xbf16, #tpu.memory_space<vmem>>, vector<1x16x32xbf16>
    %48 = vector.shape_cast %47 : vector<1x16x32xbf16> to vector<16x32xbf16>
    %cst_50 = arith.constant dense<0.000000e+00> : vector<256x32xf32>
    %49 = tpu.matmul %46, %48, %cst_50 {dimension_numbers = #tpu.dot_dimension_numbers<[1], [0], [0], [1], [0, 0, 1, 1], [], []>} : vector<256x16xbf16>, vector<16x32xbf16>, vector<256x32xf32> -> vector<256x32xf32>
    %50 = arith.addf %44, %49 : vector<256x32xf32>
    %c0_51 = arith.constant 0 : index
    %c0_52 = arith.constant 0 : index
    %c1_53 = arith.constant 1 : index
    %c0_54 = arith.constant 0 : index
    %51 = vector.load %arg11[%c0_51, %c0_52, %c1_53, %c0_54] : memref<1x18x18x16xbf16, #tpu.memory_space<vmem>>, vector<1x16x16x16xbf16>
    %52 = vector.shape_cast %51 : vector<1x16x16x16xbf16> to vector<256x16xbf16>
    %c1_55 = arith.constant 1 : index
    %c0_56 = arith.constant 0 : index
    %c0_57 = arith.constant 0 : index
    %53 = vector.load %arg6[%c1_55, %c0_56, %c0_57] : memref<9x16x32xbf16, #tpu.memory_space<vmem>>, vector<1x16x32xbf16>
    %54 = vector.shape_cast %53 : vector<1x16x32xbf16> to vector<16x32xbf16>
    %cst_58 = arith.constant dense<0.000000e+00> : vector<256x32xf32>
    %55 = tpu.matmul %52, %54, %cst_58 {dimension_numbers = #tpu.dot_dimension_numbers<[1], [0], [0], [1], [0, 0, 1, 1], [], []>} : vector<256x16xbf16>, vector<16x32xbf16>, vector<256x32xf32> -> vector<256x32xf32>
    %56 = arith.addf %50, %55 : vector<256x32xf32>
    %c0_59 = arith.constant 0 : index
    %c0_60 = arith.constant 0 : index
    %c2 = arith.constant 2 : index
    %c0_61 = arith.constant 0 : index
    %57 = vector.load %arg11[%c0_59, %c0_60, %c2, %c0_61] : memref<1x18x18x16xbf16, #tpu.memory_space<vmem>>, vector<1x16x16x16xbf16>
    %58 = vector.shape_cast %57 : vector<1x16x16x16xbf16> to vector<256x16xbf16>
    %c2_62 = arith.constant 2 : index
    %c0_63 = arith.constant 0 : index
    %c0_64 = arith.constant 0 : index
    %59 = vector.load %arg6[%c2_62, %c0_63, %c0_64] : memref<9x16x32xbf16, #tpu.memory_space<vmem>>, vector<1x16x32xbf16>
    %60 = vector.shape_cast %59 : vector<1x16x32xbf16> to vector<16x32xbf16>
    %cst_65 = arith.constant dense<0.000000e+00> : vector<256x32xf32>
    %61 = tpu.matmul %58, %60, %cst_65 {dimension_numbers = #tpu.dot_dimension_numbers<[1], [0], [0], [1], [0, 0, 1, 1], [], []>} : vector<256x16xbf16>, vector<16x32xbf16>, vector<256x32xf32> -> vector<256x32xf32>
    %62 = arith.addf %56, %61 : vector<256x32xf32>
    %c0_66 = arith.constant 0 : index
    %c1_67 = arith.constant 1 : index
    %c0_68 = arith.constant 0 : index
    %c0_69 = arith.constant 0 : index
    %63 = vector.load %arg11[%c0_66, %c1_67, %c0_68, %c0_69] : memref<1x18x18x16xbf16, #tpu.memory_space<vmem>>, vector<1x16x16x16xbf16>
    %64 = vector.shape_cast %63 : vector<1x16x16x16xbf16> to vector<256x16xbf16>
    %c3 = arith.constant 3 : index
    %c0_70 = arith.constant 0 : index
    %c0_71 = arith.constant 0 : index
    %65 = vector.load %arg6[%c3, %c0_70, %c0_71] : memref<9x16x32xbf16, #tpu.memory_space<vmem>>, vector<1x16x32xbf16>
    %66 = vector.shape_cast %65 : vector<1x16x32xbf16> to vector<16x32xbf16>
    %cst_72 = arith.constant dense<0.000000e+00> : vector<256x32xf32>
    %67 = tpu.matmul %64, %66, %cst_72 {dimension_numbers = #tpu.dot_dimension_numbers<[1], [0], [0], [1], [0, 0, 1, 1], [], []>} : vector<256x16xbf16>, vector<16x32xbf16>, vector<256x32xf32> -> vector<256x32xf32>
    %68 = arith.addf %62, %67 : vector<256x32xf32>
    %c0_73 = arith.constant 0 : index
    %c1_74 = arith.constant 1 : index
    %c1_75 = arith.constant 1 : index
    %c0_76 = arith.constant 0 : index
    %69 = vector.load %arg11[%c0_73, %c1_74, %c1_75, %c0_76] : memref<1x18x18x16xbf16, #tpu.memory_space<vmem>>, vector<1x16x16x16xbf16>
    %70 = vector.shape_cast %69 : vector<1x16x16x16xbf16> to vector<256x16xbf16>
    %c4 = arith.constant 4 : index
    %c0_77 = arith.constant 0 : index
    %c0_78 = arith.constant 0 : index
    %71 = vector.load %arg6[%c4, %c0_77, %c0_78] : memref<9x16x32xbf16, #tpu.memory_space<vmem>>, vector<1x16x32xbf16>
    %72 = vector.shape_cast %71 : vector<1x16x32xbf16> to vector<16x32xbf16>
    %cst_79 = arith.constant dense<0.000000e+00> : vector<256x32xf32>
    %73 = tpu.matmul %70, %72, %cst_79 {dimension_numbers = #tpu.dot_dimension_numbers<[1], [0], [0], [1], [0, 0, 1, 1], [], []>} : vector<256x16xbf16>, vector<16x32xbf16>, vector<256x32xf32> -> vector<256x32xf32>
    %74 = arith.addf %68, %73 : vector<256x32xf32>
    %c0_80 = arith.constant 0 : index
    %c1_81 = arith.constant 1 : index
    %c2_82 = arith.constant 2 : index
    %c0_83 = arith.constant 0 : index
    %75 = vector.load %arg11[%c0_80, %c1_81, %c2_82, %c0_83] : memref<1x18x18x16xbf16, #tpu.memory_space<vmem>>, vector<1x16x16x16xbf16>
    %76 = vector.shape_cast %75 : vector<1x16x16x16xbf16> to vector<256x16xbf16>
    %c5 = arith.constant 5 : index
    %c0_84 = arith.constant 0 : index
    %c0_85 = arith.constant 0 : index
    %77 = vector.load %arg6[%c5, %c0_84, %c0_85] : memref<9x16x32xbf16, #tpu.memory_space<vmem>>, vector<1x16x32xbf16>
    %78 = vector.shape_cast %77 : vector<1x16x32xbf16> to vector<16x32xbf16>
    %cst_86 = arith.constant dense<0.000000e+00> : vector<256x32xf32>
    %79 = tpu.matmul %76, %78, %cst_86 {dimension_numbers = #tpu.dot_dimension_numbers<[1], [0], [0], [1], [0, 0, 1, 1], [], []>} : vector<256x16xbf16>, vector<16x32xbf16>, vector<256x32xf32> -> vector<256x32xf32>
    %80 = arith.addf %74, %79 : vector<256x32xf32>
    %c0_87 = arith.constant 0 : index
    %c2_88 = arith.constant 2 : index
    %c0_89 = arith.constant 0 : index
    %c0_90 = arith.constant 0 : index
    %81 = vector.load %arg11[%c0_87, %c2_88, %c0_89, %c0_90] : memref<1x18x18x16xbf16, #tpu.memory_space<vmem>>, vector<1x16x16x16xbf16>
    %82 = vector.shape_cast %81 : vector<1x16x16x16xbf16> to vector<256x16xbf16>
    %c6 = arith.constant 6 : index
    %c0_91 = arith.constant 0 : index
    %c0_92 = arith.constant 0 : index
    %83 = vector.load %arg6[%c6, %c0_91, %c0_92] : memref<9x16x32xbf16, #tpu.memory_space<vmem>>, vector<1x16x32xbf16>
    %84 = vector.shape_cast %83 : vector<1x16x32xbf16> to vector<16x32xbf16>
    %cst_93 = arith.constant dense<0.000000e+00> : vector<256x32xf32>
    %85 = tpu.matmul %82, %84, %cst_93 {dimension_numbers = #tpu.dot_dimension_numbers<[1], [0], [0], [1], [0, 0, 1, 1], [], []>} : vector<256x16xbf16>, vector<16x32xbf16>, vector<256x32xf32> -> vector<256x32xf32>
    %86 = arith.addf %80, %85 : vector<256x32xf32>
    %c0_94 = arith.constant 0 : index
    %c2_95 = arith.constant 2 : index
    %c1_96 = arith.constant 1 : index
    %c0_97 = arith.constant 0 : index
    %87 = vector.load %arg11[%c0_94, %c2_95, %c1_96, %c0_97] : memref<1x18x18x16xbf16, #tpu.memory_space<vmem>>, vector<1x16x16x16xbf16>
    %88 = vector.shape_cast %87 : vector<1x16x16x16xbf16> to vector<256x16xbf16>
    %c7 = arith.constant 7 : index
    %c0_98 = arith.constant 0 : index
    %c0_99 = arith.constant 0 : index
    %89 = vector.load %arg6[%c7, %c0_98, %c0_99] : memref<9x16x32xbf16, #tpu.memory_space<vmem>>, vector<1x16x32xbf16>
    %90 = vector.shape_cast %89 : vector<1x16x32xbf16> to vector<16x32xbf16>
    %cst_100 = arith.constant dense<0.000000e+00> : vector<256x32xf32>
    %91 = tpu.matmul %88, %90, %cst_100 {dimension_numbers = #tpu.dot_dimension_numbers<[1], [0], [0], [1], [0, 0, 1, 1], [], []>} : vector<256x16xbf16>, vector<16x32xbf16>, vector<256x32xf32> -> vector<256x32xf32>
    %92 = arith.addf %86, %91 : vector<256x32xf32>
    %c0_101 = arith.constant 0 : index
    %c2_102 = arith.constant 2 : index
    %c2_103 = arith.constant 2 : index
    %c0_104 = arith.constant 0 : index
    %93 = vector.load %arg11[%c0_101, %c2_102, %c2_103, %c0_104] : memref<1x18x18x16xbf16, #tpu.memory_space<vmem>>, vector<1x16x16x16xbf16>
    %94 = vector.shape_cast %93 : vector<1x16x16x16xbf16> to vector<256x16xbf16>
    %c8 = arith.constant 8 : index
    %c0_105 = arith.constant 0 : index
    %c0_106 = arith.constant 0 : index
    %95 = vector.load %arg6[%c8, %c0_105, %c0_106] : memref<9x16x32xbf16, #tpu.memory_space<vmem>>, vector<1x16x32xbf16>
    %96 = vector.shape_cast %95 : vector<1x16x32xbf16> to vector<16x32xbf16>
    %cst_107 = arith.constant dense<0.000000e+00> : vector<256x32xf32>
    %97 = tpu.matmul %94, %96, %cst_107 {dimension_numbers = #tpu.dot_dimension_numbers<[1], [0], [0], [1], [0, 0, 1, 1], [], []>} : vector<256x16xbf16>, vector<16x32xbf16>, vector<256x32xf32> -> vector<256x32xf32>
    %98 = arith.addf %92, %97 : vector<256x32xf32>
    %c0_108 = arith.constant 0 : index
    %c0_109 = arith.constant 0 : index
    %99 = vector.load %arg7[%c0_108, %c0_109] : memref<1x32xf32, #tpu.memory_space<vmem>>, vector<1x32xf32>
    %100 = vector.broadcast %99 : vector<1x32xf32> to vector<256x32xf32>
    %101 = arith.addf %98, %100 : vector<256x32xf32>
    %cst_110 = arith.constant 0.000000e+00 : f32
    %102 = vector.broadcast %cst_110 : f32 to vector<256x32xf32>
    %103 = arith.cmpf ogt, %101, %102 : vector<256x32xf32>
    %104 = math.exp %101 : vector<256x32xf32>
    %cst_111 = arith.constant 1.000000e+00 : f32
    %105 = vector.broadcast %cst_111 : f32 to vector<256x32xf32>
    %106 = arith.subf %104, %105 : vector<256x32xf32>
    %cst_112 = arith.constant 1.67326319 : f32
    %107 = vector.broadcast %cst_112 : f32 to vector<256x32xf32>
    %108 = arith.mulf %107, %106 : vector<256x32xf32>
    %109 = arith.select %103, %101, %108 : vector<256x32xi1>, vector<256x32xf32>
    %cst_113 = arith.constant 1.05070102 : f32
    %110 = vector.broadcast %cst_113 : f32 to vector<256x32xf32>
    %111 = arith.mulf %110, %109 : vector<256x32xf32>
    %112 = arith.addf %16, %111 : vector<256x32xf32>
    %113 = arith.truncf %112 : vector<256x32xf32> to vector<256x32xbf16>
    %c0_114 = arith.constant 0 : index
    %c0_115 = arith.constant 0 : index
    %114 = vector.load %arg8[%c0_114, %c0_115] : memref<32x16xbf16, #tpu.memory_space<vmem>>, vector<32x16xbf16>
    %cst_116 = arith.constant dense<0.000000e+00> : vector<256x16xf32>
    %115 = tpu.matmul %113, %114, %cst_116 {dimension_numbers = #tpu.dot_dimension_numbers<[1], [0], [0], [1], [0, 0, 1, 1], [], []>} : vector<256x32xbf16>, vector<32x16xbf16>, vector<256x16xf32> -> vector<256x16xf32>
    %c0_117 = arith.constant 0 : index
    %c0_118 = arith.constant 0 : index
    %116 = vector.load %arg9[%c0_117, %c0_118] : memref<1x16xf32, #tpu.memory_space<vmem>>, vector<1x16xf32>
    %117 = vector.broadcast %116 : vector<1x16xf32> to vector<256x16xf32>
    %118 = arith.addf %115, %117 : vector<256x16xf32>
    %cst_119 = arith.constant 0.000000e+00 : f32
    %119 = vector.broadcast %cst_119 : f32 to vector<256x16xf32>
    %120 = arith.cmpf ogt, %118, %119 : vector<256x16xf32>
    %121 = math.exp %118 : vector<256x16xf32>
    %cst_120 = arith.constant 1.000000e+00 : f32
    %122 = vector.broadcast %cst_120 : f32 to vector<256x16xf32>
    %123 = arith.subf %121, %122 : vector<256x16xf32>
    %cst_121 = arith.constant 1.67326319 : f32
    %124 = vector.broadcast %cst_121 : f32 to vector<256x16xf32>
    %125 = arith.mulf %124, %123 : vector<256x16xf32>
    %126 = arith.select %120, %118, %125 : vector<256x16xi1>, vector<256x16xf32>
    %cst_122 = arith.constant 1.05070102 : f32
    %127 = vector.broadcast %cst_122 : f32 to vector<256x16xf32>
    %128 = arith.mulf %127, %126 : vector<256x16xf32>
    %129 = vector.shape_cast %128 : vector<256x16xf32> to vector<1x16x16x16xf32>
    %130 = arith.truncf %129 : vector<1x16x16x16xf32> to vector<1x16x16x16xbf16>
    %c0_123 = arith.constant 0 : index
    %c0_124 = arith.constant 0 : index
    %c0_125 = arith.constant 0 : index
    %c0_126 = arith.constant 0 : index
    %131 = vector.load %arg10[%c0_123, %c0_124, %c0_125, %c0_126] : memref<1x16x16x16xbf16, #tpu.memory_space<vmem>>, vector<1x16x16x16xbf16>
    tpu.vector_store %arg10[%c0_123, %c0_124, %c0_125, %c0_126], %130 {strides = array<i32>} : memref<1x16x16x16xbf16, #tpu.memory_space<vmem>>, vector<1x16x16x16xbf16>,
    return
  }
  func.func @transform_0(%arg0: i32) -> (i32, i32, i32, i32) {
    %c0_i32 = arith.constant 0 : i32
    %c0_i32_0 = arith.constant 0 : i32
    %c0_i32_1 = arith.constant 0 : i32
    %c0_i32_2 = arith.constant 0 : i32
    return %arg0, %c0_i32, %c0_i32_0, %c0_i32_1 : i32, i32, i32, i32
  }
  func.func @transform_1(%arg0: i32) -> (i32, i32) {
    %c0_i32 = arith.constant 0 : i32
    %c0_i32_0 = arith.constant 0 : i32
    %c0_i32_1 = arith.constant 0 : i32
    return %c0_i32, %c0_i32_0 : i32, i32
  }
  func.func @transform_2(%arg0: i32) -> (i32, i32) {
    %c0_i32 = arith.constant 0 : i32
    %c0_i32_0 = arith.constant 0 : i32
    %c0_i32_1 = arith.constant 0 : i32
    return %c0_i32, %c0_i32_0 : i32, i32
  }
  func.func @transform_3(%arg0: i32) -> (i32, i32) {
    %c0_i32 = arith.constant 0 : i32
    %c0_i32_0 = arith.constant 0 : i32
    %c0_i32_1 = arith.constant 0 : i32
    return %c0_i32, %c0_i32_0 : i32, i32
  }
  func.func @transform_4(%arg0: i32) -> (i32, i32) {
    %c0_i32 = arith.constant 0 : i32
    %c0_i32_0 = arith.constant 0 : i32
    %c0_i32_1 = arith.constant 0 : i32
    return %c0_i32, %c0_i32_0 : i32, i32
  }
  func.func @transform_5(%arg0: i32) -> (i32, i32, i32) {
    %c0_i32 = arith.constant 0 : i32
    %c0_i32_0 = arith.constant 0 : i32
    %c0_i32_1 = arith.constant 0 : i32
    %c0_i32_2 = arith.constant 0 : i32
    return %c0_i32, %c0_i32_0, %c0_i32_1 : i32, i32, i32
  }
  func.func @transform_6(%arg0: i32) -> (i32, i32) {
    %c0_i32 = arith.constant 0 : i32
    %c0_i32_0 = arith.constant 0 : i32
    %c0_i32_1 = arith.constant 0 : i32
    return %c0_i32, %c0_i32_0 : i32, i32
  }
  func.func @transform_7(%arg0: i32) -> (i32, i32) {
    %c0_i32 = arith.constant 0 : i32
    %c0_i32_0 = arith.constant 0 : i32
    %c0_i32_1 = arith.constant 0 : i32
    return %c0_i32, %c0_i32_0 : i32, i32
  }
  func.func @transform_8(%arg0: i32) -> (i32, i32) {
    %c0_i32 = arith.constant 0 : i32
    %c0_i32_0 = arith.constant 0 : i32
    %c0_i32_1 = arith.constant 0 : i32
    return %c0_i32, %c0_i32_0 : i32, i32
  }
  func.func @transform_9(%arg0: i32) -> (i32, i32, i32, i32) {
    %c0_i32 = arith.constant 0 : i32
    %c0_i32_0 = arith.constant 0 : i32
    %c0_i32_1 = arith.constant 0 : i32
    %c0_i32_2 = arith.constant 0 : i32
    return %arg0, %c0_i32, %c0_i32_0, %c0_i32_1 : i32, i32, i32, i32
  }
}

</mosaic_0001>

<llo_original>
// kernel: c3_forward.1
$region0: #{c3_forward.1}
  #allocation0 [shape = 'u32[]', space=smem, size = 0x4, offset = 0x4, fixed_abs, tag = 'smem constant byte address 0x4 - core index']
  #allocation1 [shape = 'u32[72,128]{1,0:T(1,128)}', space=vmem, size = 0x9000, scoped, tag = 'internal scratch']
  #allocation2 [shape = 'bf16[1,18,18,16]{3,2,1,0:T(8,128)(2,1)}', space=vmem, size = 0x1b000, scoped, tag = 'scratch operand']
  %s0 = inlined_call_operand.vmem [shape: bf16[2,16,16,16], index: 0, kind: input, shape index: {}]
  %s1 = inlined_call_operand.vmem [shape: bf16[16,32], index: 1, kind: input, shape index: {}]
  %s2 = inlined_call_operand.vmem [shape: f32[1,32], index: 2, kind: input, shape index: {}]
  %s3 = inlined_call_operand.vmem [shape: bf16[32,16], index: 3, kind: input, shape index: {}]
  %s4 = inlined_call_operand.vmem [shape: f32[1,16], index: 4, kind: input, shape index: {}]
  %s5 = inlined_call_operand.vmem [shape: bf16[9,16,32], index: 5, kind: input, shape index: {}]
  %s6 = inlined_call_operand.vmem [shape: f32[1,32], index: 6, kind: input, shape index: {}]
  %s7 = inlined_call_operand.vmem [shape: bf16[32,16], index: 7, kind: input, shape index: {}]
  %s8 = inlined_call_operand.vmem [shape: f32[1,16], index: 8, kind: input, shape index: {}]
  %s9 = inlined_call_operand.vmem [shape: bf16[2,16,16,16], index: 9, kind: output, shape index: {}]
  %s10 = sld [smem:[#allocation0]]
  $region69: #{c3_forward.1} parent=0
    _
  %s12 = ssub.s32 1, %s10
  %s13 = scalar_select 0, %s12, %s10
  loop: start=0, step=1, limit=4
  $region2: #{c3_forward.1} parent=0 // loop_pre_header
    _
  $region3: #{c3_forward.1} parent=0 // loop_header
    %s15 = sphi 0, %s19
    %p16 = scmp.ge.s32.totalorder %s15, 4
    %s25 = sphi 0, %s27
    %s28 = sphi 0, %s25
    %s29 = sphi 0, %s28
    %s45 = sphi 0, %s29
    %s49 = sphi 0, %s49
    %s51 = sphi 0, %s49
    %s52 = sphi 0, %s51
    %s66 = sphi 0, %s52
    %s70 = sphi 0, %s70
    %s72 = sphi 0, %s70
    %s73 = sphi 0, %s72
    %s87 = sphi 0, %s73
    %s91 = sphi 0, %s91
    %s93 = sphi 0, %s91
    %s94 = sphi 0, %s93
    %s108 = sphi 0, %s94
    %s112 = sphi 0, %s112
    %s114 = sphi 0, %s112
    %s115 = sphi 0, %s114
    %s129 = sphi 0, %s115
    %s133 = sphi 0, %s133
    %s135 = sphi 0, %s133
    %s136 = sphi 0, %s135
    %s150 = sphi 0, %s136
    %s154 = sphi 0, %s154
    %s156 = sphi 0, %s154
    %s157 = sphi 0, %s156
    %s171 = sphi 0, %s157
    %s175 = sphi 0, %s175
    %s177 = sphi 0, %s175
    %s178 = sphi 0, %s177
    %s192 = sphi 0, %s178
    %s196 = sphi 0, %s196
    %s198 = sphi 0, %s196
    %s199 = sphi 0, %s198
    %s213 = sphi 0, %s199
    %s219 = sphi 0, %s221
    %s222 = sphi 0, %s219
    %s223 = sphi 0, %s222
    %s239 = sphi 0, %s223
  $region4: #{c3_forward.1} parent=0 // loop_header_branch
    %18 = sbr.rel (%p16) target = $region8
  $region5: #{c3_forward.1} parent=0 // loop_body
    %s20 = ssub.s32 %s15, 1
    %s21 = ssub.s32 %s15, 2
    %s22 = sadd.s32 %s15, 1
    %s23 = ssub.s32 %s15, %s22
    %p24 = scmp.eq.s32.totalorder %s23, 0
    %s26 = sadd.s32 %s25, 1
    %s27 = scalar_select %p24, %s25, %s26
    %p30 = pneg %p24
    %p31 = scmp.eq.s32.totalorder %s15, 1
    %p32 = por %p30, %p31
    %p33 = scmp.ne.s32.totalorder %s25, %s28
    %p34 = scmp.eq.s32.totalorder %s15, 0
    %p35 = por %p33, %p34
    %p36 = scmp.ne.s32.totalorder %s25, %s28
    %p37 = scmp.eq.s32.totalorder %s20, 1
    %p38 = por %p36, %p37
    %p39 = scmp.ne.s32.totalorder %s28, %s29
    %p40 = scmp.eq.s32.totalorder %s20, 0
    %p41 = por %p39, %p40
    %p42 = scmp.ne.s32.totalorder %s28, %s29
    %p43 = scmp.eq.s32.totalorder %s21, 1
    %p44 = por %p42, %p43
    %p46 = scmp.ne.s32.totalorder %s29, %s45
    %p47 = scmp.eq.s32.totalorder %s21, 0
    %p48 = por %p46, %p47
    %s50 = sadd.s32 %s49, 1
    %p53 = scmp.eq.s32.totalorder %s15, 1
    %p54 = scmp.ne.s32.totalorder %s49, %s51
    %p55 = scmp.eq.s32.totalorder %s15, 0
    %p56 = por %p54, %p55
    %p57 = scmp.ne.s32.totalorder %s49, %s51
    %p58 = scmp.eq.s32.totalorder %s20, 1
    %p59 = por %p57, %p58
    %p60 = scmp.ne.s32.totalorder %s51, %s52
    %p61 = scmp.eq.s32.totalorder %s20, 0
    %p62 = por %p60, %p61
    %p63 = scmp.ne.s32.totalorder %s51, %s52
    %p64 = scmp.eq.s32.totalorder %s21, 1
    %p65 = por %p63, %p64
    %p67 = scmp.ne.s32.totalorder %s52, %s66
    %p68 = scmp.eq.s32.totalorder %s21, 0
    %p69 = por %p67, %p68
    %s71 = sadd.s32 %s70, 1
    %p74 = scmp.eq.s32.totalorder %s15, 1
    %p75 = scmp.ne.s32.totalorder %s70, %s72
    %p76 = scmp.eq.s32.totalorder %s15, 0
    %p77 = por %p75, %p76
    %p78 = scmp.ne.s32.totalorder %s70, %s72
    %p79 = scmp.eq.s32.totalorder %s20, 1
    %p80 = por %p78, %p79
    %p81 = scmp.ne.s32.totalorder %s72, %s73
    %p82 = scmp.eq.s32.totalorder %s20, 0
    %p83 = por %p81, %p82
    %p84 = scmp.ne.s32.totalorder %s72, %s73
    %p85 = scmp.eq.s32.totalorder %s21, 1
    %p86 = por %p84, %p85
    %p88 = scmp.ne.s32.totalorder %s73, %s87
    %p89 = scmp.eq.s32.totalorder %s21, 0
    %p90 = por %p88, %p89
    %s92 = sadd.s32 %s91, 1
    %p95 = scmp.eq.s32.totalorder %s15, 1
    %p96 = scmp.ne.s32.totalorder %s91, %s93
    %p97 = scmp.eq.s32.totalorder %s15, 0
    %p98 = por %p96, %p97
    %p99 = scmp.ne.s32.totalorder %s91, %s93
    %p100 = scmp.eq.s32.totalorder %s20, 1
    %p101 = por %p99, %p100
    %p102 = scmp.ne.s32.totalorder %s93, %s94
    %p103 = scmp.eq.s32.totalorder %s20, 0
    %p104 = por %p102, %p103
    %p105 = scmp.ne.s32.totalorder %s93, %s94
    %p106 = scmp.eq.s32.totalorder %s21, 1
    %p107 = por %p105, %p106
    %p109 = scmp.ne.s32.totalorder %s94, %s108
    %p110 = scmp.eq.s32.totalorder %s21, 0
    %p111 = por %p109, %p110
    %s113 = sadd.s32 %s112, 1
    %p116 = scmp.eq.s32.totalorder %s15, 1
    %p117 = scmp.ne.s32.totalorder %s112, %s114
    %p118 = scmp.eq.s32.totalorder %s15, 0
    %p119 = por %p117, %p118
    %p120 = scmp.ne.s32.totalorder %s112, %s114
    %p121 = scmp.eq.s32.totalorder %s20, 1
    %p122 = por %p120, %p121
    %p123 = scmp.ne.s32.totalorder %s114, %s115
    %p124 = scmp.eq.s32.totalorder %s20, 0
    %p125 = por %p123, %p124
    %p126 = scmp.ne.s32.totalorder %s114, %s115
    %p127 = scmp.eq.s32.totalorder %s21, 1
    %p128 = por %p126, %p127
    %p130 = scmp.ne.s32.totalorder %s115, %s129
    %p131 = scmp.eq.s32.totalorder %s21, 0
    %p132 = por %p130, %p131
    %s134 = sadd.s32 %s133, 1
    %p137 = scmp.eq.s32.totalorder %s15, 1
    %p138 = scmp.ne.s32.totalorder %s133, %s135
    %p139 = scmp.eq.s32.totalorder %s15, 0
    %p140 = por %p138, %p139
    %p141 = scmp.ne.s32.totalorder %s133, %s135
    %p142 = scmp.eq.s32.totalorder %s20, 1
    %p143 = por %p141, %p142
    %p144 = scmp.ne.s32.totalorder %s135, %s136
    %p145 = scmp.eq.s32.totalorder %s20, 0
    %p146 = por %p144, %p145
    %p147 = scmp.ne.s32.totalorder %s135, %s136
    %p148 = scmp.eq.s32.totalorder %s21, 1
    %p149 = por %p147, %p148
    %p151 = scmp.ne.s32.totalorder %s136, %s150
    %p152 = scmp.eq.s32.totalorder %s21, 0
    %p153 = por %p151, %p152
    %s155 = sadd.s32 %s154, 1
    %p158 = scmp.eq.s32.totalorder %s15, 1
    %p159 = scmp.ne.s32.totalorder %s154, %s156
    %p160 = scmp.eq.s32.totalorder %s15, 0
    %p161 = por %p159, %p160
    %p162 = scmp.ne.s32.totalorder %s154, %s156
    %p163 = scmp.eq.s32.totalorder %s20, 1
    %p164 = por %p162, %p163
    %p165 = scmp.ne.s32.totalorder %s156, %s157
    %p166 = scmp.eq.s32.totalorder %s20, 0
    %p167 = por %p165, %p166
    %p168 = scmp.ne.s32.totalorder %s156, %s157
    %p169 = scmp.eq.s32.totalorder %s21, 1
    %p170 = por %p168, %p169
    %p172 = scmp.ne.s32.totalorder %s157, %s171
    %p173 = scmp.eq.s32.totalorder %s21, 0
    %p174 = por %p172, %p173
    %s176 = sadd.s32 %s175, 1
    %p179 = scmp.eq.s32.totalorder %s15, 1
    %p180 = scmp.ne.s32.totalorder %s175, %s177
    %p181 = scmp.eq.s32.totalorder %s15, 0
    %p182 = por %p180, %p181
    %p183 = scmp.ne.s32.totalorder %s175, %s177
    %p184 = scmp.eq.s32.totalorder %s20, 1
    %p185 = por %p183, %p184
    %p186 = scmp.ne.s32.totalorder %s177, %s178
    %p187 = scmp.eq.s32.totalorder %s20, 0
    %p188 = por %p186, %p187
    %p189 = scmp.ne.s32.totalorder %s177, %s178
    %p190 = scmp.eq.s32.totalorder %s21, 1
    %p191 = por %p189, %p190
    %p193 = scmp.ne.s32.totalorder %s178, %s192
    %p194 = scmp.eq.s32.totalorder %s21, 0
    %p195 = por %p193, %p194
    %s197 = sadd.s32 %s196, 1
    %p200 = scmp.eq.s32.totalorder %s15, 1
    %p201 = scmp.ne.s32.totalorder %s196, %s198
    %p202 = scmp.eq.s32.totalorder %s15, 0
    %p203 = por %p201, %p202
    %p204 = scmp.ne.s32.totalorder %s196, %s198
    %p205 = scmp.eq.s32.totalorder %s20, 1
    %p206 = por %p204, %p205
    %p207 = scmp.ne.s32.totalorder %s198, %s199
    %p208 = scmp.eq.s32.totalorder %s20, 0
    %p209 = por %p207, %p208
    %p210 = scmp.ne.s32.totalorder %s198, %s199
    %p211 = scmp.eq.s32.totalorder %s21, 1
    %p212 = por %p210, %p211
    %p214 = scmp.ne.s32.totalorder %s199, %s213
    %p215 = scmp.eq.s32.totalorder %s21, 0
    %p216 = por %p214, %p215
    %s217 = ssub.s32 %s15, %s22
    %p218 = scmp.eq.s32.totalorder %s217, 0
    %s220 = sadd.s32 %s219, 1
    %s221 = scalar_select %p218, %s219, %s220
    %p224 = pneg %p218
    %p225 = scmp.eq.s32.totalorder %s15, 1
    %p226 = por %p224, %p225
    %p227 = scmp.ne.s32.totalorder %s219, %s222
    %p228 = scmp.eq.s32.totalorder %s15, 0
    %p229 = por %p227, %p228
    %p230 = scmp.ne.s32.totalorder %s219, %s222
    %p231 = scmp.eq.s32.totalorder %s20, 1
    %p232 = por %p230, %p231
    %p233 = scmp.ne.s32.totalorder %s222, %s223
    %p234 = scmp.eq.s32.totalorder %s20, 0
    %p235 = por %p233, %p234
    %p236 = scmp.ne.s32.totalorder %s222, %s223
    %p237 = scmp.eq.s32.totalorder %s21, 1
    %p238 = por %p236, %p237
    %p240 = scmp.ne.s32.totalorder %s223, %s239
    %p241 = scmp.eq.s32.totalorder %s21, 0
    %p242 = por %p240, %p241
    %p243 = scmp.le.s32.totalorder 1, %s15
    %p244 = scmp.lt.s32.totalorder %s15, 3
    %p245 = pnand %p243, %p244
    %p246 = pneg %p245
    // Predicated region
    $region9: #{c3_forward.1} parent=5 // pred_check
      _
    $region10: #{c3_forward.1} parent=5 // pred_check_branch
      %248 = sbr.rel (%p245) target = $region12
    $region11: #{c3_forward.1} parent=5 // pred_region
      %s249 = ssub.s32 %s15, 1
      // Predicated region
      $region13: #{c3_forward.1} parent=11 // pred_check
        %p250 = pneg %p62
      $region14: #{c3_forward.1} parent=11 // pred_check_branch
        %252 = sbr.rel (%p250) target = $region16
      $region15: #{c3_forward.1} parent=11 // pred_region
        _
      $region16: #{c3_forward.1} parent=11 // pred_fallthru
        _
      // Predicated region
      $region17: #{c3_forward.1} parent=11 // pred_check
        %p253 = pneg %p83
      $region18: #{c3_forward.1} parent=11 // pred_check_branch
        %255 = sbr.rel (%p253) target = $region20
      $region19: #{c3_forward.1} parent=11 // pred_region
        _
      $region20: #{c3_forward.1} parent=11 // pred_fallthru
        _
      // Predicated region
      $region21: #{c3_forward.1} parent=11 // pred_check
        %p256 = pneg %p104
      $region22: #{c3_forward.1} parent=11 // pred_check_branch
        %258 = sbr.rel (%p256) target = $region24
      $region23: #{c3_forward.1} parent=11 // pred_region
        _
      $region24: #{c3_forward.1} parent=11 // pred_fallthru
        _
      // Predicated region
      $region25: #{c3_forward.1} parent=11 // pred_check
        %p259 = pneg %p125
      $region26: #{c3_forward.1} parent=11 // pred_check_branch
        %261 = sbr.rel (%p259) target = $region28
      $region27: #{c3_forward.1} parent=11 // pred_region
        _
      $region28: #{c3_forward.1} parent=11 // pred_fallthru
        _
      // Predicated region
      $region29: #{c3_forward.1} parent=11 // pred_check
        %p262 = pneg %p146
      $region30: #{c3_forward.1} parent=11 // pred_check_branch
        %264 = sbr.rel (%p262) target = $region32
      $region31: #{c3_forward.1} parent=11 // pred_region
        _
      $region32: #{c3_forward.1} parent=11 // pred_fallthru
        _
      // Predicated region
      $region33: #{c3_forward.1} parent=11 // pred_check
        %p265 = pneg %p167
      $region34: #{c3_forward.1} parent=11 // pred_check_branch
        %267 = sbr.rel (%p265) target = $region36
      $region35: #{c3_forward.1} parent=11 // pred_region
        _
      $region36: #{c3_forward.1} parent=11 // pred_fallthru
        _
      // Predicated region
      $region37: #{c3_forward.1} parent=11 // pred_check
        %p268 = pneg %p188
      $region38: #{c3_forward.1} parent=11 // pred_check_branch
        %270 = sbr.rel (%p268) target = $region40
      $region39: #{c3_forward.1} parent=11 // pred_region
        _
      $region40: #{c3_forward.1} parent=11 // pred_fallthru
        _
      // Predicated region
      $region41: #{c3_forward.1} parent=11 // pred_check
        %p271 = pneg %p209
      $region42: #{c3_forward.1} parent=11 // pred_check_branch
        %273 = sbr.rel (%p271) target = $region44
      $region43: #{c3_forward.1} parent=11 // pred_region
        _
      $region44: #{c3_forward.1} parent=11 // pred_fallthru
        _
    $region12: #{c3_forward.1} parent=5 // pred_fallthru
      _
    %p274 = scmp.lt.s32.totalorder %s15, 2
    // Predicated region
    $region45: #{c3_forward.1} parent=5 // pred_check
      %p275 = pneg %p274
    $region46: #{c3_forward.1} parent=5 // pred_check_branch
      %277 = sbr.rel (%p275) target = $region48
    $region47: #{c3_forward.1} parent=5 // pred_region
      // Predicated region
      $region49: #{c3_forward.1} parent=47 // pred_check
        %p278 = pneg %p35
      $region50: #{c3_forward.1} parent=47 // pred_check_branch
        %280 = sbr.rel (%p278) target = $region52
      $region51: #{c3_forward.1} parent=47 // pred_region
        %p281 = scmp.lt.s32.totalorder %s15, 1
        %s282 = scalar_select %p281, %s15, 1
        %s283 = smul.addr %s282, 32
        %s284 = smul.addr %s283, 4
        %s285 = scalar_lea.vmem %s0, %s284
      $region52: #{c3_forward.1} parent=47 // pred_fallthru
        _
    $region48: #{c3_forward.1} parent=5 // pred_fallthru
      _
    %p286 = scmp.le.s32.totalorder 1, %s15
    %p287 = scmp.lt.s32.totalorder %s15, 3
    %p288 = pnand %p286, %p287
    %p289 = pneg %p288
    // Predicated region
    $region53: #{c3_forward.1} parent=5 // pred_check
      _
    $region54: #{c3_forward.1} parent=5 // pred_check_branch
      %291 = sbr.rel (%p288) target = $region56
    $region55: #{c3_forward.1} parent=5 // pred_region
      %s292 = ssub.s32 %s15, 1
      %p293 = scmp.lt.s32.totalorder %s20, 1
      %s294 = scalar_select %p293, %s20, 1
      %s295 = smul.addr %s294, 32
      %s296 = smul.addr %s295, 4
      %s297 = scalar_lea.vmem %s0, %s296
      %p298 = pneg %p41
      %p299 = pneg %p38
      %p300 = pneg %p62
      %p301 = pneg %p59
      %p302 = pneg %p83
      %p303 = pneg %p80
      %p304 = pneg %p104
      %p305 = pneg %p101
      %p306 = pneg %p125
      %p307 = pneg %p122
      %p308 = pneg %p146
      %p309 = pneg %p143
      %p310 = pneg %p167
      %p311 = pneg %p164
      %p312 = pneg %p188
      %p313 = pneg %p185
      %p314 = pneg %p209
      %p315 = pneg %p206
      %p316 = pneg %p235
      %p317 = pneg %p232
      %p318 = scmp.lt.s32.totalorder %s20, 1
      %s319 = scalar_select %p318, %s20, 1
      %s320 = smul.addr %s319, 32
      %s321 = smul.addr %s320, 4
      %s322 = scalar_lea.vmem %s9, %s321
      %p323 = scmp.lt.s32.totalorder %s20, 1
      %s324 = scalar_select %p323, %s20, 1
      %s325 = smul.addr %s324, 32
      %s326 = smul.addr %s325, 4
      %s327 = scalar_lea.vmem %s0, %s326
      %p328 = scmp.lt.s32.totalorder %s20, 1
      %s329 = scalar_select %p328, %s20, 1
      %s330 = smul.addr %s329, 32
      %s331 = smul.addr %s330, 4
      %s332 = scalar_lea.vmem %s9, %s331
      %v334 = vld [vmem:[%s327] sm:$0xf]
      %v335 = vld [vmem:[%s327 + $0x4] sm:$0xf]
      %v336 = vld [vmem:[%s327 + $0x8] sm:$0xf]
      %v337 = vld [vmem:[%s327 + $0xc] sm:$0xf]
      %v338 = vld [vmem:[%s327 + $0x10] sm:$0xf]
      %v339 = vld [vmem:[%s327 + $0x14] sm:$0xf]
      %v340 = vld [vmem:[%s327 + $0x18] sm:$0xf]
      %v341 = vld [vmem:[%s327 + $0x1c] sm:$0xf]
      %v342 = vld [vmem:[%s327 + $0x20] sm:$0xf]
      %v343 = vld [vmem:[%s327 + $0x24] sm:$0xf]
      %v344 = vld [vmem:[%s327 + $0x28] sm:$0xf]
      %v345 = vld [vmem:[%s327 + $0x2c] sm:$0xf]
      %v346 = vld [vmem:[%s327 + $0x30] sm:$0xf]
      %v347 = vld [vmem:[%s327 + $0x34] sm:$0xf]
      %v348 = vld [vmem:[%s327 + $0x38] sm:$0xf]
      %v349 = vld [vmem:[%s327 + $0x3c] sm:$0xf]
      %v350 = vld [vmem:[%s327 + $0x40] sm:$0xf]
      %v351 = vld [vmem:[%s327 + $0x44] sm:$0xf]
      %v352 = vld [vmem:[%s327 + $0x48] sm:$0xf]
      %v353 = vld [vmem:[%s327 + $0x4c] sm:$0xf]
      %v354 = vld [vmem:[%s327 + $0x50] sm:$0xf]
      %v355 = vld [vmem:[%s327 + $0x54] sm:$0xf]
      %v356 = vld [vmem:[%s327 + $0x58] sm:$0xf]
      %v357 = vld [vmem:[%s327 + $0x5c] sm:$0xf]
      %v358 = vld [vmem:[%s327 + $0x60] sm:$0xf]
      %v359 = vld [vmem:[%s327 + $0x64] sm:$0xf]
      %v360 = vld [vmem:[%s327 + $0x68] sm:$0xf]
      %v361 = vld [vmem:[%s327 + $0x6c] sm:$0xf]
      %v362 = vld [vmem:[%s327 + $0x70] sm:$0xf]
      %v363 = vld [vmem:[%s327 + $0x74] sm:$0xf]
      %v364 = vld [vmem:[%s327 + $0x78] sm:$0xf]
      %v365 = vld [vmem:[%s327 + $0x7c] sm:$0xf]
      %v366 = vld [vmem:[%s1] sm:$0xf]
      %v367 = vld [vmem:[%s1 + $0x4] sm:$0xf]
      %v368 = vld [vmem:[%s2] sm:$0x1]
      %v370 = vperm.slane %v368, 0
      %v404 = vunpack.c.l.b16 %v334
      %v405 = vunpack.c.l.b16 %v335
      %v406 = vunpack.c.l.b16 %v336
      %v407 = vunpack.c.l.b16 %v337
      %v408 = vunpack.c.l.b16 %v338
      %v409 = vunpack.c.l.b16 %v339
      %v410 = vunpack.c.l.b16 %v340
      %v411 = vunpack.c.l.b16 %v341
      %v412 = vunpack.c.l.b16 %v342
      %v413 = vunpack.c.l.b16 %v343
      %v414 = vunpack.c.l.b16 %v344
      %v415 = vunpack.c.l.b16 %v345
      %v416 = vunpack.c.l.b16 %v346
      %v417 = vunpack.c.l.b16 %v347
      %v418 = vunpack.c.l.b16 %v348
      %v419 = vunpack.c.l.b16 %v349
      %v420 = vunpack.c.l.b16 %v350
      %v421 = vunpack.c.l.b16 %v351
      %v422 = vunpack.c.l.b16 %v352
      %v423 = vunpack.c.l.b16 %v353
      %v424 = vunpack.c.l.b16 %v354
      %v425 = vunpack.c.l.b16 %v355
      %v426 = vunpack.c.l.b16 %v356
      %v427 = vunpack.c.l.b16 %v357
      %v428 = vunpack.c.l.b16 %v358
      %v429 = vunpack.c.l.b16 %v359
      %v430 = vunpack.c.l.b16 %v360
      %v431 = vunpack.c.l.b16 %v361
      %v432 = vunpack.c.l.b16 %v362
      %v433 = vunpack.c.l.b16 %v363
      %v434 = vunpack.c.l.b16 %v364
      %v435 = vunpack.c.l.b16 %v365
      %v436 = vpack.c.b16 %v405, %v404
      %v437 = vpack.c.b16 %v407, %v406
      %v438 = vpack.c.b16 %v409, %v408
      %v439 = vpack.c.b16 %v411, %v410
      %v440 = vpack.c.b16 %v413, %v412
      %v441 = vpack.c.b16 %v415, %v414
      %v442 = vpack.c.b16 %v417, %v416
      %v443 = vpack.c.b16 %v419, %v418
      %v444 = vpack.c.b16 %v421, %v420
      %v445 = vpack.c.b16 %v423, %v422
      %v446 = vpack.c.b16 %v425, %v424
      %v447 = vpack.c.b16 %v427, %v426
      %v448 = vpack.c.b16 %v429, %v428
      %v449 = vpack.c.b16 %v431, %v430
      %v450 = vpack.c.b16 %v433, %v432
      %v451 = vpack.c.b16 %v435, %v434
      %v454 = vunpack.c.l.b16 %v366
      %v455 = vunpack.c.l.b16 %v367
      %v456 = vpack.c.b16 %v455, %v454
      %vm458 = vcmask 130048
      %v460 = vsel %vm458, %v436, 0
      %v463 = vsel %vm458, %v437, 0
      %v466 = vsel %vm458, %v438, 0
      %v469 = vsel %vm458, %v439, 0
      %v472 = vsel %vm458, %v440, 0
      %v475 = vsel %vm458, %v441, 0
      %v478 = vsel %vm458, %v442, 0
      %v481 = vsel %vm458, %v443, 0
      %v484 = vsel %vm458, %v444, 0
      %v487 = vsel %vm458, %v445, 0
      %v490 = vsel %vm458, %v446, 0
      %v493 = vsel %vm458, %v447, 0
      %v496 = vsel %vm458, %v448, 0
      %v499 = vsel %vm458, %v449, 0
      %v502 = vsel %vm458, %v450, 0
      %v505 = vsel %vm458, %v451, 0
      %507 = vmatpush.bf16.msra.mxu0 0
      %508 = vmatpush.bf16.msra.mxu0 0
      %509 = vmatpush.bf16.msra.mxu0 0
      %510 = vmatpush.bf16.msra.mxu0 0
      %511 = vmatpush.bf16.msra.mxu0 0
      %512 = vmatpush.bf16.msra.mxu0 0
      %513 = vmatpush.bf16.msra.mxu0 0
      %514 = vmatpush.bf16.msra.mxu0 %v456
      %515 = vmatmul.bf16.gmra.mxu0 %v460
      %v516 = vpop.f32.mrf.mxu0
      %v517 = vadd.f32 %v370, %v516
      %v518 = vpop.f32.mrf.mxu0
      %v519 = vadd.f32 %v370, %v518
      %520 = vmatmul.bf16.gmra.mxu0 %v463
      %v521 = vpop.f32.mrf.mxu0
      %v522 = vadd.f32 %v370, %v521
      %v523 = vpop.f32.mrf.mxu0
      %v524 = vadd.f32 %v370, %v523
      %525 = vmatmul.bf16.gmra.mxu0 %v466
      %v526 = vpop.f32.mrf.mxu0
      %v527 = vadd.f32 %v370, %v526
      %v528 = vpop.f32.mrf.mxu0
      %v529 = vadd.f32 %v370, %v528
      %530 = vmatmul.bf16.gmra.mxu0 %v469
      %v531 = vpop.f32.mrf.mxu0
      %v532 = vadd.f32 %v370, %v531
      %v533 = vpop.f32.mrf.mxu0
      %v534 = vadd.f32 %v370, %v533
      %535 = vmatmul.bf16.gmra.mxu0 %v472
      %v536 = vpop.f32.mrf.mxu0
      %v537 = vadd.f32 %v370, %v536
      %v538 = vpop.f32.mrf.mxu0
      %v539 = vadd.f32 %v370, %v538
      %540 = vmatmul.bf16.gmra.mxu0 %v475
      %v541 = vpop.f32.mrf.mxu0
      %v542 = vadd.f32 %v370, %v541
      %v543 = vpop.f32.mrf.mxu0
      %v544 = vadd.f32 %v370, %v543
      %545 = vmatmul.bf16.gmra.mxu0 %v478
      %v546 = vpop.f32.mrf.mxu0
      %v547 = vadd.f32 %v370, %v546
      %v548 = vpop.f32.mrf.mxu0
      %v549 = vadd.f32 %v370, %v548
      %550 = vmatmul.bf16.gmra.mxu0 %v481
      %v551 = vpop.f32.mrf.mxu0
      %v552 = vadd.f32 %v370, %v551
      %v553 = vpop.f32.mrf.mxu0
      %v554 = vadd.f32 %v370, %v553
      %555 = vmatmul.bf16.gmra.mxu0 %v484
      %v556 = vpop.f32.mrf.mxu0
      %v557 = vadd.f32 %v370, %v556
      %v558 = vpop.f32.mrf.mxu0
      %v559 = vadd.f32 %v370, %v558
      %560 = vmatmul.bf16.gmra.mxu0 %v487
      %v561 = vpop.f32.mrf.mxu0
      %v562 = vadd.f32 %v370, %v561
      %v563 = vpop.f32.mrf.mxu0
      %v564 = vadd.f32 %v370, %v563
      %565 = vmatmul.bf16.gmra.mxu0 %v490
      %v566 = vpop.f32.mrf.mxu0
      %v567 = vadd.f32 %v370, %v566
      %v568 = vpop.f32.mrf.mxu0
      %v569 = vadd.f32 %v370, %v568
      %570 = vmatmul.bf16.gmra.mxu0 %v493
      %v571 = vpop.f32.mrf.mxu0
      %v572 = vadd.f32 %v370, %v571
      %v573 = vpop.f32.mrf.mxu0
      %v574 = vadd.f32 %v370, %v573
      %575 = vmatmul.bf16.gmra.mxu0 %v496
      %v576 = vpop.f32.mrf.mxu0
      %v577 = vadd.f32 %v370, %v576
      %v578 = vpop.f32.mrf.mxu0
      %v579 = vadd.f32 %v370, %v578
      %580 = vmatmul.bf16.gmra.mxu0 %v499
      %v581 = vpop.f32.mrf.mxu0
      %v582 = vadd.f32 %v370, %v581
      %v583 = vpop.f32.mrf.mxu0
      %v584 = vadd.f32 %v370, %v583
      %585 = vmatmul.bf16.gmra.mxu0 %v502
      %v586 = vpop.f32.mrf.mxu0
      %v587 = vadd.f32 %v370, %v586
      %v588 = vpop.f32.mrf.mxu0
      %v589 = vadd.f32 %v370, %v588
      %590 = vmatmul.bf16.gmra.mxu0 %v505
      %v591 = vpop.f32.mrf.mxu0
      %v592 = vadd.f32 %v370, %v591
      %v593 = vpop.f32.mrf.mxu0
      %v594 = vadd.f32 %v370, %v593
      %595 = vdwg.mxu0
      %vm596 = vcmp.gt.f32.partialorder %v517, 0.0
      %vm597 = vcmp.gt.f32.partialorder %v519, 0.0
      %vm598 = vcmp.gt.f32.partialorder %v522, 0.0
      %vm599 = vcmp.gt.f32.partialorder %v524, 0.0
      %vm600 = vcmp.gt.f32.partialorder %v527, 0.0
      %vm601 = vcmp.gt.f32.partialorder %v529, 0.0
      %vm602 = vcmp.gt.f32.partialorder %v532, 0.0
      %vm603 = vcmp.gt.f32.partialorder %v534, 0.0
      %vm604 = vcmp.gt.f32.partialorder %v537, 0.0
      %vm605 = vcmp.gt.f32.partialorder %v539, 0.0
      %vm606 = vcmp.gt.f32.partialorder %v542, 0.0
      %vm607 = vcmp.gt.f32.partialorder %v544, 0.0
      %vm608 = vcmp.gt.f32.partialorder %v547, 0.0
      %vm609 = vcmp.gt.f32.partialorder %v549, 0.0
      %vm610 = vcmp.gt.f32.partialorder %v552, 0.0
      %vm611 = vcmp.gt.f32.partialorder %v554, 0.0
      %vm612 = vcmp.gt.f32.partialorder %v557, 0.0
      %vm613 = vcmp.gt.f32.partialorder %v559, 0.0
      %vm614 = vcmp.gt.f32.partialorder %v562, 0.0
      %vm615 = vcmp.gt.f32.partialorder %v564, 0.0
      %vm616 = vcmp.gt.f32.partialorder %v567, 0.0
      %vm617 = vcmp.gt.f32.partialorder %v569, 0.0
      %vm618 = vcmp.gt.f32.partialorder %v572, 0.0
      %vm619 = vcmp.gt.f32.partialorder %v574, 0.0
      %vm620 = vcmp.gt.f32.partialorder %v577, 0.0
      %vm621 = vcmp.gt.f32.partialorder %v579, 0.0
      %vm622 = vcmp.gt.f32.partialorder %v582, 0.0
      %vm623 = vcmp.gt.f32.partialorder %v584, 0.0
      %vm624 = vcmp.gt.f32.partialorder %v587, 0.0
      %vm625 = vcmp.gt.f32.partialorder %v589, 0.0
      %vm626 = vcmp.gt.f32.partialorder %v592, 0.0
      %vm627 = vcmp.gt.f32.partialorder %v594, 0.0
      %v628 = vmul.f32 %v517, 1.442695
      %v629 = vpow.pop %v628
      %v630 = vmul.f32 %v519, 1.442695
      %v631 = vpow.pop %v630
      %v632 = vmul.f32 %v522, 1.442695
      %v633 = vpow.pop %v632
      %v634 = vmul.f32 %v524, 1.442695
      %v635 = vpow.pop %v634
      %v636 = vmul.f32 %v527, 1.442695
      %v637 = vpow.pop %v636
      %v638 = vmul.f32 %v529, 1.442695
      %v639 = vpow.pop %v638
      %v640 = vmul.f32 %v532, 1.442695
      %v641 = vpow.pop %v640
      %v642 = vmul.f32 %v534, 1.442695
      %v643 = vpow.pop %v642
      %v644 = vmul.f32 %v537, 1.442695
      %v645 = vpow.pop %v644
      %v646 = vmul.f32 %v539, 1.442695
      %v647 = vpow.pop %v646
      %v648 = vmul.f32 %v542, 1.442695
      %v649 = vpow.pop %v648
      %v650 = vmul.f32 %v544, 1.442695
      %v651 = vpow.pop %v650
      %v652 = vmul.f32 %v547, 1.442695
      %v653 = vpow.pop %v652
      %v654 = vmul.f32 %v549, 1.442695
      %v655 = vpow.pop %v654
      %v656 = vmul.f32 %v552, 1.442695
      %v657 = vpow.pop %v656
      %v658 = vmul.f32 %v554, 1.442695
      %v659 = vpow.pop %v658
      %v660 = vmul.f32 %v557, 1.442695
      %v661 = vpow.pop %v660
      %v662 = vmul.f32 %v559, 1.442695
      %v663 = vpow.pop %v662
      %v664 = vmul.f32 %v562, 1.442695
      %v665 = vpow.pop %v664
      %v666 = vmul.f32 %v564, 1.442695
      %v667 = vpow.pop %v666
      %v668 = vmul.f32 %v567, 1.442695
      %v669 = vpow.pop %v668
      %v670 = vmul.f32 %v569, 1.442695
      %v671 = vpow.pop %v670
      %v672 = vmul.f32 %v572, 1.442695
      %v673 = vpow.pop %v672
      %v674 = vmul.f32 %v574, 1.442695
      %v675 = vpow.pop %v674
      %v676 = vmul.f32 %v577, 1.442695
      %v677 = vpow.pop %v676
      %v678 = vmul.f32 %v579, 1.442695
      %v679 = vpow.pop %v678
      %v680 = vmul.f32 %v582, 1.442695
      %v681 = vpow.pop %v680
      %v682 = vmul.f32 %v584, 1.442695
      %v683 = vpow.pop %v682
      %v684 = vmul.f32 %v587, 1.442695
      %v685 = vpow.pop %v684
      %v686 = vmul.f32 %v589, 1.442695
      %v687 = vpow.pop %v686
      %v688 = vmul.f32 %v592, 1.442695
      %v689 = vpow.pop %v688
      %v690 = vmul.f32 %v594, 1.442695
      %v691 = vpow.pop %v690
      %v692 = vsub.f32 %v629, 1.0
      %v693 = vsub.f32 %v631, 1.0
      %v694 = vsub.f32 %v633, 1.0
      %v695 = vsub.f32 %v635, 1.0
      %v696 = vsub.f32 %v637, 1.0
      %v697 = vsub.f32 %v639, 1.0
      %v698 = vsub.f32 %v641, 1.0
      %v699 = vsub.f32 %v643, 1.0
      %v700 = vsub.f32 %v645, 1.0
      %v701 = vsub.f32 %v647, 1.0
      %v702 = vsub.f32 %v649, 1.0
      %v703 = vsub.f32 %v651, 1.0
      %v704 = vsub.f32 %v653, 1.0
      %v705 = vsub.f32 %v655, 1.0
      %v706 = vsub.f32 %v657, 1.0
      %v707 = vsub.f32 %v659, 1.0
      %v708 = vsub.f32 %v661, 1.0
      %v709 = vsub.f32 %v663, 1.0
      %v710 = vsub.f32 %v665, 1.0
      %v711 = vsub.f32 %v667, 1.0
      %v712 = vsub.f32 %v669, 1.0
      %v713 = vsub.f32 %v671, 1.0
      %v714 = vsub.f32 %v673, 1.0
      %v715 = vsub.f32 %v675, 1.0
      %v716 = vsub.f32 %v677, 1.0
      %v717 = vsub.f32 %v679, 1.0
      %v718 = vsub.f32 %v681, 1.0
      %v719 = vsub.f32 %v683, 1.0
      %v720 = vsub.f32 %v685, 1.0
      %v721 = vsub.f32 %v687, 1.0
      %v722 = vsub.f32 %v689, 1.0
      %v723 = vsub.f32 %v691, 1.0
      %v724 = vmul.f32 %v692, 1.6732632
      %v725 = vmul.f32 %v693, 1.6732632
      %v726 = vmul.f32 %v694, 1.6732632
      %v727 = vmul.f32 %v695, 1.6732632
      %v728 = vmul.f32 %v696, 1.6732632
      %v729 = vmul.f32 %v697, 1.6732632
      %v730 = vmul.f32 %v698, 1.6732632
      %v731 = vmul.f32 %v699, 1.6732632
      %v732 = vmul.f32 %v700, 1.6732632
      %v733 = vmul.f32 %v701, 1.6732632
      %v734 = vmul.f32 %v702, 1.6732632
      %v735 = vmul.f32 %v703, 1.6732632
      %v736 = vmul.f32 %v704, 1.6732632
      %v737 = vmul.f32 %v705, 1.6732632
      %v738 = vmul.f32 %v706, 1.6732632
      %v739 = vmul.f32 %v707, 1.6732632
      %v740 = vmul.f32 %v708, 1.6732632
      %v741 = vmul.f32 %v709, 1.6732632
      %v742 = vmul.f32 %v710, 1.6732632
      %v743 = vmul.f32 %v711, 1.6732632
      %v744 = vmul.f32 %v712, 1.6732632
      %v745 = vmul.f32 %v713, 1.6732632
      %v746 = vmul.f32 %v714, 1.6732632
      %v747 = vmul.f32 %v715, 1.6732632
      %v748 = vmul.f32 %v716, 1.6732632
      %v749 = vmul.f32 %v717, 1.6732632
      %v750 = vmul.f32 %v718, 1.6732632
      %v751 = vmul.f32 %v719, 1.6732632
      %v752 = vmul.f32 %v720, 1.6732632
      %v753 = vmul.f32 %v721, 1.6732632
      %v754 = vmul.f32 %v722, 1.6732632
      %v755 = vmul.f32 %v723, 1.6732632
      %v756 = vsel %vm596, %v517, %v724
      %v757 = vsel %vm597, %v519, %v725
      %v758 = vsel %vm598, %v522, %v726
      %v759 = vsel %vm599, %v524, %v727
      %v760 = vsel %vm600, %v527, %v728
      %v761 = vsel %vm601, %v529, %v729
      %v762 = vsel %vm602, %v532, %v730
      %v763 = vsel %vm603, %v534, %v731
      %v764 = vsel %vm604, %v537, %v732
      %v765 = vsel %vm605, %v539, %v733
      %v766 = vsel %vm606, %v542, %v734
      %v767 = vsel %vm607, %v544, %v735
      %v768 = vsel %vm608, %v547, %v736
      %v769 = vsel %vm609, %v549, %v737
      %v770 = vsel %vm610, %v552, %v738
      %v771 = vsel %vm611, %v554, %v739
      %v772 = vsel %vm612, %v557, %v740
      %v773 = vsel %vm613, %v559, %v741
      %v774 = vsel %vm614, %v562, %v742
      %v775 = vsel %vm615, %v564, %v743
      %v776 = vsel %vm616, %v567, %v744
      %v777 = vsel %vm617, %v569, %v745
      %v778 = vsel %vm618, %v572, %v746
      %v779 = vsel %vm619, %v574, %v747
      %v780 = vsel %vm620, %v577, %v748
      %v781 = vsel %vm621, %v579, %v749
      %v782 = vsel %vm622, %v582, %v750
      %v783 = vsel %vm623, %v584, %v751
      %v784 = vsel %vm624, %v587, %v752
      %v785 = vsel %vm625, %v589, %v753
      %v786 = vsel %vm626, %v592, %v754
      %v787 = vsel %vm627, %v594, %v755
      %v788 = vmul.f32 %v756, 1.050701
      %v789 = vmul.f32 %v757, 1.050701
      %v790 = vmul.f32 %v758, 1.050701
      %v791 = vmul.f32 %v759, 1.050701
      %v792 = vmul.f32 %v760, 1.050701
      %v793 = vmul.f32 %v761, 1.050701
      %v794 = vmul.f32 %v762, 1.050701
      %v795 = vmul.f32 %v763, 1.050701
      %v796 = vmul.f32 %v764, 1.050701
      %v797 = vmul.f32 %v765, 1.050701
      %v798 = vmul.f32 %v766, 1.050701
      %v799 = vmul.f32 %v767, 1.050701
      %v800 = vmul.f32 %v768, 1.050701
      %v801 = vmul.f32 %v769, 1.050701
      %v802 = vmul.f32 %v770, 1.050701
      %v803 = vmul.f32 %v771, 1.050701
      %v804 = vmul.f32 %v772, 1.050701
      %v805 = vmul.f32 %v773, 1.050701
      %v806 = vmul.f32 %v774, 1.050701
      %v807 = vmul.f32 %v775, 1.050701
      %v808 = vmul.f32 %v776, 1.050701
      %v809 = vmul.f32 %v777, 1.050701
      %v810 = vmul.f32 %v778, 1.050701
      %v811 = vmul.f32 %v779, 1.050701
      %v812 = vmul.f32 %v780, 1.050701
      %v813 = vmul.f32 %v781, 1.050701
      %v814 = vmul.f32 %v782, 1.050701
      %v815 = vmul.f32 %v783, 1.050701
      %v816 = vmul.f32 %v784, 1.050701
      %v817 = vmul.f32 %v785, 1.050701
      %v818 = vmul.f32 %v786, 1.050701
      %v819 = vmul.f32 %v787, 1.050701
      %v820 = vpack.c.bf16 %v789, %v788
      %v821 = vpack.c.bf16 %v791, %v790
      %v822 = vpack.c.bf16 %v793, %v792
      %v823 = vpack.c.bf16 %v795, %v794
      %v824 = vpack.c.bf16 %v797, %v796
      %v825 = vpack.c.bf16 %v799, %v798
      %v826 = vpack.c.bf16 %v801, %v800
      %v827 = vpack.c.bf16 %v803, %v802
      %v828 = vpack.c.bf16 %v805, %v804
      %v829 = vpack.c.bf16 %v807, %v806
      %v830 = vpack.c.bf16 %v809, %v808
      %v831 = vpack.c.bf16 %v811, %v810
      %v832 = vpack.c.bf16 %v813, %v812
      %v833 = vpack.c.bf16 %v815, %v814
      %v834 = vpack.c.bf16 %v817, %v816
      %v835 = vpack.c.bf16 %v819, %v818
      %v836 = vld [vmem:[%s3] sm:$0xf]
      %v837 = vld [vmem:[%s3 + $0x4] sm:$0xf]
      %v838 = vld [vmem:[%s3 + $0x8] sm:$0xf]
      %v839 = vld [vmem:[%s3 + $0xc] sm:$0xf]
      %v840 = vld [vmem:[%s4] sm:$0x1]
      %v842 = vperm.slane %v840, 0
      %v848 = vunpack.c.l.b16 %v836
      %v849 = vunpack.c.l.b16 %v837
      %v850 = vunpack.c.l.b16 %v838
      %v851 = vunpack.c.l.b16 %v839
      %v852 = vpack.c.b16 %v849, %v848
      %v853 = vpack.c.b16 %v851, %v850
      %vm856 = vcmask 261120
      %v858 = vsel %vm856, %v820, 0
      %v861 = vsel %vm856, %v821, 0
      %v864 = vsel %vm856, %v822, 0
      %v867 = vsel %vm856, %v823, 0
      %v870 = vsel %vm856, %v824, 0
      %v873 = vsel %vm856, %v825, 0
      %v876 = vsel %vm856, %v826, 0
      %v879 = vsel %vm856, %v827, 0
      %v882 = vsel %vm856, %v828, 0
      %v885 = vsel %vm856, %v829, 0
      %v888 = vsel %vm856, %v830, 0
      %v891 = vsel %vm856, %v831, 0
      %v894 = vsel %vm856, %v832, 0
      %v897 = vsel %vm856, %v833, 0
      %v900 = vsel %vm856, %v834, 0
      %v903 = vsel %vm856, %v835, 0
      %905 = vmatpush.bf16.msra.mxu0 0
      %906 = vmatpush.bf16.msra.mxu0 0
      %907 = vmatpush.bf16.msra.mxu0 0
      %908 = vmatpush.bf16.msra.mxu0 0
      %909 = vmatpush.bf16.msra.mxu0 0
      %910 = vmatpush.bf16.msra.mxu0 0
      %911 = vmatpush.bf16.msra.mxu0 %v853
      %912 = vmatpush.bf16.msra.mxu0 %v852
      %913 = vmatmul.bf16.gmra.mxu0 %v858
      %v914 = vpop.f32.mrf.mxu0
      %v915 = vadd.f32 %v842, %v914
      %v916 = vpop.f32.mrf.mxu0
      %v917 = vadd.f32 %v842, %v916
      %918 = vmatmul.bf16.gmra.mxu0 %v861
      %v919 = vpop.f32.mrf.mxu0
      %v920 = vadd.f32 %v842, %v919
      %v921 = vpop.f32.mrf.mxu0
      %v922 = vadd.f32 %v842, %v921
      %923 = vmatmul.bf16.gmra.mxu0 %v864
      %v924 = vpop.f32.mrf.mxu0
      %v925 = vadd.f32 %v842, %v924
      %v926 = vpop.f32.mrf.mxu0
      %v927 = vadd.f32 %v842, %v926
      %928 = vmatmul.bf16.gmra.mxu0 %v867
      %v929 = vpop.f32.mrf.mxu0
      %v930 = vadd.f32 %v842, %v929
      %v931 = vpop.f32.mrf.mxu0
      %v932 = vadd.f32 %v842, %v931
      %933 = vmatmul.bf16.gmra.mxu0 %v870
      %v934 = vpop.f32.mrf.mxu0
      %v935 = vadd.f32 %v842, %v934
      %v936 = vpop.f32.mrf.mxu0
      %v937 = vadd.f32 %v842, %v936
      %938 = vmatmul.bf16.gmra.mxu0 %v873
      %v939 = vpop.f32.mrf.mxu0
      %v940 = vadd.f32 %v842, %v939
      %v941 = vpop.f32.mrf.mxu0
      %v942 = vadd.f32 %v842, %v941
      %943 = vmatmul.bf16.gmra.mxu0 %v876
      %v944 = vpop.f32.mrf.mxu0
      %v945 = vadd.f32 %v842, %v944
      %v946 = vpop.f32.mrf.mxu0
      %v947 = vadd.f32 %v842, %v946
      %948 = vmatmul.bf16.gmra.mxu0 %v879
      %v949 = vpop.f32.mrf.mxu0
      %v950 = vadd.f32 %v842, %v949
      %v951 = vpop.f32.mrf.mxu0
      %v952 = vadd.f32 %v842, %v951
      %953 = vmatmul.bf16.gmra.mxu0 %v882
      %v954 = vpop.f32.mrf.mxu0
      %v955 = vadd.f32 %v842, %v954
      %v956 = vpop.f32.mrf.mxu0
      %v957 = vadd.f32 %v842, %v956
      %958 = vmatmul.bf16.gmra.mxu0 %v885
      %v959 = vpop.f32.mrf.mxu0
      %v960 = vadd.f32 %v842, %v959
      %v961 = vpop.f32.mrf.mxu0
      %v962 = vadd.f32 %v842, %v961
      %963 = vmatmul.bf16.gmra.mxu0 %v888
      %v964 = vpop.f32.mrf.mxu0
      %v965 = vadd.f32 %v842, %v964
      %v966 = vpop.f32.mrf.mxu0
      %v967 = vadd.f32 %v842, %v966
      %968 = vmatmul.bf16.gmra.mxu0 %v891
      %v969 = vpop.f32.mrf.mxu0
      %v970 = vadd.f32 %v842, %v969
      %v971 = vpop.f32.mrf.mxu0
      %v972 = vadd.f32 %v842, %v971
      %973 = vmatmul.bf16.gmra.mxu0 %v894
      %v974 = vpop.f32.mrf.mxu0
      %v975 = vadd.f32 %v842, %v974
      %v976 = vpop.f32.mrf.mxu0
      %v977 = vadd.f32 %v842, %v976
      %978 = vmatmul.bf16.gmra.mxu0 %v897
      %v979 = vpop.f32.mrf.mxu0
      %v980 = vadd.f32 %v842, %v979
      %v981 = vpop.f32.mrf.mxu0
      %v982 = vadd.f32 %v842, %v981
      %983 = vmatmul.bf16.gmra.mxu0 %v900
      %v984 = vpop.f32.mrf.mxu0
      %v985 = vadd.f32 %v842, %v984
      %v986 = vpop.f32.mrf.mxu0
      %v987 = vadd.f32 %v842, %v986
      %988 = vmatmul.bf16.gmra.mxu0 %v903
      %v989 = vpop.f32.mrf.mxu0
      %v990 = vadd.f32 %v842, %v989
      %v991 = vpop.f32.mrf.mxu0
      %v992 = vadd.f32 %v842, %v991
      %993 = vdwg.mxu0
      %vm994 = vcmp.gt.f32.partialorder %v915, 0.0
      %vm995 = vcmp.gt.f32.partialorder %v917, 0.0
      %vm996 = vcmp.gt.f32.partialorder %v920, 0.0
      %vm997 = vcmp.gt.f32.partialorder %v922, 0.0
      %vm998 = vcmp.gt.f32.partialorder %v925, 0.0
      %vm999 = vcmp.gt.f32.partialorder %v927, 0.0
      %vm1000 = vcmp.gt.f32.partialorder %v930, 0.0
      %vm1001 = vcmp.gt.f32.partialorder %v932, 0.0
      %vm1002 = vcmp.gt.f32.partialorder %v935, 0.0
      %vm1003 = vcmp.gt.f32.partialorder %v937, 0.0
      %vm1004 = vcmp.gt.f32.partialorder %v940, 0.0
      %vm1005 = vcmp.gt.f32.partialorder %v942, 0.0
      %vm1006 = vcmp.gt.f32.partialorder %v945, 0.0
      %vm1007 = vcmp.gt.f32.partialorder %v947, 0.0
      %vm1008 = vcmp.gt.f32.partialorder %v950, 0.0
      %vm1009 = vcmp.gt.f32.partialorder %v952, 0.0
      %vm1010 = vcmp.gt.f32.partialorder %v955, 0.0
      %vm1011 = vcmp.gt.f32.partialorder %v957, 0.0
      %vm1012 = vcmp.gt.f32.partialorder %v960, 0.0
      %vm1013 = vcmp.gt.f32.partialorder %v962, 0.0
      %vm1014 = vcmp.gt.f32.partialorder %v965, 0.0
      %vm1015 = vcmp.gt.f32.partialorder %v967, 0.0
      %vm1016 = vcmp.gt.f32.partialorder %v970, 0.0
      %vm1017 = vcmp.gt.f32.partialorder %v972, 0.0
      %vm1018 = vcmp.gt.f32.partialorder %v975, 0.0
      %vm1019 = vcmp.gt.f32.partialorder %v977, 0.0
      %vm1020 = vcmp.gt.f32.partialorder %v980, 0.0
      %vm1021 = vcmp.gt.f32.partialorder %v982, 0.0
      %vm1022 = vcmp.gt.f32.partialorder %v985, 0.0
      %vm1023 = vcmp.gt.f32.partialorder %v987, 0.0
      %vm1024 = vcmp.gt.f32.partialorder %v990, 0.0
      %vm1025 = vcmp.gt.f32.partialorder %v992, 0.0
      %v1026 = vmul.f32 %v915, 1.442695
      %v1027 = vpow.pop %v1026
      %v1028 = vmul.f32 %v917, 1.442695
      %v1029 = vpow.pop %v1028
      %v1030 = vmul.f32 %v920, 1.442695
      %v1031 = vpow.pop %v1030
      %v1032 = vmul.f32 %v922, 1.442695
      %v1033 = vpow.pop %v1032
      %v1034 = vmul.f32 %v925, 1.442695
      %v1035 = vpow.pop %v1034
      %v1036 = vmul.f32 %v927, 1.442695
      %v1037 = vpow.pop %v1036
      %v1038 = vmul.f32 %v930, 1.442695
      %v1039 = vpow.pop %v1038
      %v1040 = vmul.f32 %v932, 1.442695
      %v1041 = vpow.pop %v1040
      %v1042 = vmul.f32 %v935, 1.442695
      %v1043 = vpow.pop %v1042
      %v1044 = vmul.f32 %v937, 1.442695
      %v1045 = vpow.pop %v1044
      %v1046 = vmul.f32 %v940, 1.442695
      %v1047 = vpow.pop %v1046
      %v1048 = vmul.f32 %v942, 1.442695
      %v1049 = vpow.pop %v1048
      %v1050 = vmul.f32 %v945, 1.442695
      %v1051 = vpow.pop %v1050
      %v1052 = vmul.f32 %v947, 1.442695
      %v1053 = vpow.pop %v1052
      %v1054 = vmul.f32 %v950, 1.442695
      %v1055 = vpow.pop %v1054
      %v1056 = vmul.f32 %v952, 1.442695
      %v1057 = vpow.pop %v1056
      %v1058 = vmul.f32 %v955, 1.442695
      %v1059 = vpow.pop %v1058
      %v1060 = vmul.f32 %v957, 1.442695
      %v1061 = vpow.pop %v1060
      %v1062 = vmul.f32 %v960, 1.442695
      %v1063 = vpow.pop %v1062
      %v1064 = vmul.f32 %v962, 1.442695
      %v1065 = vpow.pop %v1064
      %v1066 = vmul.f32 %v965, 1.442695
      %v1067 = vpow.pop %v1066
      %v1068 = vmul.f32 %v967, 1.442695
      %v1069 = vpow.pop %v1068
      %v1070 = vmul.f32 %v970, 1.442695
      %v1071 = vpow.pop %v1070
      %v1072 = vmul.f32 %v972, 1.442695
      %v1073 = vpow.pop %v1072
      %v1074 = vmul.f32 %v975, 1.442695
      %v1075 = vpow.pop %v1074
      %v1076 = vmul.f32 %v977, 1.442695
      %v1077 = vpow.pop %v1076
      %v1078 = vmul.f32 %v980, 1.442695
      %v1079 = vpow.pop %v1078
      %v1080 = vmul.f32 %v982, 1.442695
      %v1081 = vpow.pop %v1080
      %v1082 = vmul.f32 %v985, 1.442695
      %v1083 = vpow.pop %v1082
      %v1084 = vmul.f32 %v987, 1.442695
      %v1085 = vpow.pop %v1084
      %v1086 = vmul.f32 %v990, 1.442695
      %v1087 = vpow.pop %v1086
      %v1088 = vmul.f32 %v992, 1.442695
      %v1089 = vpow.pop %v1088
      %v1090 = vsub.f32 %v1027, 1.0
      %v1091 = vsub.f32 %v1029, 1.0
      %v1092 = vsub.f32 %v1031, 1.0
      %v1093 = vsub.f32 %v1033, 1.0
      %v1094 = vsub.f32 %v1035, 1.0
      %v1095 = vsub.f32 %v1037, 1.0
      %v1096 = vsub.f32 %v1039, 1.0
      %v1097 = vsub.f32 %v1041, 1.0
      %v1098 = vsub.f32 %v1043, 1.0
      %v1099 = vsub.f32 %v1045, 1.0
      %v1100 = vsub.f32 %v1047, 1.0
      %v1101 = vsub.f32 %v1049, 1.0
      %v1102 = vsub.f32 %v1051, 1.0
      %v1103 = vsub.f32 %v1053, 1.0
      %v1104 = vsub.f32 %v1055, 1.0
      %v1105 = vsub.f32 %v1057, 1.0
      %v1106 = vsub.f32 %v1059, 1.0
      %v1107 = vsub.f32 %v1061, 1.0
      %v1108 = vsub.f32 %v1063, 1.0
      %v1109 = vsub.f32 %v1065, 1.0
      %v1110 = vsub.f32 %v1067, 1.0
      %v1111 = vsub.f32 %v1069, 1.0
      %v1112 = vsub.f32 %v1071, 1.0
      %v1113 = vsub.f32 %v1073, 1.0
      %v1114 = vsub.f32 %v1075, 1.0
      %v1115 = vsub.f32 %v1077, 1.0
      %v1116 = vsub.f32 %v1079, 1.0
      %v1117 = vsub.f32 %v1081, 1.0
      %v1118 = vsub.f32 %v1083, 1.0
      %v1119 = vsub.f32 %v1085, 1.0
      %v1120 = vsub.f32 %v1087, 1.0
      %v1121 = vsub.f32 %v1089, 1.0
      %v1122 = vmul.f32 %v1090, 1.6732632
      %v1123 = vmul.f32 %v1091, 1.6732632
      %v1124 = vmul.f32 %v1092, 1.6732632
      %v1125 = vmul.f32 %v1093, 1.6732632
      %v1126 = vmul.f32 %v1094, 1.6732632
      %v1127 = vmul.f32 %v1095, 1.6732632
      %v1128 = vmul.f32 %v1096, 1.6732632
      %v1129 = vmul.f32 %v1097, 1.6732632
      %v1130 = vmul.f32 %v1098, 1.6732632
      %v1131 = vmul.f32 %v1099, 1.6732632
      %v1132 = vmul.f32 %v1100, 1.6732632
      %v1133 = vmul.f32 %v1101, 1.6732632
      %v1134 = vmul.f32 %v1102, 1.6732632
      %v1135 = vmul.f32 %v1103, 1.6732632
      %v1136 = vmul.f32 %v1104, 1.6732632
      %v1137 = vmul.f32 %v1105, 1.6732632
      %v1138 = vmul.f32 %v1106, 1.6732632
      %v1139 = vmul.f32 %v1107, 1.6732632
      %v1140 = vmul.f32 %v1108, 1.6732632
      %v1141 = vmul.f32 %v1109, 1.6732632
      %v1142 = vmul.f32 %v1110, 1.6732632
      %v1143 = vmul.f32 %v1111, 1.6732632
      %v1144 = vmul.f32 %v1112, 1.6732632
      %v1145 = vmul.f32 %v1113, 1.6732632
      %v1146 = vmul.f32 %v1114, 1.6732632
      %v1147 = vmul.f32 %v1115, 1.6732632
      %v1148 = vmul.f32 %v1116, 1.6732632
      %v1149 = vmul.f32 %v1117, 1.6732632
      %v1150 = vmul.f32 %v1118, 1.6732632
      %v1151 = vmul.f32 %v1119, 1.6732632
      %v1152 = vmul.f32 %v1120, 1.6732632
      %v1153 = vmul.f32 %v1121, 1.6732632
      %v1154 = vsel %vm994, %v915, %v1122
      %v1155 = vsel %vm995, %v917, %v1123
      %v1156 = vsel %vm996, %v920, %v1124
      %v1157 = vsel %vm997, %v922, %v1125
      %v1158 = vsel %vm998, %v925, %v1126
      %v1159 = vsel %vm999, %v927, %v1127
      %v1160 = vsel %vm1000, %v930, %v1128
      %v1161 = vsel %vm1001, %v932, %v1129
      %v1162 = vsel %vm1002, %v935, %v1130
      %v1163 = vsel %vm1003, %v937, %v1131
      %v1164 = vsel %vm1004, %v940, %v1132
      %v1165 = vsel %vm1005, %v942, %v1133
      %v1166 = vsel %vm1006, %v945, %v1134
      %v1167 = vsel %vm1007, %v947, %v1135
      %v1168 = vsel %vm1008, %v950, %v1136
      %v1169 = vsel %vm1009, %v952, %v1137
      %v1170 = vsel %vm1010, %v955, %v1138
      %v1171 = vsel %vm1011, %v957, %v1139
      %v1172 = vsel %vm1012, %v960, %v1140
      %v1173 = vsel %vm1013, %v962, %v1141
      %v1174 = vsel %vm1014, %v965, %v1142
      %v1175 = vsel %vm1015, %v967, %v1143
      %v1176 = vsel %vm1016, %v970, %v1144
      %v1177 = vsel %vm1017, %v972, %v1145
      %v1178 = vsel %vm1018, %v975, %v1146
      %v1179 = vsel %vm1019, %v977, %v1147
      %v1180 = vsel %vm1020, %v980, %v1148
      %v1181 = vsel %vm1021, %v982, %v1149
      %v1182 = vsel %vm1022, %v985, %v1150
      %v1183 = vsel %vm1023, %v987, %v1151
      %v1184 = vsel %vm1024, %v990, %v1152
      %v1185 = vsel %vm1025, %v992, %v1153
      %v1186 = vmul.f32 %v1154, 1.050701
      %v1187 = vmul.f32 %v1155, 1.050701
      %v1188 = vmul.f32 %v1156, 1.050701
      %v1189 = vmul.f32 %v1157, 1.050701
      %v1190 = vmul.f32 %v1158, 1.050701
      %v1191 = vmul.f32 %v1159, 1.050701
      %v1192 = vmul.f32 %v1160, 1.050701
      %v1193 = vmul.f32 %v1161, 1.050701
      %v1194 = vmul.f32 %v1162, 1.050701
      %v1195 = vmul.f32 %v1163, 1.050701
      %v1196 = vmul.f32 %v1164, 1.050701
      %v1197 = vmul.f32 %v1165, 1.050701
      %v1198 = vmul.f32 %v1166, 1.050701
      %v1199 = vmul.f32 %v1167, 1.050701
      %v1200 = vmul.f32 %v1168, 1.050701
      %v1201 = vmul.f32 %v1169, 1.050701
      %v1202 = vmul.f32 %v1170, 1.050701
      %v1203 = vmul.f32 %v1171, 1.050701
      %v1204 = vmul.f32 %v1172, 1.050701
      %v1205 = vmul.f32 %v1173, 1.050701
      %v1206 = vmul.f32 %v1174, 1.050701
      %v1207 = vmul.f32 %v1175, 1.050701
      %v1208 = vmul.f32 %v1176, 1.050701
      %v1209 = vmul.f32 %v1177, 1.050701
      %v1210 = vmul.f32 %v1178, 1.050701
      %v1211 = vmul.f32 %v1179, 1.050701
      %v1212 = vmul.f32 %v1180, 1.050701
      %v1213 = vmul.f32 %v1181, 1.050701
      %v1214 = vmul.f32 %v1182, 1.050701
      %v1215 = vmul.f32 %v1183, 1.050701
      %v1216 = vmul.f32 %v1184, 1.050701
      %v1217 = vmul.f32 %v1185, 1.050701
      %vm1218 = vcmask 125952
      %1219 = vst.msk [vmem:[#allocation2] sm:$0xf] %vm1218, 0
      %1220 = vst.msk [vmem:[#allocation2 + $0x4] sm:$0xf] %vm1218, 0
      %vm1221 = vcmask 122880
      %1222 = vst.msk [vmem:[#allocation2 + $0x8] sm:$0x1] %vm1221, 0
      %s1223 = scalar_lea.vmem [#allocation2], 204
      %1224 = vst.msk [vmem:[%s1223] sm:$0xf] %vm1218, 0
      %1225 = vst.msk [vmem:[%s1223 + $0x4] sm:$0xf] %vm1218, 0
      %1226 = vst.msk [vmem:[%s1223 + $0x8] sm:$0x1] %vm1221, 0
      %vm1227 = vcmask 122880
      %vm1228 = vsmask.f32 256
      %vm1229 = vmand %vm1227, %vm1228
      %v1230 = vld [vmem:[#allocation2] sm:$0x1]
      %v1231 = vsel %vm1229, 0, %v1230
      %1232 = vst [vmem:[#allocation2] sm:$0x1] %v1231
      %v1233 = vld [vmem:[#allocation2 + $0xc] sm:$0x1]
      %v1234 = vsel %vm1229, 0, %v1233
      %1235 = vst [vmem:[#allocation2 + $0xc] sm:$0x1] %v1234
      %v1236 = vld [vmem:[#allocation2 + $0x18] sm:$0x1]
      %v1237 = vsel %vm1229, 0, %v1236
      %1238 = vst [vmem:[#allocation2 + $0x18] sm:$0x1] %v1237
      %v1239 = vld [vmem:[#allocation2 + $0x24] sm:$0x1]
      %v1240 = vsel %vm1229, 0, %v1239
      %1241 = vst [vmem:[#allocation2 + $0x24] sm:$0x1] %v1240
      %v1242 = vld [vmem:[#allocation2 + $0x30] sm:$0x1]
      %v1243 = vsel %vm1229, 0, %v1242
      %1244 = vst [vmem:[#allocation2 + $0x30] sm:$0x1] %v1243
      %v1245 = vld [vmem:[#allocation2 + $0x3c] sm:$0x1]
      %v1246 = vsel %vm1229, 0, %v1245
      %1247 = vst [vmem:[#allocation2 + $0x3c] sm:$0x1] %v1246
      %v1248 = vld [vmem:[#allocation2 + $0x48] sm:$0x1]
      %v1249 = vsel %vm1229, 0, %v1248
      %1250 = vst [vmem:[#allocation2 + $0x48] sm:$0x1] %v1249
      %v1251 = vld [vmem:[#allocation2 + $0x54] sm:$0x1]
      %v1252 = vsel %vm1229, 0, %v1251
      %1253 = vst [vmem:[#allocation2 + $0x54] sm:$0x1] %v1252
      %v1254 = vld [vmem:[#allocation2 + $0x60] sm:$0x1]
      %v1255 = vsel %vm1229, 0, %v1254
      %1256 = vst [vmem:[#allocation2 + $0x60] sm:$0x1] %v1255
      %v1257 = vld [vmem:[#allocation2 + $0x6c] sm:$0x1]
      %v1258 = vsel %vm1229, 0, %v1257
      %1259 = vst [vmem:[#allocation2 + $0x6c] sm:$0x1] %v1258
      %v1260 = vld [vmem:[#allocation2 + $0x78] sm:$0x1]
      %v1261 = vsel %vm1229, 0, %v1260
      %1262 = vst [vmem:[#allocation2 + $0x78] sm:$0x1] %v1261
      %v1263 = vld [vmem:[#allocation2 + $0x84] sm:$0x1]
      %v1264 = vsel %vm1229, 0, %v1263
      %1265 = vst [vmem:[#allocation2 + $0x84] sm:$0x1] %v1264
      %v1266 = vld [vmem:[#allocation2 + $0x90] sm:$0x1]
      %v1267 = vsel %vm1229, 0, %v1266
      %1268 = vst [vmem:[#allocation2 + $0x90] sm:$0x1] %v1267
      %v1269 = vld [vmem:[#allocation2 + $0x9c] sm:$0x1]
      %v1270 = vsel %vm1229, 0, %v1269
      %1271 = vst [vmem:[#allocation2 + $0x9c] sm:$0x1] %v1270
      %v1272 = vld [vmem:[#allocation2 + $0xa8] sm:$0x1]
      %v1273 = vsel %vm1229, 0, %v1272
      %1274 = vst [vmem:[#allocation2 + $0xa8] sm:$0x1] %v1273
      %v1275 = vld [vmem:[#allocation2 + $0xb4] sm:$0x1]
      %v1276 = vsel %vm1229, 0, %v1275
      %1277 = vst [vmem:[#allocation2 + $0xb4] sm:$0x1] %v1276
      %v1278 = vld [vmem:[#allocation2 + $0xc0] sm:$0x1]
      %v1279 = vsel %vm1229, 0, %v1278
      %1280 = vst [vmem:[#allocation2 + $0xc0] sm:$0x1] %v1279
      %v1281 = vld [vmem:[#allocation2 + $0xcc] sm:$0x1]
      %v1282 = vsel %vm1229, 0, %v1281
      %1283 = vst [vmem:[#allocation2 + $0xcc] sm:$0x1] %v1282
      %vm1284 = vsmask.f32 7938
      %vm1285 = vmand %vm1227, %vm1284
      %v1286 = vld [vmem:[#allocation2 + $0x8] sm:$0x1]
      %v1287 = vsel %vm1285, 0, %v1286
      %1288 = vst [vmem:[#allocation2 + $0x8] sm:$0x1] %v1287
      %v1289 = vld [vmem:[#allocation2 + $0x14] sm:$0x1]
      %v1290 = vsel %vm1285, 0, %v1289
      %1291 = vst [vmem:[#allocation2 + $0x14] sm:$0x1] %v1290
      %v1292 = vld [vmem:[#allocation2 + $0x20] sm:$0x1]
      %v1293 = vsel %vm1285, 0, %v1292
      %1294 = vst [vmem:[#allocation2 + $0x20] sm:$0x1] %v1293
      %v1295 = vld [vmem:[#allocation2 + $0x2c] sm:$0x1]
      %v1296 = vsel %vm1285, 0, %v1295
      %1297 = vst [vmem:[#allocation2 + $0x2c] sm:$0x1] %v1296
      %v1298 = vld [vmem:[#allocation2 + $0x38] sm:$0x1]
      %v1299 = vsel %vm1285, 0, %v1298
      %1300 = vst [vmem:[#allocation2 + $0x38] sm:$0x1] %v1299
      %v1301 = vld [vmem:[#allocation2 + $0x44] sm:$0x1]
      %v1302 = vsel %vm1285, 0, %v1301
      %1303 = vst [vmem:[#allocation2 + $0x44] sm:$0x1] %v1302
      %v1304 = vld [vmem:[#allocation2 + $0x50] sm:$0x1]
      %v1305 = vsel %vm1285, 0, %v1304
      %1306 = vst [vmem:[#allocation2 + $0x50] sm:$0x1] %v1305
      %v1307 = vld [vmem:[#allocation2 + $0x5c] sm:$0x1]
      %v1308 = vsel %vm1285, 0, %v1307
      %1309 = vst [vmem:[#allocation2 + $0x5c] sm:$0x1] %v1308
      %v1310 = vld [vmem:[#allocation2 + $0x68] sm:$0x1]
      %v1311 = vsel %vm1285, 0, %v1310
      %1312 = vst [vmem:[#allocation2 + $0x68] sm:$0x1] %v1311
      %v1313 = vld [vmem:[#allocation2 + $0x74] sm:$0x1]
      %v1314 = vsel %vm1285, 0, %v1313
      %1315 = vst [vmem:[#allocation2 + $0x74] sm:$0x1] %v1314
      %v1316 = vld [vmem:[#allocation2 + $0x80] sm:$0x1]
      %v1317 = vsel %vm1285, 0, %v1316
      %1318 = vst [vmem:[#allocation2 + $0x80] sm:$0x1] %v1317
      %v1319 = vld [vmem:[#allocation2 + $0x8c] sm:$0x1]
      %v1320 = vsel %vm1285, 0, %v1319
      %1321 = vst [vmem:[#allocation2 + $0x8c] sm:$0x1] %v1320
      %v1322 = vld [vmem:[#allocation2 + $0x98] sm:$0x1]
      %v1323 = vsel %vm1285, 0, %v1322
      %1324 = vst [vmem:[#allocation2 + $0x98] sm:$0x1] %v1323
      %v1325 = vld [vmem:[#allocation2 + $0xa4] sm:$0x1]
      %v1326 = vsel %vm1285, 0, %v1325
      %1327 = vst [vmem:[#allocation2 + $0xa4] sm:$0x1] %v1326
      %v1328 = vld [vmem:[#allocation2 + $0xb0] sm:$0x1]
      %v1329 = vsel %vm1285, 0, %v1328
      %1330 = vst [vmem:[#allocation2 + $0xb0] sm:$0x1] %v1329
      %v1331 = vld [vmem:[#allocation2 + $0xbc] sm:$0x1]
      %v1332 = vsel %vm1285, 0, %v1331
      %1333 = vst [vmem:[#allocation2 + $0xbc] sm:$0x1] %v1332
      %v1334 = vld [vmem:[#allocation2 + $0xc8] sm:$0x1]
      %v1335 = vsel %vm1285, 0, %v1334
      %1336 = vst [vmem:[#allocation2 + $0xc8] sm:$0x1] %v1335
      %v1337 = vld [vmem:[#allocation2 + $0xd4] sm:$0x1]
      %v1338 = vsel %vm1285, 0, %v1337
      %1339 = vst [vmem:[#allocation2 + $0xd4] sm:$0x1] %v1338
      %v1340 = vpack.c.bf16 %v1186, %v1186
      %v1341 = vpack.c.bf16 %v1187, %v1187
      %v1342 = vpack.c.bf16 %v1188, %v1188
      %v1343 = vpack.c.bf16 %v1189, %v1189
      %v1344 = vpack.c.bf16 %v1190, %v1190
      %v1345 = vpack.c.bf16 %v1191, %v1191
      %v1346 = vpack.c.bf16 %v1192, %v1192
      %v1347 = vpack.c.bf16 %v1193, %v1193
      %v1348 = vpack.c.bf16 %v1194, %v1194
      %v1349 = vpack.c.bf16 %v1195, %v1195
      %v1350 = vpack.c.bf16 %v1196, %v1196
      %v1351 = vpack.c.bf16 %v1197, %v1197
      %v1352 = vpack.c.bf16 %v1198, %v1198
      %v1353 = vpack.c.bf16 %v1199, %v1199
      %v1354 = vpack.c.bf16 %v1200, %v1200
      %v1355 = vpack.c.bf16 %v1201, %v1201
      %v1356 = vpack.c.bf16 %v1202, %v1202
      %v1357 = vpack.c.bf16 %v1203, %v1203
      %v1358 = vpack.c.bf16 %v1204, %v1204
      %v1359 = vpack.c.bf16 %v1205, %v1205
      %v1360 = vpack.c.bf16 %v1206, %v1206
      %v1361 = vpack.c.bf16 %v1207, %v1207
      %v1362 = vpack.c.bf16 %v1208, %v1208
      %v1363 = vpack.c.bf16 %v1209, %v1209
      %v1364 = vpack.c.bf16 %v1210, %v1210
      %v1365 = vpack.c.bf16 %v1211, %v1211
      %v1366 = vpack.c.bf16 %v1212, %v1212
      %v1367 = vpack.c.bf16 %v1213, %v1213
      %v1368 = vpack.c.bf16 %v1214, %v1214
      %v1369 = vpack.c.bf16 %v1215, %v1215
      %v1370 = vpack.c.bf16 %v1216, %v1216
      %v1371 = vpack.c.bf16 %v1217, %v1217
      %vm1372 = vsmask.f32 4368
      %vm1373 = vmor %vm1228, %vm1372
      %v1375 = vshrl.u32 %v1340, 16
      %v1377 = vrot.slane %v1375, 7
      %v1378 = vshll.u32 %v1340, 16
      %v1380 = vor.u32 %v1377, %v1378
      %v1381 = vrot.slane %v1377, 4
      %v1383 = vshrl.u32 %v1341, 16
      %v1385 = vrot.slane %v1383, 7
      %v1386 = vshll.u32 %v1341, 16
      %v1388 = vor.u32 %v1385, %v1386
      %v1389 = vsel %vm1373, %v1381, %v1388
      %v1390 = vrot.slane %v1385, 4
      %v1392 = vshrl.u32 %v1342, 16
      %v1394 = vrot.slane %v1392, 7
      %v1395 = vshll.u32 %v1342, 16
      %v1397 = vor.u32 %v1394, %v1395
      %v1398 = vrot.slane %v1394, 4
      %v1400 = vshrl.u32 %v1343, 16
      %v1402 = vrot.slane %v1400, 7
      %v1403 = vshll.u32 %v1343, 16
      %v1405 = vor.u32 %v1402, %v1403
      %v1406 = vsel %vm1373, %v1398, %v1405
      %v1407 = vrot.slane %v1402, 4
      %v1409 = vshrl.u32 %v1344, 16
      %v1411 = vrot.slane %v1409, 7
      %v1412 = vshll.u32 %v1344, 16
      %v1414 = vor.u32 %v1411, %v1412
      %v1415 = vrot.slane %v1411, 4
      %v1417 = vshrl.u32 %v1345, 16
      %v1419 = vrot.slane %v1417, 7
      %v1420 = vshll.u32 %v1345, 16
      %v1422 = vor.u32 %v1419, %v1420
      %v1423 = vsel %vm1373, %v1415, %v1422
      %v1424 = vrot.slane %v1419, 4
      %v1426 = vshrl.u32 %v1346, 16
      %v1428 = vrot.slane %v1426, 7
      %v1429 = vshll.u32 %v1346, 16
      %v1431 = vor.u32 %v1428, %v1429
      %v1432 = vrot.slane %v1428, 4
      %v1434 = vshrl.u32 %v1347, 16
      %v1436 = vrot.slane %v1434, 7
      %v1437 = vshll.u32 %v1347, 16
      %v1439 = vor.u32 %v1436, %v1437
      %v1440 = vsel %vm1373, %v1432, %v1439
      %v1441 = vrot.slane %v1436, 4
      %v1443 = vshrl.u32 %v1348, 16
      %v1445 = vrot.slane %v1443, 7
      %v1446 = vshll.u32 %v1348, 16
      %v1448 = vor.u32 %v1445, %v1446
      %v1449 = vrot.slane %v1445, 4
      %v1451 = vshrl.u32 %v1349, 16
      %v1453 = vrot.slane %v1451, 7
      %v1454 = vshll.u32 %v1349, 16
      %v1456 = vor.u32 %v1453, %v1454
      %v1457 = vsel %vm1373, %v1449, %v1456
      %v1458 = vrot.slane %v1453, 4
      %v1460 = vshrl.u32 %v1350, 16
      %v1462 = vrot.slane %v1460, 7
      %v1463 = vshll.u32 %v1350, 16
      %v1465 = vor.u32 %v1462, %v1463
      %v1466 = vrot.slane %v1462, 4
      %v1468 = vshrl.u32 %v1351, 16
      %v1470 = vrot.slane %v1468, 7
      %v1471 = vshll.u32 %v1351, 16
      %v1473 = vor.u32 %v1470, %v1471
      %v1474 = vsel %vm1373, %v1466, %v1473
      %v1475 = vrot.slane %v1470, 4
      %v1477 = vshrl.u32 %v1352, 16
      %v1479 = vrot.slane %v1477, 7
      %v1480 = vshll.u32 %v1352, 16
      %v1482 = vor.u32 %v1479, %v1480
      %v1483 = vrot.slane %v1479, 4
      %v1485 = vshrl.u32 %v1353, 16
      %v1487 = vrot.slane %v1485, 7
      %v1488 = vshll.u32 %v1353, 16
      %v1490 = vor.u32 %v1487, %v1488
      %v1491 = vsel %vm1373, %v1483, %v1490
      %v1492 = vrot.slane %v1487, 4
      %v1494 = vshrl.u32 %v1354, 16
      %v1496 = vrot.slane %v1494, 7
      %v1497 = vshll.u32 %v1354, 16
      %v1499 = vor.u32 %v1496, %v1497
      %v1500 = vrot.slane %v1496, 4
      %v1502 = vshrl.u32 %v1355, 16
      %v1504 = vrot.slane %v1502, 7
      %v1505 = vshll.u32 %v1355, 16
      %v1507 = vor.u32 %v1504, %v1505
      %v1508 = vsel %vm1373, %v1500, %v1507
      %v1509 = vrot.slane %v1504, 4
      %v1511 = vshrl.u32 %v1356, 16
      %v1513 = vrot.slane %v1511, 7
      %v1514 = vshll.u32 %v1356, 16
      %v1516 = vor.u32 %v1513, %v1514
      %v1517 = vrot.slane %v1513, 4
      %v1519 = vshrl.u32 %v1357, 16
      %v1521 = vrot.slane %v1519, 7
      %v1522 = vshll.u32 %v1357, 16
      %v1524 = vor.u32 %v1521, %v1522
      %v1525 = vsel %vm1373, %v1517, %v1524
      %v1526 = vrot.slane %v1521, 4
      %v1528 = vshrl.u32 %v1358, 16
      %v1530 = vrot.slane %v1528, 7
      %v1531 = vshll.u32 %v1358, 16
      %v1533 = vor.u32 %v1530, %v1531
      %v1534 = vrot.slane %v1530, 4
      %v1536 = vshrl.u32 %v1359, 16
      %v1538 = vrot.slane %v1536, 7
      %v1539 = vshll.u32 %v1359, 16
      %v1541 = vor.u32 %v1538, %v1539
      %v1542 = vsel %vm1373, %v1534, %v1541
      %v1543 = vrot.slane %v1538, 4
      %v1545 = vshrl.u32 %v1360, 16
      %v1547 = vrot.slane %v1545, 7
      %v1548 = vshll.u32 %v1360, 16
      %v1550 = vor.u32 %v1547, %v1548
      %v1551 = vrot.slane %v1547, 4
      %v1553 = vshrl.u32 %v1361, 16
      %v1555 = vrot.slane %v1553, 7
      %v1556 = vshll.u32 %v1361, 16
      %v1558 = vor.u32 %v1555, %v1556
      %v1559 = vsel %vm1373, %v1551, %v1558
      %v1560 = vrot.slane %v1555, 4
      %v1562 = vshrl.u32 %v1362, 16
      %v1564 = vrot.slane %v1562, 7
      %v1565 = vshll.u32 %v1362, 16
      %v1567 = vor.u32 %v1564, %v1565
      %v1568 = vrot.slane %v1564, 4
      %v1570 = vshrl.u32 %v1363, 16
      %v1572 = vrot.slane %v1570, 7
      %v1573 = vshll.u32 %v1363, 16
      %v1575 = vor.u32 %v1572, %v1573
      %v1576 = vsel %vm1373, %v1568, %v1575
      %v1577 = vrot.slane %v1572, 4
      %v1579 = vshrl.u32 %v1364, 16
      %v1581 = vrot.slane %v1579, 7
      %v1582 = vshll.u32 %v1364, 16
      %v1584 = vor.u32 %v1581, %v1582
      %v1585 = vrot.slane %v1581, 4
      %v1587 = vshrl.u32 %v1365, 16
      %v1589 = vrot.slane %v1587, 7
      %v1590 = vshll.u32 %v1365, 16
      %v1592 = vor.u32 %v1589, %v1590
      %v1593 = vsel %vm1373, %v1585, %v1592
      %v1594 = vrot.slane %v1589, 4
      %v1596 = vshrl.u32 %v1366, 16
      %v1598 = vrot.slane %v1596, 7
      %v1599 = vshll.u32 %v1366, 16
      %v1601 = vor.u32 %v1598, %v1599
      %v1602 = vrot.slane %v1598, 4
      %v1604 = vshrl.u32 %v1367, 16
      %v1606 = vrot.slane %v1604, 7
      %v1607 = vshll.u32 %v1367, 16
      %v1609 = vor.u32 %v1606, %v1607
      %v1610 = vsel %vm1373, %v1602, %v1609
      %v1611 = vrot.slane %v1606, 4
      %v1613 = vshrl.u32 %v1368, 16
      %v1615 = vrot.slane %v1613, 7
      %v1616 = vshll.u32 %v1368, 16
      %v1618 = vor.u32 %v1615, %v1616
      %v1619 = vrot.slane %v1615, 4
      %v1621 = vshrl.u32 %v1369, 16
      %v1623 = vrot.slane %v1621, 7
      %v1624 = vshll.u32 %v1369, 16
      %v1626 = vor.u32 %v1623, %v1624
      %v1627 = vsel %vm1373, %v1619, %v1626
      %v1628 = vrot.slane %v1623, 4
      %v1630 = vshrl.u32 %v1370, 16
      %v1632 = vrot.slane %v1630, 7
      %v1633 = vshll.u32 %v1370, 16
      %v1635 = vor.u32 %v1632, %v1633
      %v1636 = vrot.slane %v1632, 4
      %v1638 = vshrl.u32 %v1371, 16
      %v1640 = vrot.slane %v1638, 7
      %v1641 = vshll.u32 %v1371, 16
      %v1643 = vor.u32 %v1640, %v1641
      %v1644 = vsel %vm1373, %v1636, %v1643
      %v1645 = vrot.slane %v1640, 4
      %s1694 = scalar_lea.vmem [#allocation2], 12
      %vm1695 = vcmask 125952
      %vm1696 = vmand %vm1695, %vm1284
      %v1697 = vld [vmem:[%s1694] sm:$0xf]
      %v1698 = vsel %vm1696, %v1380, %v1697
      %1699 = vst [vmem:[%s1694] sm:$0xf] %v1698
      %1700 = vst.msk [vmem:[%s1694 + $0x4] sm:$0xf] %vm1218, %v1389
      %v1701 = vld [vmem:[%s1694 + $0x8] sm:$0x1]
      %v1702 = vsel %vm1229, %v1390, %v1701
      %1703 = vst [vmem:[%s1694 + $0x8] sm:$0x1] %v1702
      %v1704 = vld [vmem:[%s1694 + $0xc] sm:$0xf]
      %v1705 = vsel %vm1696, %v1397, %v1704
      %1706 = vst [vmem:[%s1694 + $0xc] sm:$0xf] %v1705
      %1707 = vst.msk [vmem:[%s1694 + $0x10] sm:$0xf] %vm1218, %v1406
      %v1708 = vld [vmem:[%s1694 + $0x14] sm:$0x1]
      %v1709 = vsel %vm1229, %v1407, %v1708
      %1710 = vst [vmem:[%s1694 + $0x14] sm:$0x1] %v1709
      %v1711 = vld [vmem:[%s1694 + $0x18] sm:$0xf]
      %v1712 = vsel %vm1696, %v1414, %v1711
      %1713 = vst [vmem:[%s1694 + $0x18] sm:$0xf] %v1712
      %1714 = vst.msk [vmem:[%s1694 + $0x1c] sm:$0xf] %vm1218, %v1423
      %v1715 = vld [vmem:[%s1694 + $0x20] sm:$0x1]
      %v1716 = vsel %vm1229, %v1424, %v1715
      %1717 = vst [vmem:[%s1694 + $0x20] sm:$0x1] %v1716
      %v1718 = vld [vmem:[%s1694 + $0x24] sm:$0xf]
      %v1719 = vsel %vm1696, %v1431, %v1718
      %1720 = vst [vmem:[%s1694 + $0x24] sm:$0xf] %v1719
      %1721 = vst.msk [vmem:[%s1694 + $0x28] sm:$0xf] %vm1218, %v1440
      %v1722 = vld [vmem:[%s1694 + $0x2c] sm:$0x1]
      %v1723 = vsel %vm1229, %v1441, %v1722
      %1724 = vst [vmem:[%s1694 + $0x2c] sm:$0x1] %v1723
      %v1725 = vld [vmem:[%s1694 + $0x30] sm:$0xf]
      %v1726 = vsel %vm1696, %v1448, %v1725
      %1727 = vst [vmem:[%s1694 + $0x30] sm:$0xf] %v1726
      %1728 = vst.msk [vmem:[%s1694 + $0x34] sm:$0xf] %vm1218, %v1457
      %v1729 = vld [vmem:[%s1694 + $0x38] sm:$0x1]
      %v1730 = vsel %vm1229, %v1458, %v1729
      %1731 = vst [vmem:[%s1694 + $0x38] sm:$0x1] %v1730
      %v1732 = vld [vmem:[%s1694 + $0x3c] sm:$0xf]
      %v1733 = vsel %vm1696, %v1465, %v1732
      %1734 = vst [vmem:[%s1694 + $0x3c] sm:$0xf] %v1733
      %1735 = vst.msk [vmem:[%s1694 + $0x40] sm:$0xf] %vm1218, %v1474
      %v1736 = vld [vmem:[%s1694 + $0x44] sm:$0x1]
      %v1737 = vsel %vm1229, %v1475, %v1736
      %1738 = vst [vmem:[%s1694 + $0x44] sm:$0x1] %v1737
      %v1739 = vld [vmem:[%s1694 + $0x48] sm:$0xf]
      %v1740 = vsel %vm1696, %v1482, %v1739
      %1741 = vst [vmem:[%s1694 + $0x48] sm:$0xf] %v1740
      %1742 = vst.msk [vmem:[%s1694 + $0x4c] sm:$0xf] %vm1218, %v1491
      %v1743 = vld [vmem:[%s1694 + $0x50] sm:$0x1]
      %v1744 = vsel %vm1229, %v1492, %v1743
      %1745 = vst [vmem:[%s1694 + $0x50] sm:$0x1] %v1744
      %v1746 = vld [vmem:[%s1694 + $0x54] sm:$0xf]
      %v1747 = vsel %vm1696, %v1499, %v1746
      %1748 = vst [vmem:[%s1694 + $0x54] sm:$0xf] %v1747
      %1749 = vst.msk [vmem:[%s1694 + $0x58] sm:$0xf] %vm1218, %v1508
      %v1750 = vld [vmem:[%s1694 + $0x5c] sm:$0x1]
      %v1751 = vsel %vm1229, %v1509, %v1750
      %1752 = vst [vmem:[%s1694 + $0x5c] sm:$0x1] %v1751
      %v1753 = vld [vmem:[%s1694 + $0x60] sm:$0xf]
      %v1754 = vsel %vm1696, %v1516, %v1753
      %1755 = vst [vmem:[%s1694 + $0x60] sm:$0xf] %v1754
      %1756 = vst.msk [vmem:[%s1694 + $0x64] sm:$0xf] %vm1218, %v1525
      %v1757 = vld [vmem:[%s1694 + $0x68] sm:$0x1]
      %v1758 = vsel %vm1229, %v1526, %v1757
      %1759 = vst [vmem:[%s1694 + $0x68] sm:$0x1] %v1758
      %v1760 = vld [vmem:[%s1694 + $0x6c] sm:$0xf]
      %v1761 = vsel %vm1696, %v1533, %v1760
      %1762 = vst [vmem:[%s1694 + $0x6c] sm:$0xf] %v1761
      %1763 = vst.msk [vmem:[%s1694 + $0x70] sm:$0xf] %vm1218, %v1542
      %v1764 = vld [vmem:[%s1694 + $0x74] sm:$0x1]
      %v1765 = vsel %vm1229, %v1543, %v1764
      %1766 = vst [vmem:[%s1694 + $0x74] sm:$0x1] %v1765
      %v1767 = vld [vmem:[%s1694 + $0x78] sm:$0xf]
      %v1768 = vsel %vm1696, %v1550, %v1767
      %1769 = vst [vmem:[%s1694 + $0x78] sm:$0xf] %v1768
      %1770 = vst.msk [vmem:[%s1694 + $0x7c] sm:$0xf] %vm1218, %v1559
      %v1771 = vld [vmem:[%s1694 + $0x80] sm:$0x1]
      %v1772 = vsel %vm1229, %v1560, %v1771
      %1773 = vst [vmem:[%s1694 + $0x80] sm:$0x1] %v1772
      %v1774 = vld [vmem:[%s1694 + $0x84] sm:$0xf]
      %v1775 = vsel %vm1696, %v1567, %v1774
      %1776 = vst [vmem:[%s1694 + $0x84] sm:$0xf] %v1775
      %1777 = vst.msk [vmem:[%s1694 + $0x88] sm:$0xf] %vm1218, %v1576
      %v1778 = vld [vmem:[%s1694 + $0x8c] sm:$0x1]
      %v1779 = vsel %vm1229, %v1577, %v1778
      %1780 = vst [vmem:[%s1694 + $0x8c] sm:$0x1] %v1779
      %v1781 = vld [vmem:[%s1694 + $0x90] sm:$0xf]
      %v1782 = vsel %vm1696, %v1584, %v1781
      %1783 = vst [vmem:[%s1694 + $0x90] sm:$0xf] %v1782
      %1784 = vst.msk [vmem:[%s1694 + $0x94] sm:$0xf] %vm1218, %v1593
      %v1785 = vld [vmem:[%s1694 + $0x98] sm:$0x1]
      %v1786 = vsel %vm1229, %v1594, %v1785
      %1787 = vst [vmem:[%s1694 + $0x98] sm:$0x1] %v1786
      %v1788 = vld [vmem:[%s1694 + $0x9c] sm:$0xf]
      %v1789 = vsel %vm1696, %v1601, %v1788
      %1790 = vst [vmem:[%s1694 + $0x9c] sm:$0xf] %v1789
      %1791 = vst.msk [vmem:[%s1694 + $0xa0] sm:$0xf] %vm1218, %v1610
      %v1792 = vld [vmem:[%s1694 + $0xa4] sm:$0x1]
      %v1793 = vsel %vm1229, %v1611, %v1792
      %1794 = vst [vmem:[%s1694 + $0xa4] sm:$0x1] %v1793
      %v1795 = vld [vmem:[%s1694 + $0xa8] sm:$0xf]
      %v1796 = vsel %vm1696, %v1618, %v1795
      %1797 = vst [vmem:[%s1694 + $0xa8] sm:$0xf] %v1796
      %1798 = vst.msk [vmem:[%s1694 + $0xac] sm:$0xf] %vm1218, %v1627
      %v1799 = vld [vmem:[%s1694 + $0xb0] sm:$0x1]
      %v1800 = vsel %vm1229, %v1628, %v1799
      %1801 = vst [vmem:[%s1694 + $0xb0] sm:$0x1] %v1800
      %v1802 = vld [vmem:[%s1694 + $0xb4] sm:$0xf]
      %v1803 = vsel %vm1696, %v1635, %v1802
      %1804 = vst [vmem:[%s1694 + $0xb4] sm:$0xf] %v1803
      %1805 = vst.msk [vmem:[%s1694 + $0xb8] sm:$0xf] %vm1218, %v1644
      %v1806 = vld [vmem:[%s1694 + $0xbc] sm:$0x1]
      %v1807 = vsel %vm1229, %v1645, %v1806
      %1808 = vst [vmem:[%s1694 + $0xbc] sm:$0x1] %v1807
      %v1809 = vld [vmem:[#allocation2] sm:$0xf]
      %v1810 = vld [vmem:[#allocation2 + $0x4] sm:$0xf]
      %v1811 = vld [vmem:[#allocation2 + $0xc] sm:$0xf]
      %v1812 = vld [vmem:[#allocation2 + $0x10] sm:$0xf]
      %v1813 = vld [vmem:[#allocation2 + $0x18] sm:$0xf]
      %v1814 = vld [vmem:[#allocation2 + $0x1c] sm:$0xf]
      %v1815 = vld [vmem:[#allocation2 + $0x24] sm:$0xf]
      %v1816 = vld [vmem:[#allocation2 + $0x28] sm:$0xf]
      %v1817 = vld [vmem:[#allocation2 + $0x30] sm:$0xf]
      %v1818 = vld [vmem:[#allocation2 + $0x34] sm:$0xf]
      %v1819 = vld [vmem:[#allocation2 + $0x3c] sm:$0xf]
      %v1820 = vld [vmem:[#allocation2 + $0x40] sm:$0xf]
      %v1821 = vld [vmem:[#allocation2 + $0x48] sm:$0xf]
      %v1822 = vld [vmem:[#allocation2 + $0x4c] sm:$0xf]
      %v1823 = vld [vmem:[#allocation2 + $0x54] sm:$0xf]
      %v1824 = vld [vmem:[#allocation2 + $0x58] sm:$0xf]
      %v1825 = vld [vmem:[#allocation2 + $0x60] sm:$0xf]
      %v1826 = vld [vmem:[#allocation2 + $0x64] sm:$0xf]
      %v1827 = vld [vmem:[#allocation2 + $0x6c] sm:$0xf]
      %v1828 = vld [vmem:[#allocation2 + $0x70] sm:$0xf]
      %v1829 = vld [vmem:[#allocation2 + $0x78] sm:$0xf]
      %v1830 = vld [vmem:[#allocation2 + $0x7c] sm:$0xf]
      %v1831 = vld [vmem:[#allocation2 + $0x84] sm:$0xf]
      %v1832 = vld [vmem:[#allocation2 + $0x88] sm:$0xf]
      %v1833 = vld [vmem:[#allocation2 + $0x90] sm:$0xf]
      %v1834 = vld [vmem:[#allocation2 + $0x94] sm:$0xf]
      %v1835 = vld [vmem:[#allocation2 + $0x9c] sm:$0xf]
      %v1836 = vld [vmem:[#allocation2 + $0xa0] sm:$0xf]
      %v1837 = vld [vmem:[#allocation2 + $0xa8] sm:$0xf]
      %v1838 = vld [vmem:[#allocation2 + $0xac] sm:$0xf]
      %v1839 = vld [vmem:[#allocation2 + $0xb4] sm:$0xf]
      %v1840 = vld [vmem:[#allocation2 + $0xb8] sm:$0xf]
      %v1841 = vld [vmem:[%s5] sm:$0xf]
      %v1842 = vld [vmem:[%s5 + $0x4] sm:$0xf]
      %v1843 = vld [vmem:[#allocation2 + $0x8] sm:$0x1]
      %v1844 = vld [vmem:[#allocation2 + $0x14] sm:$0x1]
      %v1845 = vld [vmem:[#allocation2 + $0x20] sm:$0x1]
      %v1846 = vld [vmem:[#allocation2 + $0x2c] sm:$0x1]
      %v1847 = vld [vmem:[#allocation2 + $0x38] sm:$0x1]
      %v1848 = vld [vmem:[#allocation2 + $0x44] sm:$0x1]
      %v1849 = vld [vmem:[#allocation2 + $0x50] sm:$0x1]
      %v1850 = vld [vmem:[#allocation2 + $0x5c] sm:$0x1]
      %v1851 = vld [vmem:[#allocation2 + $0x68] sm:$0x1]
      %v1852 = vld [vmem:[#allocation2 + $0x74] sm:$0x1]
      %v1853 = vld [vmem:[#allocation2 + $0x80] sm:$0x1]
      %v1854 = vld [vmem:[#allocation2 + $0x8c] sm:$0x1]
      %v1855 = vld [vmem:[#allocation2 + $0x98] sm:$0x1]
      %v1856 = vld [vmem:[#allocation2 + $0xa4] sm:$0x1]
      %v1857 = vld [vmem:[#allocation2 + $0xb0] sm:$0x1]
      %v1858 = vld [vmem:[#allocation2 + $0xbc] sm:$0x1]
      %vm1859 = vsmask.f32 3328
      %vm1860 = vsmask.f32 7440
      %vm1861 = vmor %vm1859, %vm1860
      %v1863 = vshrl.u32 %v1809, 16
      %v1865 = vrot.slane %v1863, 4
      %v1866 = vshll.u32 %v1809, 16
      %v1868 = vrot.slane %v1866, 5
      %v1869 = vor.u32 %v1865, %v1868
      %v1870 = vrot.slane %v1869, 4
      %v1872 = vshll.u32 %v1810, 16
      %v1874 = vrot.slane %v1872, 5
      %v1875 = vsel %vm1861, %v1870, %v1874
      %v1876 = vshrl.u32 %v1810, 16
      %v1878 = vrot.slane %v1876, 4
      %v1879 = vor.u32 %v1878, %v1874
      %v1880 = vrot.slane %v1879, 4
      %v1882 = vshll.u32 %v1843, 16
      %v1884 = vrot.slane %v1882, 5
      %v1885 = vsel %vm1861, %v1880, %v1884
      %v1887 = vshrl.u32 %v1811, 16
      %v1889 = vrot.slane %v1887, 4
      %v1890 = vshll.u32 %v1811, 16
      %v1892 = vrot.slane %v1890, 5
      %v1893 = vor.u32 %v1889, %v1892
      %v1894 = vrot.slane %v1893, 4
      %v1896 = vshll.u32 %v1812, 16
      %v1898 = vrot.slane %v1896, 5
      %v1899 = vsel %vm1861, %v1894, %v1898
      %v1900 = vshrl.u32 %v1812, 16
      %v1902 = vrot.slane %v1900, 4
      %v1903 = vor.u32 %v1902, %v1898
      %v1904 = vrot.slane %v1903, 4
      %v1906 = vshll.u32 %v1844, 16
      %v1908 = vrot.slane %v1906, 5
      %v1909 = vsel %vm1861, %v1904, %v1908
      %v1911 = vshrl.u32 %v1813, 16
      %v1913 = vrot.slane %v1911, 4
      %v1914 = vshll.u32 %v1813, 16
      %v1916 = vrot.slane %v1914, 5
      %v1917 = vor.u32 %v1913, %v1916
      %v1918 = vrot.slane %v1917, 4
      %v1920 = vshll.u32 %v1814, 16
      %v1922 = vrot.slane %v1920, 5
      %v1923 = vsel %vm1861, %v1918, %v1922
      %v1924 = vshrl.u32 %v1814, 16
      %v1926 = vrot.slane %v1924, 4
      %v1927 = vor.u32 %v1926, %v1922
      %v1928 = vrot.slane %v1927, 4
      %v1930 = vshll.u32 %v1845, 16
      %v1932 = vrot.slane %v1930, 5
      %v1933 = vsel %vm1861, %v1928, %v1932
      %v1935 = vshrl.u32 %v1815, 16
      %v1937 = vrot.slane %v1935, 4
      %v1938 = vshll.u32 %v1815, 16
      %v1940 = vrot.slane %v1938, 5
      %v1941 = vor.u32 %v1937, %v1940
      %v1942 = vrot.slane %v1941, 4
      %v1944 = vshll.u32 %v1816, 16
      %v1946 = vrot.slane %v1944, 5
      %v1947 = vsel %vm1861, %v1942, %v1946
      %v1948 = vshrl.u32 %v1816, 16
      %v1950 = vrot.slane %v1948, 4
      %v1951 = vor.u32 %v1950, %v1946
      %v1952 = vrot.slane %v1951, 4
      %v1954 = vshll.u32 %v1846, 16
      %v1956 = vrot.slane %v1954, 5
      %v1957 = vsel %vm1861, %v1952, %v1956
      %v1959 = vshrl.u32 %v1817, 16
      %v1961 = vrot.slane %v1959, 4
      %v1962 = vshll.u32 %v1817, 16
      %v1964 = vrot.slane %v1962, 5
      %v1965 = vor.u32 %v1961, %v1964
      %v1966 = vrot.slane %v1965, 4
      %v1968 = vshll.u32 %v1818, 16
      %v1970 = vrot.slane %v1968, 5
      %v1971 = vsel %vm1861, %v1966, %v1970
      %v1972 = vshrl.u32 %v1818, 16
      %v1974 = vrot.slane %v1972, 4
      %v1975 = vor.u32 %v1974, %v1970
      %v1976 = vrot.slane %v1975, 4
      %v1978 = vshll.u32 %v1847, 16
      %v1980 = vrot.slane %v1978, 5
      %v1981 = vsel %vm1861, %v1976, %v1980
      %v1983 = vshrl.u32 %v1819, 16
      %v1985 = vrot.slane %v1983, 4
      %v1986 = vshll.u32 %v1819, 16
      %v1988 = vrot.slane %v1986, 5
      %v1989 = vor.u32 %v1985, %v1988
      %v1990 = vrot.slane %v1989, 4
      %v1992 = vshll.u32 %v1820, 16
      %v1994 = vrot.slane %v1992, 5
      %v1995 = vsel %vm1861, %v1990, %v1994
      %v1996 = vshrl.u32 %v1820, 16
      %v1998 = vrot.slane %v1996, 4
      %v1999 = vor.u32 %v1998, %v1994
      %v2000 = vrot.slane %v1999, 4
      %v2002 = vshll.u32 %v1848, 16
      %v2004 = vrot.slane %v2002, 5
      %v2005 = vsel %vm1861, %v2000, %v2004
      %v2007 = vshrl.u32 %v1821, 16
      %v2009 = vrot.slane %v2007, 4
      %v2010 = vshll.u32 %v1821, 16
      %v2012 = vrot.slane %v2010, 5
      %v2013 = vor.u32 %v2009, %v2012
      %v2014 = vrot.slane %v2013, 4
      %v2016 = vshll.u32 %v1822, 16
      %v2018 = vrot.slane %v2016, 5
      %v2019 = vsel %vm1861, %v2014, %v2018
      %v2020 = vshrl.u32 %v1822, 16
      %v2022 = vrot.slane %v2020, 4
      %v2023 = vor.u32 %v2022, %v2018
      %v2024 = vrot.slane %v2023, 4
      %v2026 = vshll.u32 %v1849, 16
      %v2028 = vrot.slane %v2026, 5
      %v2029 = vsel %vm1861, %v2024, %v2028
      %v2031 = vshrl.u32 %v1823, 16
      %v2033 = vrot.slane %v2031, 4
      %v2034 = vshll.u32 %v1823, 16
      %v2036 = vrot.slane %v2034, 5
      %v2037 = vor.u32 %v2033, %v2036
      %v2038 = vrot.slane %v2037, 4
      %v2040 = vshll.u32 %v1824, 16
      %v2042 = vrot.slane %v2040, 5
      %v2043 = vsel %vm1861, %v2038, %v2042
      %v2044 = vshrl.u32 %v1824, 16
      %v2046 = vrot.slane %v2044, 4
      %v2047 = vor.u32 %v2046, %v2042
      %v2048 = vrot.slane %v2047, 4
      %v2050 = vshll.u32 %v1850, 16
      %v2052 = vrot.slane %v2050, 5
      %v2053 = vsel %vm1861, %v2048, %v2052
      %v2055 = vshrl.u32 %v1825, 16
      %v2057 = vrot.slane %v2055, 4
      %v2058 = vshll.u32 %v1825, 16
      %v2060 = vrot.slane %v2058, 5
      %v2061 = vor.u32 %v2057, %v2060
      %v2062 = vrot.slane %v2061, 4
      %v2064 = vshll.u32 %v1826, 16
      %v2066 = vrot.slane %v2064, 5
      %v2067 = vsel %vm1861, %v2062, %v2066
      %v2068 = vshrl.u32 %v1826, 16
      %v2070 = vrot.slane %v2068, 4
      %v2071 = vor.u32 %v2070, %v2066
      %v2072 = vrot.slane %v2071, 4
      %v2074 = vshll.u32 %v1851, 16
      %v2076 = vrot.slane %v2074, 5
      %v2077 = vsel %vm1861, %v2072, %v2076
      %v2079 = vshrl.u32 %v1827, 16
      %v2081 = vrot.slane %v2079, 4
      %v2082 = vshll.u32 %v1827, 16
      %v2084 = vrot.slane %v2082, 5
      %v2085 = vor.u32 %v2081, %v2084
      %v2086 = vrot.slane %v2085, 4
      %v2088 = vshll.u32 %v1828, 16
      %v2090 = vrot.slane %v2088, 5
      %v2091 = vsel %vm1861, %v2086, %v2090
      %v2092 = vshrl.u32 %v1828, 16
      %v2094 = vrot.slane %v2092, 4
      %v2095 = vor.u32 %v2094, %v2090
      %v2096 = vrot.slane %v2095, 4
      %v2098 = vshll.u32 %v1852, 16
      %v2100 = vrot.slane %v2098, 5
      %v2101 = vsel %vm1861, %v2096, %v2100
      %v2103 = vshrl.u32 %v1829, 16
      %v2105 = vrot.slane %v2103, 4
      %v2106 = vshll.u32 %v1829, 16
      %v2108 = vrot.slane %v2106, 5
      %v2109 = vor.u32 %v2105, %v2108
      %v2110 = vrot.slane %v2109, 4
      %v2112 = vshll.u32 %v1830, 16
      %v2114 = vrot.slane %v2112, 5
      %v2115 = vsel %vm1861, %v2110, %v2114
      %v2116 = vshrl.u32 %v1830, 16
      %v2118 = vrot.slane %v2116, 4
      %v2119 = vor.u32 %v2118, %v2114
      %v2120 = vrot.slane %v2119, 4
      %v2122 = vshll.u32 %v1853, 16
      %v2124 = vrot.slane %v2122, 5
      %v2125 = vsel %vm1861, %v2120, %v2124
      %v2127 = vshrl.u32 %v1831, 16
      %v2129 = vrot.slane %v2127, 4
      %v2130 = vshll.u32 %v1831, 16
      %v2132 = vrot.slane %v2130, 5
      %v2133 = vor.u32 %v2129, %v2132
      %v2134 = vrot.slane %v2133, 4
      %v2136 = vshll.u32 %v1832, 16
      %v2138 = vrot.slane %v2136, 5
      %v2139 = vsel %vm1861, %v2134, %v2138
      %v2140 = vshrl.u32 %v1832, 16
      %v2142 = vrot.slane %v2140, 4
      %v2143 = vor.u32 %v2142, %v2138
      %v2144 = vrot.slane %v2143, 4
      %v2146 = vshll.u32 %v1854, 16
      %v2148 = vrot.slane %v2146, 5
      %v2149 = vsel %vm1861, %v2144, %v2148
      %v2151 = vshrl.u32 %v1833, 16
      %v2153 = vrot.slane %v2151, 4
      %v2154 = vshll.u32 %v1833, 16
      %v2156 = vrot.slane %v2154, 5
      %v2157 = vor.u32 %v2153, %v2156
      %v2158 = vrot.slane %v2157, 4
      %v2160 = vshll.u32 %v1834, 16
      %v2162 = vrot.slane %v2160, 5
      %v2163 = vsel %vm1861, %v2158, %v2162
      %v2164 = vshrl.u32 %v1834, 16
      %v2166 = vrot.slane %v2164, 4
      %v2167 = vor.u32 %v2166, %v2162
      %v2168 = vrot.slane %v2167, 4
      %v2170 = vshll.u32 %v1855, 16
      %v2172 = vrot.slane %v2170, 5
      %v2173 = vsel %vm1861, %v2168, %v2172
      %v2175 = vshrl.u32 %v1835, 16
      %v2177 = vrot.slane %v2175, 4
      %v2178 = vshll.u32 %v1835, 16
      %v2180 = vrot.slane %v2178, 5
      %v2181 = vor.u32 %v2177, %v2180
      %v2182 = vrot.slane %v2181, 4
      %v2184 = vshll.u32 %v1836, 16
      %v2186 = vrot.slane %v2184, 5
      %v2187 = vsel %vm1861, %v2182, %v2186
      %v2188 = vshrl.u32 %v1836, 16
      %v2190 = vrot.slane %v2188, 4
      %v2191 = vor.u32 %v2190, %v2186
      %v2192 = vrot.slane %v2191, 4
      %v2194 = vshll.u32 %v1856, 16
      %v2196 = vrot.slane %v2194, 5
      %v2197 = vsel %vm1861, %v2192, %v2196
      %v2199 = vshrl.u32 %v1837, 16
      %v2201 = vrot.slane %v2199, 4
      %v2202 = vshll.u32 %v1837, 16
      %v2204 = vrot.slane %v2202, 5
      %v2205 = vor.u32 %v2201, %v2204
      %v2206 = vrot.slane %v2205, 4
      %v2208 = vshll.u32 %v1838, 16
      %v2210 = vrot.slane %v2208, 5
      %v2211 = vsel %vm1861, %v2206, %v2210
      %v2212 = vshrl.u32 %v1838, 16
      %v2214 = vrot.slane %v2212, 4
      %v2215 = vor.u32 %v2214, %v2210
      %v2216 = vrot.slane %v2215, 4
      %v2218 = vshll.u32 %v1857, 16
      %v2220 = vrot.slane %v2218, 5
      %v2221 = vsel %vm1861, %v2216, %v2220
      %v2223 = vshrl.u32 %v1839, 16
      %v2225 = vrot.slane %v2223, 4
      %v2226 = vshll.u32 %v1839, 16
      %v2228 = vrot.slane %v2226, 5
      %v2229 = vor.u32 %v2225, %v2228
      %v2230 = vrot.slane %v2229, 4
      %v2232 = vshll.u32 %v1840, 16
      %v2234 = vrot.slane %v2232, 5
      %v2235 = vsel %vm1861, %v2230, %v2234
      %v2236 = vshrl.u32 %v1840, 16
      %v2238 = vrot.slane %v2236, 4
      %v2239 = vor.u32 %v2238, %v2234
      %v2240 = vrot.slane %v2239, 4
      %v2242 = vshll.u32 %v1858, 16
      %v2244 = vrot.slane %v2242, 5
      %v2245 = vsel %vm1861, %v2240, %v2244
      %s2246 = scalar_lea.vmem %s5, 8
      %v2247 = vld [vmem:[%s2246] sm:$0xf]
      %v2248 = vld [vmem:[%s2246 + $0x4] sm:$0xf]
      %v2249 = vunpack.c.l.b16 %v1875
      %v2250 = vunpack.c.l.b16 %v1885
      %v2251 = vunpack.c.l.b16 %v1899
      %v2252 = vunpack.c.l.b16 %v1909
      %v2253 = vunpack.c.l.b16 %v1923
      %v2254 = vunpack.c.l.b16 %v1933
      %v2255 = vunpack.c.l.b16 %v1947
      %v2256 = vunpack.c.l.b16 %v1957
      %v2257 = vunpack.c.l.b16 %v1971
      %v2258 = vunpack.c.l.b16 %v1981
      %v2259 = vunpack.c.l.b16 %v1995
      %v2260 = vunpack.c.l.b16 %v2005
      %v2261 = vunpack.c.l.b16 %v2019
      %v2262 = vunpack.c.l.b16 %v2029
      %v2263 = vunpack.c.l.b16 %v2043
      %v2264 = vunpack.c.l.b16 %v2053
      %v2265 = vunpack.c.l.b16 %v2067
      %v2266 = vunpack.c.l.b16 %v2077
      %v2267 = vunpack.c.l.b16 %v2091
      %v2268 = vunpack.c.l.b16 %v2101
      %v2269 = vunpack.c.l.b16 %v2115
      %v2270 = vunpack.c.l.b16 %v2125
      %v2271 = vunpack.c.l.b16 %v2139
      %v2272 = vunpack.c.l.b16 %v2149
      %v2273 = vunpack.c.l.b16 %v2163
      %v2274 = vunpack.c.l.b16 %v2173
      %v2275 = vunpack.c.l.b16 %v2187
      %v2276 = vunpack.c.l.b16 %v2197
      %v2277 = vunpack.c.l.b16 %v2211
      %v2278 = vunpack.c.l.b16 %v2221
      %v2279 = vunpack.c.l.b16 %v2235
      %v2280 = vunpack.c.l.b16 %v2245
      %v2281 = vpack.c.b16 %v2250, %v2249
      %v2282 = vpack.c.b16 %v2252, %v2251
      %v2283 = vpack.c.b16 %v2254, %v2253
      %v2284 = vpack.c.b16 %v2256, %v2255
      %v2285 = vpack.c.b16 %v2258, %v2257
      %v2286 = vpack.c.b16 %v2260, %v2259
      %v2287 = vpack.c.b16 %v2262, %v2261
      %v2288 = vpack.c.b16 %v2264, %v2263
      %v2289 = vpack.c.b16 %v2266, %v2265
      %v2290 = vpack.c.b16 %v2268, %v2267
      %v2291 = vpack.c.b16 %v2270, %v2269
      %v2292 = vpack.c.b16 %v2272, %v2271
      %v2293 = vpack.c.b16 %v2274, %v2273
      %v2294 = vpack.c.b16 %v2276, %v2275
      %v2295 = vpack.c.b16 %v2278, %v2277
      %v2296 = vpack.c.b16 %v2280, %v2279
      %v2299 = vunpack.c.l.b16 %v2247
      %v2300 = vunpack.c.l.b16 %v2248
      %v2301 = vpack.c.b16 %v2300, %v2299
      %v2304 = vsel %vm458, %v2281, 0
      %v2307 = vsel %vm458, %v2282, 0
      %v2310 = vsel %vm458, %v2283, 0
      %v2313 = vsel %vm458, %v2284, 0
      %v2316 = vsel %vm458, %v2285, 0
      %v2319 = vsel %vm458, %v2286, 0
      %v2322 = vsel %vm458, %v2287, 0
      %v2325 = vsel %vm458, %v2288, 0
      %v2328 = vsel %vm458, %v2289, 0
      %v2331 = vsel %vm458, %v2290, 0
      %v2334 = vsel %vm458, %v2291, 0
      %v2337 = vsel %vm458, %v2292, 0
      %v2340 = vsel %vm458, %v2293, 0
      %v2343 = vsel %vm458, %v2294, 0
      %v2346 = vsel %vm458, %v2295, 0
      %v2349 = vsel %vm458, %v2296, 0
      %2351 = vmatpush.bf16.msra.mxu0 0
      %2352 = vmatpush.bf16.msra.mxu0 0
      %2353 = vmatpush.bf16.msra.mxu0 0
      %2354 = vmatpush.bf16.msra.mxu0 0
      %2355 = vmatpush.bf16.msra.mxu0 0
      %2356 = vmatpush.bf16.msra.mxu0 0
      %2357 = vmatpush.bf16.msra.mxu0 0
      %2358 = vmatpush.bf16.msra.mxu0 %v2301
      %2359 = vmatmul.bf16.gmra.mxu0 %v2304
      %v2360 = vpop.f32.mrf.mxu0
      %v2361 = vadd.f32 0.0, %v2360
      %v2362 = vpop.f32.mrf.mxu0
      %v2363 = vadd.f32 0.0, %v2362
      %2364 = vmatmul.bf16.gmra.mxu0 %v2307
      %v2365 = vpop.f32.mrf.mxu0
      %v2366 = vadd.f32 0.0, %v2365
      %v2367 = vpop.f32.mrf.mxu0
      %v2368 = vadd.f32 0.0, %v2367
      %2369 = vmatmul.bf16.gmra.mxu0 %v2310
      %v2370 = vpop.f32.mrf.mxu0
      %v2371 = vadd.f32 0.0, %v2370
      %v2372 = vpop.f32.mrf.mxu0
      %v2373 = vadd.f32 0.0, %v2372
      %2374 = vmatmul.bf16.gmra.mxu0 %v2313
      %v2375 = vpop.f32.mrf.mxu0
      %v2376 = vadd.f32 0.0, %v2375
      %v2377 = vpop.f32.mrf.mxu0
      %v2378 = vadd.f32 0.0, %v2377
      %2379 = vmatmul.bf16.gmra.mxu0 %v2316
      %v2380 = vpop.f32.mrf.mxu0
      %v2381 = vadd.f32 0.0, %v2380
      %v2382 = vpop.f32.mrf.mxu0
      %v2383 = vadd.f32 0.0, %v2382
      %2384 = vmatmul.bf16.gmra.mxu0 %v2319
      %v2385 = vpop.f32.mrf.mxu0
      %v2386 = vadd.f32 0.0, %v2385
      %v2387 = vpop.f32.mrf.mxu0
      %v2388 = vadd.f32 0.0, %v2387
      %2389 = vmatmul.bf16.gmra.mxu0 %v2322
      %v2390 = vpop.f32.mrf.mxu0
      %v2391 = vadd.f32 0.0, %v2390
      %v2392 = vpop.f32.mrf.mxu0
      %v2393 = vadd.f32 0.0, %v2392
      %2394 = vmatmul.bf16.gmra.mxu0 %v2325
      %v2395 = vpop.f32.mrf.mxu0
      %v2396 = vadd.f32 0.0, %v2395
      %v2397 = vpop.f32.mrf.mxu0
      %v2398 = vadd.f32 0.0, %v2397
      %2399 = vmatmul.bf16.gmra.mxu0 %v2328
      %v2400 = vpop.f32.mrf.mxu0
      %v2401 = vadd.f32 0.0, %v2400
      %v2402 = vpop.f32.mrf.mxu0
      %v2403 = vadd.f32 0.0, %v2402
      %2404 = vmatmul.bf16.gmra.mxu0 %v2331
      %v2405 = vpop.f32.mrf.mxu0
      %v2406 = vadd.f32 0.0, %v2405
      %v2407 = vpop.f32.mrf.mxu0
      %v2408 = vadd.f32 0.0, %v2407
      %2409 = vmatmul.bf16.gmra.mxu0 %v2334
      %v2410 = vpop.f32.mrf.mxu0
      %v2411 = vadd.f32 0.0, %v2410
      %v2412 = vpop.f32.mrf.mxu0
      %v2413 = vadd.f32 0.0, %v2412
      %2414 = vmatmul.bf16.gmra.mxu0 %v2337
      %v2415 = vpop.f32.mrf.mxu0
      %v2416 = vadd.f32 0.0, %v2415
      %v2417 = vpop.f32.mrf.mxu0
      %v2418 = vadd.f32 0.0, %v2417
      %2419 = vmatmul.bf16.gmra.mxu0 %v2340
      %v2420 = vpop.f32.mrf.mxu0
      %v2421 = vadd.f32 0.0, %v2420
      %v2422 = vpop.f32.mrf.mxu0
      %v2423 = vadd.f32 0.0, %v2422
      %2424 = vmatmul.bf16.gmra.mxu0 %v2343
      %v2425 = vpop.f32.mrf.mxu0
      %v2426 = vadd.f32 0.0, %v2425
      %v2427 = vpop.f32.mrf.mxu0
      %v2428 = vadd.f32 0.0, %v2427
      %2429 = vmatmul.bf16.gmra.mxu0 %v2346
      %v2430 = vpop.f32.mrf.mxu0
      %v2431 = vadd.f32 0.0, %v2430
      %v2432 = vpop.f32.mrf.mxu0
      %v2433 = vadd.f32 0.0, %v2432
      %2434 = vmatmul.bf16.gmra.mxu0 %v2349
      %v2435 = vpop.f32.mrf.mxu0
      %v2436 = vadd.f32 0.0, %v2435
      %v2437 = vpop.f32.mrf.mxu0
      %v2438 = vadd.f32 0.0, %v2437
      %2439 = vdwg.mxu0
      %v2472 = vunpack.c.l.b16 %v1809
      %v2473 = vunpack.c.l.b16 %v1810
      %v2474 = vunpack.c.l.b16 %v1811
      %v2475 = vunpack.c.l.b16 %v1812
      %v2476 = vunpack.c.l.b16 %v1813
      %v2477 = vunpack.c.l.b16 %v1814
      %v2478 = vunpack.c.l.b16 %v1815
      %v2479 = vunpack.c.l.b16 %v1816
      %v2480 = vunpack.c.l.b16 %v1817
      %v2481 = vunpack.c.l.b16 %v1818
      %v2482 = vunpack.c.l.b16 %v1819
      %v2483 = vunpack.c.l.b16 %v1820
      %v2484 = vunpack.c.l.b16 %v1821
      %v2485 = vunpack.c.l.b16 %v1822
      %v2486 = vunpack.c.l.b16 %v1823
      %v2487 = vunpack.c.l.b16 %v1824
      %v2488 = vunpack.c.l.b16 %v1825
      %v2489 = vunpack.c.l.b16 %v1826
      %v2490 = vunpack.c.l.b16 %v1827
      %v2491 = vunpack.c.l.b16 %v1828
      %v2492 = vunpack.c.l.b16 %v1829
      %v2493 = vunpack.c.l.b16 %v1830
      %v2494 = vunpack.c.l.b16 %v1831
      %v2495 = vunpack.c.l.b16 %v1832
      %v2496 = vunpack.c.l.b16 %v1833
      %v2497 = vunpack.c.l.b16 %v1834
      %v2498 = vunpack.c.l.b16 %v1835
      %v2499 = vunpack.c.l.b16 %v1836
      %v2500 = vunpack.c.l.b16 %v1837
      %v2501 = vunpack.c.l.b16 %v1838
      %v2502 = vunpack.c.l.b16 %v1839
      %v2503 = vunpack.c.l.b16 %v1840
      %v2504 = vpack.c.b16 %v2473, %v2472
      %v2505 = vpack.c.b16 %v2475, %v2474
      %v2506 = vpack.c.b16 %v2477, %v2476
      %v2507 = vpack.c.b16 %v2479, %v2478
      %v2508 = vpack.c.b16 %v2481, %v2480
      %v2509 = vpack.c.b16 %v2483, %v2482
      %v2510 = vpack.c.b16 %v2485, %v2484
      %v2511 = vpack.c.b16 %v2487, %v2486
      %v2512 = vpack.c.b16 %v2489, %v2488
      %v2513 = vpack.c.b16 %v2491, %v2490
      %v2514 = vpack.c.b16 %v2493, %v2492
      %v2515 = vpack.c.b16 %v2495, %v2494
      %v2516 = vpack.c.b16 %v2497, %v2496
      %v2517 = vpack.c.b16 %v2499, %v2498
      %v2518 = vpack.c.b16 %v2501, %v2500
      %v2519 = vpack.c.b16 %v2503, %v2502
      %v2522 = vunpack.c.l.b16 %v1841
      %v2523 = vunpack.c.l.b16 %v1842
      %v2524 = vpack.c.b16 %v2523, %v2522
      %v2527 = vsel %vm458, %v2504, 0
      %v2530 = vsel %vm458, %v2505, 0
      %v2533 = vsel %vm458, %v2506, 0
      %v2536 = vsel %vm458, %v2507, 0
      %v2539 = vsel %vm458, %v2508, 0
      %v2542 = vsel %vm458, %v2509, 0
      %v2545 = vsel %vm458, %v2510, 0
      %v2548 = vsel %vm458, %v2511, 0
      %v2551 = vsel %vm458, %v2512, 0
      %v2554 = vsel %vm458, %v2513, 0
      %v2557 = vsel %vm458, %v2514, 0
      %v2560 = vsel %vm458, %v2515, 0
      %v2563 = vsel %vm458, %v2516, 0
      %v2566 = vsel %vm458, %v2517, 0
      %v2569 = vsel %vm458, %v2518, 0
      %v2572 = vsel %vm458, %v2519, 0
      %2574 = vmatpush.bf16.msra.mxu0 0
      %2575 = vmatpush.bf16.msra.mxu0 0
      %2576 = vmatpush.bf16.msra.mxu0 0
      %2577 = vmatpush.bf16.msra.mxu0 0
      %2578 = vmatpush.bf16.msra.mxu0 0
      %2579 = vmatpush.bf16.msra.mxu0 0
      %2580 = vmatpush.bf16.msra.mxu0 0
      %2581 = vmatpush.bf16.msra.mxu0 %v2524
      %2582 = vmatmul.bf16.gmra.mxu0 %v2527
      %v2583 = vpop.f32.mrf.mxu0
      %v2584 = vadd.f32 %v2361, %v2583
      %v2585 = vpop.f32.mrf.mxu0
      %v2586 = vadd.f32 %v2363, %v2585
      %2587 = vmatmul.bf16.gmra.mxu0 %v2530
      %v2588 = vpop.f32.mrf.mxu0
      %v2589 = vadd.f32 %v2366, %v2588
      %v2590 = vpop.f32.mrf.mxu0
      %v2591 = vadd.f32 %v2368, %v2590
      %2592 = vmatmul.bf16.gmra.mxu0 %v2533
      %v2593 = vpop.f32.mrf.mxu0
      %v2594 = vadd.f32 %v2371, %v2593
      %v2595 = vpop.f32.mrf.mxu0
      %v2596 = vadd.f32 %v2373, %v2595
      %2597 = vmatmul.bf16.gmra.mxu0 %v2536
      %v2598 = vpop.f32.mrf.mxu0
      %v2599 = vadd.f32 %v2376, %v2598
      %v2600 = vpop.f32.mrf.mxu0
      %v2601 = vadd.f32 %v2378, %v2600
      %2602 = vmatmul.bf16.gmra.mxu0 %v2539
      %v2603 = vpop.f32.mrf.mxu0
      %v2604 = vadd.f32 %v2381, %v2603
      %v2605 = vpop.f32.mrf.mxu0
      %v2606 = vadd.f32 %v2383, %v2605
      %2607 = vmatmul.bf16.gmra.mxu0 %v2542
      %v2608 = vpop.f32.mrf.mxu0
      %v2609 = vadd.f32 %v2386, %v2608
      %v2610 = vpop.f32.mrf.mxu0
      %v2611 = vadd.f32 %v2388, %v2610
      %2612 = vmatmul.bf16.gmra.mxu0 %v2545
      %v2613 = vpop.f32.mrf.mxu0
      %v2614 = vadd.f32 %v2391, %v2613
      %v2615 = vpop.f32.mrf.mxu0
      %v2616 = vadd.f32 %v2393, %v2615
      %2617 = vmatmul.bf16.gmra.mxu0 %v2548
      %v2618 = vpop.f32.mrf.mxu0
      %v2619 = vadd.f32 %v2396, %v2618
      %v2620 = vpop.f32.mrf.mxu0
      %v2621 = vadd.f32 %v2398, %v2620
      %2622 = vmatmul.bf16.gmra.mxu0 %v2551
      %v2623 = vpop.f32.mrf.mxu0
      %v2624 = vadd.f32 %v2401, %v2623
      %v2625 = vpop.f32.mrf.mxu0
      %v2626 = vadd.f32 %v2403, %v2625
      %2627 = vmatmul.bf16.gmra.mxu0 %v2554
      %v2628 = vpop.f32.mrf.mxu0
      %v2629 = vadd.f32 %v2406, %v2628
      %v2630 = vpop.f32.mrf.mxu0
      %v2631 = vadd.f32 %v2408, %v2630
      %2632 = vmatmul.bf16.gmra.mxu0 %v2557
      %v2633 = vpop.f32.mrf.mxu0
      %v2634 = vadd.f32 %v2411, %v2633
      %v2635 = vpop.f32.mrf.mxu0
      %v2636 = vadd.f32 %v2413, %v2635
      %2637 = vmatmul.bf16.gmra.mxu0 %v2560
      %v2638 = vpop.f32.mrf.mxu0
      %v2639 = vadd.f32 %v2416, %v2638
      %v2640 = vpop.f32.mrf.mxu0
      %v2641 = vadd.f32 %v2418, %v2640
      %2642 = vmatmul.bf16.gmra.mxu0 %v2563
      %v2643 = vpop.f32.mrf.mxu0
      %v2644 = vadd.f32 %v2421, %v2643
      %v2645 = vpop.f32.mrf.mxu0
      %v2646 = vadd.f32 %v2423, %v2645
      %2647 = vmatmul.bf16.gmra.mxu0 %v2566
      %v2648 = vpop.f32.mrf.mxu0
      %v2649 = vadd.f32 %v2426, %v2648
      %v2650 = vpop.f32.mrf.mxu0
      %v2651 = vadd.f32 %v2428, %v2650
      %2652 = vmatmul.bf16.gmra.mxu0 %v2569
      %v2653 = vpop.f32.mrf.mxu0
      %v2654 = vadd.f32 %v2431, %v2653
      %v2655 = vpop.f32.mrf.mxu0
      %v2656 = vadd.f32 %v2433, %v2655
      %2657 = vmatmul.bf16.gmra.mxu0 %v2572
      %v2658 = vpop.f32.mrf.mxu0
      %v2659 = vadd.f32 %v2436, %v2658
      %v2660 = vpop.f32.mrf.mxu0
      %v2661 = vadd.f32 %v2438, %v2660
      %2662 = vdwg.mxu0
      %v2663 = vld [vmem:[#allocation2] sm:$0xe]
      %v2664 = vld [vmem:[#allocation2 + $0xc] sm:$0xe]
      %v2665 = vld [vmem:[#allocation2 + $0x18] sm:$0xe]
      %v2666 = vld [vmem:[#allocation2 + $0x24] sm:$0xe]
      %v2667 = vld [vmem:[#allocation2 + $0x30] sm:$0xe]
      %v2668 = vld [vmem:[#allocation2 + $0x3c] sm:$0xe]
      %v2669 = vld [vmem:[#allocation2 + $0x48] sm:$0xe]
      %v2670 = vld [vmem:[#allocation2 + $0x54] sm:$0xe]
      %v2671 = vld [vmem:[#allocation2 + $0x60] sm:$0xe]
      %v2672 = vld [vmem:[#allocation2 + $0x6c] sm:$0xe]
      %v2673 = vld [vmem:[#allocation2 + $0x78] sm:$0xe]
      %v2674 = vld [vmem:[#allocation2 + $0x84] sm:$0xe]
      %v2675 = vld [vmem:[#allocation2 + $0x90] sm:$0xe]
      %v2676 = vld [vmem:[#allocation2 + $0x9c] sm:$0xe]
      %v2677 = vld [vmem:[#allocation2 + $0xa8] sm:$0xe]
      %v2678 = vld [vmem:[#allocation2 + $0xb4] sm:$0xe]
      %vm2711 = vcmask 1042432
      %vm2712 = vcmask 1046532
      %vm2713 = vmor %vm2711, %vm2712
      %v2714 = vrot.slane %v2663, 5
      %v2715 = vrot.slane %v2714, 4
      %v2716 = vrot.slane %v1810, 5
      %v2717 = vsel %vm2713, %v2715, %v2716
      %v2718 = vrot.slane %v2716, 4
      %v2719 = vrot.slane %v1843, 5
      %v2720 = vsel %vm2713, %v2718, %v2719
      %v2721 = vrot.slane %v2664, 5
      %v2722 = vrot.slane %v2721, 4
      %v2723 = vrot.slane %v1812, 5
      %v2724 = vsel %vm2713, %v2722, %v2723
      %v2725 = vrot.slane %v2723, 4
      %v2726 = vrot.slane %v1844, 5
      %v2727 = vsel %vm2713, %v2725, %v2726
      %v2728 = vrot.slane %v2665, 5
      %v2729 = vrot.slane %v2728, 4
      %v2730 = vrot.slane %v1814, 5
      %v2731 = vsel %vm2713, %v2729, %v2730
      %v2732 = vrot.slane %v2730, 4
      %v2733 = vrot.slane %v1845, 5
      %v2734 = vsel %vm2713, %v2732, %v2733
      %v2735 = vrot.slane %v2666, 5
      %v2736 = vrot.slane %v2735, 4
      %v2737 = vrot.slane %v1816, 5
      %v2738 = vsel %vm2713, %v2736, %v2737
      %v2739 = vrot.slane %v2737, 4
      %v2740 = vrot.slane %v1846, 5
      %v2741 = vsel %vm2713, %v2739, %v2740
      %v2742 = vrot.slane %v2667, 5
      %v2743 = vrot.slane %v2742, 4
      %v2744 = vrot.slane %v1818, 5
      %v2745 = vsel %vm2713, %v2743, %v2744
      %v2746 = vrot.slane %v2744, 4
      %v2747 = vrot.slane %v1847, 5
      %v2748 = vsel %vm2713, %v2746, %v2747
      %v2749 = vrot.slane %v2668, 5
      %v2750 = vrot.slane %v2749, 4
      %v2751 = vrot.slane %v1820, 5
      %v2752 = vsel %vm2713, %v2750, %v2751
      %v2753 = vrot.slane %v2751, 4
      %v2754 = vrot.slane %v1848, 5
      %v2755 = vsel %vm2713, %v2753, %v2754
      %v2756 = vrot.slane %v2669, 5
      %v2757 = vrot.slane %v2756, 4
      %v2758 = vrot.slane %v1822, 5
      %v2759 = vsel %vm2713, %v2757, %v2758
      %v2760 = vrot.slane %v2758, 4
      %v2761 = vrot.slane %v1849, 5
      %v2762 = vsel %vm2713, %v2760, %v2761
      %v2763 = vrot.slane %v2670, 5
      %v2764 = vrot.slane %v2763, 4
      %v2765 = vrot.slane %v1824, 5
      %v2766 = vsel %vm2713, %v2764, %v2765
      %v2767 = vrot.slane %v2765, 4
      %v2768 = vrot.slane %v1850, 5
      %v2769 = vsel %vm2713, %v2767, %v2768
      %v2770 = vrot.slane %v2671, 5
      %v2771 = vrot.slane %v2770, 4
      %v2772 = vrot.slane %v1826, 5
      %v2773 = vsel %vm2713, %v2771, %v2772
      %v2774 = vrot.slane %v2772, 4
      %v2775 = vrot.slane %v1851, 5
      %v2776 = vsel %vm2713, %v2774, %v2775
      %v2777 = vrot.slane %v2672, 5
      %v2778 = vrot.slane %v2777, 4
      %v2779 = vrot.slane %v1828, 5
      %v2780 = vsel %vm2713, %v2778, %v2779
      %v2781 = vrot.slane %v2779, 4
      %v2782 = vrot.slane %v1852, 5
      %v2783 = vsel %vm2713, %v2781, %v2782
      %v2784 = vrot.slane %v2673, 5
      %v2785 = vrot.slane %v2784, 4
      %v2786 = vrot.slane %v1830, 5
      %v2787 = vsel %vm2713, %v2785, %v2786
      %v2788 = vrot.slane %v2786, 4
      %v2789 = vrot.slane %v1853, 5
      %v2790 = vsel %vm2713, %v2788, %v2789
      %v2791 = vrot.slane %v2674, 5
      %v2792 = vrot.slane %v2791, 4
      %v2793 = vrot.slane %v1832, 5
      %v2794 = vsel %vm2713, %v2792, %v2793
      %v2795 = vrot.slane %v2793, 4
      %v2796 = vrot.slane %v1854, 5
      %v2797 = vsel %vm2713, %v2795, %v2796
      %v2798 = vrot.slane %v2675, 5
      %v2799 = vrot.slane %v2798, 4
      %v2800 = vrot.slane %v1834, 5
      %v2801 = vsel %vm2713, %v2799, %v2800
      %v2802 = vrot.slane %v2800, 4
      %v2803 = vrot.slane %v1855, 5
      %v2804 = vsel %vm2713, %v2802, %v2803
      %v2805 = vrot.slane %v2676, 5
      %v2806 = vrot.slane %v2805, 4
      %v2807 = vrot.slane %v1836, 5
      %v2808 = vsel %vm2713, %v2806, %v2807
      %v2809 = vrot.slane %v2807, 4
      %v2810 = vrot.slane %v1856, 5
      %v2811 = vsel %vm2713, %v2809, %v2810
      %v2812 = vrot.slane %v2677, 5
      %v2813 = vrot.slane %v2812, 4
      %v2814 = vrot.slane %v1838, 5
      %v2815 = vsel %vm2713, %v2813, %v2814
      %v2816 = vrot.slane %v2814, 4
      %v2817 = vrot.slane %v1857, 5
      %v2818 = vsel %vm2713, %v2816, %v2817
      %v2819 = vrot.slane %v2678, 5
      %v2820 = vrot.slane %v2819, 4
      %v2821 = vrot.slane %v1840, 5
      %v2822 = vsel %vm2713, %v2820, %v2821
      %v2823 = vrot.slane %v2821, 4
      %v2824 = vrot.slane %v1858, 5
      %v2825 = vsel %vm2713, %v2823, %v2824
      %s2826 = scalar_lea.vmem %s5, 16
      %v2827 = vld [vmem:[%s2826] sm:$0xf]
      %v2828 = vld [vmem:[%s2826 + $0x4] sm:$0xf]
      %v2829 = vunpack.c.l.b16 %v2717
      %v2830 = vunpack.c.l.b16 %v2720
      %v2831 = vunpack.c.l.b16 %v2724
      %v2832 = vunpack.c.l.b16 %v2727
      %v2833 = vunpack.c.l.b16 %v2731
      %v2834 = vunpack.c.l.b16 %v2734
      %v2835 = vunpack.c.l.b16 %v2738
      %v2836 = vunpack.c.l.b16 %v2741
      %v2837 = vunpack.c.l.b16 %v2745
      %v2838 = vunpack.c.l.b16 %v2748
      %v2839 = vunpack.c.l.b16 %v2752
      %v2840 = vunpack.c.l.b16 %v2755
      %v2841 = vunpack.c.l.b16 %v2759
      %v2842 = vunpack.c.l.b16 %v2762
      %v2843 = vunpack.c.l.b16 %v2766
      %v2844 = vunpack.c.l.b16 %v2769
      %v2845 = vunpack.c.l.b16 %v2773
      %v2846 = vunpack.c.l.b16 %v2776
      %v2847 = vunpack.c.l.b16 %v2780
      %v2848 = vunpack.c.l.b16 %v2783
      %v2849 = vunpack.c.l.b16 %v2787
      %v2850 = vunpack.c.l.b16 %v2790
      %v2851 = vunpack.c.l.b16 %v2794
      %v2852 = vunpack.c.l.b16 %v2797
      %v2853 = vunpack.c.l.b16 %v2801
      %v2854 = vunpack.c.l.b16 %v2804
      %v2855 = vunpack.c.l.b16 %v2808
      %v2856 = vunpack.c.l.b16 %v2811
      %v2857 = vunpack.c.l.b16 %v2815
      %v2858 = vunpack.c.l.b16 %v2818
      %v2859 = vunpack.c.l.b16 %v2822
      %v2860 = vunpack.c.l.b16 %v2825
      %v2861 = vpack.c.b16 %v2830, %v2829
      %v2862 = vpack.c.b16 %v2832, %v2831
      %v2863 = vpack.c.b16 %v2834, %v2833
      %v2864 = vpack.c.b16 %v2836, %v2835
      %v2865 = vpack.c.b16 %v2838, %v2837
      %v2866 = vpack.c.b16 %v2840, %v2839
      %v2867 = vpack.c.b16 %v2842, %v2841
      %v2868 = vpack.c.b16 %v2844, %v2843
      %v2869 = vpack.c.b16 %v2846, %v2845
      %v2870 = vpack.c.b16 %v2848, %v2847
      %v2871 = vpack.c.b16 %v2850, %v2849
      %v2872 = vpack.c.b16 %v2852, %v2851
      %v2873 = vpack.c.b16 %v2854, %v2853
      %v2874 = vpack.c.b16 %v2856, %v2855
      %v2875 = vpack.c.b16 %v2858, %v2857
      %v2876 = vpack.c.b16 %v2860, %v2859
      %v2879 = vunpack.c.l.b16 %v2827
      %v2880 = vunpack.c.l.b16 %v2828
      %v2881 = vpack.c.b16 %v2880, %v2879
      %v2884 = vsel %vm458, %v2861, 0
      %v2887 = vsel %vm458, %v2862, 0
      %v2890 = vsel %vm458, %v2863, 0
      %v2893 = vsel %vm458, %v2864, 0
      %v2896 = vsel %vm458, %v2865, 0
      %v2899 = vsel %vm458, %v2866, 0
      %v2902 = vsel %vm458, %v2867, 0
      %v2905 = vsel %vm458, %v2868, 0
      %v2908 = vsel %vm458, %v2869, 0
      %v2911 = vsel %vm458, %v2870, 0
      %v2914 = vsel %vm458, %v2871, 0
      %v2917 = vsel %vm458, %v2872, 0
      %v2920 = vsel %vm458, %v2873, 0
      %v2923 = vsel %vm458, %v2874, 0
      %v2926 = vsel %vm458, %v2875, 0
      %v2929 = vsel %vm458, %v2876, 0
      %2931 = vmatpush.bf16.msra.mxu0 0
      %2932 = vmatpush.bf16.msra.mxu0 0
      %2933 = vmatpush.bf16.msra.mxu0 0
      %2934 = vmatpush.bf16.msra.mxu0 0
      %2935 = vmatpush.bf16.msra.mxu0 0
      %2936 = vmatpush.bf16.msra.mxu0 0
      %2937 = vmatpush.bf16.msra.mxu0 0
      %2938 = vmatpush.bf16.msra.mxu0 %v2881
      %2939 = vmatmul.bf16.gmra.mxu0 %v2884
      %v2940 = vpop.f32.mrf.mxu0
      %v2941 = vadd.f32 0.0, %v2940
      %v2942 = vpop.f32.mrf.mxu0
      %v2943 = vadd.f32 0.0, %v2942
      %2944 = vmatmul.bf16.gmra.mxu0 %v2887
      %v2945 = vpop.f32.mrf.mxu0
      %v2946 = vadd.f32 0.0, %v2945
      %v2947 = vpop.f32.mrf.mxu0
      %v2948 = vadd.f32 0.0, %v2947
      %2949 = vmatmul.bf16.gmra.mxu0 %v2890
      %v2950 = vpop.f32.mrf.mxu0
      %v2951 = vadd.f32 0.0, %v2950
      %v2952 = vpop.f32.mrf.mxu0
      %v2953 = vadd.f32 0.0, %v2952
      %2954 = vmatmul.bf16.gmra.mxu0 %v2893
      %v2955 = vpop.f32.mrf.mxu0
      %v2956 = vadd.f32 0.0, %v2955
      %v2957 = vpop.f32.mrf.mxu0
      %v2958 = vadd.f32 0.0, %v2957
      %2959 = vmatmul.bf16.gmra.mxu0 %v2896
      %v2960 = vpop.f32.mrf.mxu0
      %v2961 = vadd.f32 0.0, %v2960
      %v2962 = vpop.f32.mrf.mxu0
      %v2963 = vadd.f32 0.0, %v2962
      %2964 = vmatmul.bf16.gmra.mxu0 %v2899
      %v2965 = vpop.f32.mrf.mxu0
      %v2966 = vadd.f32 0.0, %v2965
      %v2967 = vpop.f32.mrf.mxu0
      %v2968 = vadd.f32 0.0, %v2967
      %2969 = vmatmul.bf16.gmra.mxu0 %v2902
      %v2970 = vpop.f32.mrf.mxu0
      %v2971 = vadd.f32 0.0, %v2970
      %v2972 = vpop.f32.mrf.mxu0
      %v2973 = vadd.f32 0.0, %v2972
      %2974 = vmatmul.bf16.gmra.mxu0 %v2905
      %v2975 = vpop.f32.mrf.mxu0
      %v2976 = vadd.f32 0.0, %v2975
      %v2977 = vpop.f32.mrf.mxu0
      %v2978 = vadd.f32 0.0, %v2977
      %2979 = vmatmul.bf16.gmra.mxu0 %v2908
      %v2980 = vpop.f32.mrf.mxu0
      %v2981 = vadd.f32 0.0, %v2980
      %v2982 = vpop.f32.mrf.mxu0
      %v2983 = vadd.f32 0.0, %v2982
      %2984 = vmatmul.bf16.gmra.mxu0 %v2911
      %v2985 = vpop.f32.mrf.mxu0
      %v2986 = vadd.f32 0.0, %v2985
      %v2987 = vpop.f32.mrf.mxu0
      %v2988 = vadd.f32 0.0, %v2987
      %2989 = vmatmul.bf16.gmra.mxu0 %v2914
      %v2990 = vpop.f32.mrf.mxu0
      %v2991 = vadd.f32 0.0, %v2990
      %v2992 = vpop.f32.mrf.mxu0
      %v2993 = vadd.f32 0.0, %v2992
      %2994 = vmatmul.bf16.gmra.mxu0 %v2917
      %v2995 = vpop.f32.mrf.mxu0
      %v2996 = vadd.f32 0.0, %v2995
      %v2997 = vpop.f32.mrf.mxu0
      %v2998 = vadd.f32 0.0, %v2997
      %2999 = vmatmul.bf16.gmra.mxu0 %v2920
      %v3000 = vpop.f32.mrf.mxu0
      %v3001 = vadd.f32 0.0, %v3000
      %v3002 = vpop.f32.mrf.mxu0
      %v3003 = vadd.f32 0.0, %v3002
      %3004 = vmatmul.bf16.gmra.mxu0 %v2923
      %v3005 = vpop.f32.mrf.mxu0
      %v3006 = vadd.f32 0.0, %v3005
      %v3007 = vpop.f32.mrf.mxu0
      %v3008 = vadd.f32 0.0, %v3007
      %3009 = vmatmul.bf16.gmra.mxu0 %v2926
      %v3010 = vpop.f32.mrf.mxu0
      %v3011 = vadd.f32 0.0, %v3010
      %v3012 = vpop.f32.mrf.mxu0
      %v3013 = vadd.f32 0.0, %v3012
      %3014 = vmatmul.bf16.gmra.mxu0 %v2929
      %v3015 = vpop.f32.mrf.mxu0
      %v3016 = vadd.f32 0.0, %v3015
      %v3017 = vpop.f32.mrf.mxu0
      %v3018 = vadd.f32 0.0, %v3017
      %3019 = vdwg.mxu0
      %v3020 = vadd.f32 %v2584, %v2941
      %v3021 = vadd.f32 %v2586, %v2943
      %v3022 = vadd.f32 %v2589, %v2946
      %v3023 = vadd.f32 %v2591, %v2948
      %v3024 = vadd.f32 %v2594, %v2951
      %v3025 = vadd.f32 %v2596, %v2953
      %v3026 = vadd.f32 %v2599, %v2956
      %v3027 = vadd.f32 %v2601, %v2958
      %v3028 = vadd.f32 %v2604, %v2961
      %v3029 = vadd.f32 %v2606, %v2963
      %v3030 = vadd.f32 %v2609, %v2966
      %v3031 = vadd.f32 %v2611, %v2968
      %v3032 = vadd.f32 %v2614, %v2971
      %v3033 = vadd.f32 %v2616, %v2973
      %v3034 = vadd.f32 %v2619, %v2976
      %v3035 = vadd.f32 %v2621, %v2978
      %v3036 = vadd.f32 %v2624, %v2981
      %v3037 = vadd.f32 %v2626, %v2983
      %v3038 = vadd.f32 %v2629, %v2986
      %v3039 = vadd.f32 %v2631, %v2988
      %v3040 = vadd.f32 %v2634, %v2991
      %v3041 = vadd.f32 %v2636, %v2993
      %v3042 = vadd.f32 %v2639, %v2996
      %v3043 = vadd.f32 %v2641, %v2998
      %v3044 = vadd.f32 %v2644, %v3001
      %v3045 = vadd.f32 %v2646, %v3003
      %v3046 = vadd.f32 %v2649, %v3006
      %v3047 = vadd.f32 %v2651, %v3008
      %v3048 = vadd.f32 %v2654, %v3011
      %v3049 = vadd.f32 %v2656, %v3013
      %v3050 = vadd.f32 %v2659, %v3016
      %v3051 = vadd.f32 %v2661, %v3018
      %v3052 = vld [vmem:[%s1694] sm:$0xf]
      %v3053 = vld [vmem:[%s1694 + $0x4] sm:$0xf]
      %v3054 = vld [vmem:[%s1694 + $0xc] sm:$0xf]
      %v3055 = vld [vmem:[%s1694 + $0x10] sm:$0xf]
      %v3056 = vld [vmem:[%s1694 + $0x18] sm:$0xf]
      %v3057 = vld [vmem:[%s1694 + $0x1c] sm:$0xf]
      %v3058 = vld [vmem:[%s1694 + $0x24] sm:$0xf]
      %v3059 = vld [vmem:[%s1694 + $0x28] sm:$0xf]
      %v3060 = vld [vmem:[%s1694 + $0x30] sm:$0xf]
      %v3061 = vld [vmem:[%s1694 + $0x34] sm:$0xf]
      %v3062 = vld [vmem:[%s1694 + $0x3c] sm:$0xf]
      %v3063 = vld [vmem:[%s1694 + $0x40] sm:$0xf]
      %v3064 = vld [vmem:[%s1694 + $0x48] sm:$0xf]
      %v3065 = vld [vmem:[%s1694 + $0x4c] sm:$0xf]
      %v3066 = vld [vmem:[%s1694 + $0x54] sm:$0xf]
      %v3067 = vld [vmem:[%s1694 + $0x58] sm:$0xf]
      %v3068 = vld [vmem:[%s1694 + $0x60] sm:$0xf]
      %v3069 = vld [vmem:[%s1694 + $0x64] sm:$0xf]
      %v3070 = vld [vmem:[%s1694 + $0x6c] sm:$0xf]
      %v3071 = vld [vmem:[%s1694 + $0x70] sm:$0xf]
      %v3072 = vld [vmem:[%s1694 + $0x78] sm:$0xf]
      %v3073 = vld [vmem:[%s1694 + $0x7c] sm:$0xf]
      %v3074 = vld [vmem:[%s1694 + $0x84] sm:$0xf]
      %v3075 = vld [vmem:[%s1694 + $0x88] sm:$0xf]
      %v3076 = vld [vmem:[%s1694 + $0x90] sm:$0xf]
      %v3077 = vld [vmem:[%s1694 + $0x94] sm:$0xf]
      %v3078 = vld [vmem:[%s1694 + $0x9c] sm:$0xf]
      %v3079 = vld [vmem:[%s1694 + $0xa0] sm:$0xf]
      %v3080 = vld [vmem:[%s1694 + $0xa8] sm:$0xf]
      %v3081 = vld [vmem:[%s1694 + $0xac] sm:$0xf]
      %v3082 = vld [vmem:[%s1694 + $0xb4] sm:$0xf]
      %v3083 = vld [vmem:[%s1694 + $0xb8] sm:$0xf]
      %s3084 = scalar_lea.vmem %s5, 24
      %v3085 = vld [vmem:[%s3084] sm:$0xf]
      %v3086 = vld [vmem:[%s3084 + $0x4] sm:$0xf]
      %v3119 = vunpack.c.l.b16 %v3052
      %v3120 = vunpack.c.l.b16 %v3053
      %v3121 = vunpack.c.l.b16 %v3054
      %v3122 = vunpack.c.l.b16 %v3055
      %v3123 = vunpack.c.l.b16 %v3056
      %v3124 = vunpack.c.l.b16 %v3057
      %v3125 = vunpack.c.l.b16 %v3058
      %v3126 = vunpack.c.l.b16 %v3059
      %v3127 = vunpack.c.l.b16 %v3060
      %v3128 = vunpack.c.l.b16 %v3061
      %v3129 = vunpack.c.l.b16 %v3062
      %v3130 = vunpack.c.l.b16 %v3063
      %v3131 = vunpack.c.l.b16 %v3064
      %v3132 = vunpack.c.l.b16 %v3065
      %v3133 = vunpack.c.l.b16 %v3066
      %v3134 = vunpack.c.l.b16 %v3067
      %v3135 = vunpack.c.l.b16 %v3068
      %v3136 = vunpack.c.l.b16 %v3069
      %v3137 = vunpack.c.l.b16 %v3070
      %v3138 = vunpack.c.l.b16 %v3071
      %v3139 = vunpack.c.l.b16 %v3072
      %v3140 = vunpack.c.l.b16 %v3073
      %v3141 = vunpack.c.l.b16 %v3074
      %v3142 = vunpack.c.l.b16 %v3075
      %v3143 = vunpack.c.l.b16 %v3076
      %v3144 = vunpack.c.l.b16 %v3077
      %v3145 = vunpack.c.l.b16 %v3078
      %v3146 = vunpack.c.l.b16 %v3079
      %v3147 = vunpack.c.l.b16 %v3080
      %v3148 = vunpack.c.l.b16 %v3081
      %v3149 = vunpack.c.l.b16 %v3082
      %v3150 = vunpack.c.l.b16 %v3083
      %v3151 = vpack.c.b16 %v3120, %v3119
      %v3152 = vpack.c.b16 %v3122, %v3121
      %v3153 = vpack.c.b16 %v3124, %v3123
      %v3154 = vpack.c.b16 %v3126, %v3125
      %v3155 = vpack.c.b16 %v3128, %v3127
      %v3156 = vpack.c.b16 %v3130, %v3129
      %v3157 = vpack.c.b16 %v3132, %v3131
      %v3158 = vpack.c.b16 %v3134, %v3133
      %v3159 = vpack.c.b16 %v3136, %v3135
      %v3160 = vpack.c.b16 %v3138, %v3137
      %v3161 = vpack.c.b16 %v3140, %v3139
      %v3162 = vpack.c.b16 %v3142, %v3141
      %v3163 = vpack.c.b16 %v3144, %v3143
      %v3164 = vpack.c.b16 %v3146, %v3145
      %v3165 = vpack.c.b16 %v3148, %v3147
      %v3166 = vpack.c.b16 %v3150, %v3149
      %v3169 = vunpack.c.l.b16 %v3085
      %v3170 = vunpack.c.l.b16 %v3086
      %v3171 = vpack.c.b16 %v3170, %v3169
      %v3174 = vsel %vm458, %v3151, 0
      %v3177 = vsel %vm458, %v3152, 0
      %v3180 = vsel %vm458, %v3153, 0
      %v3183 = vsel %vm458, %v3154, 0
      %v3186 = vsel %vm458, %v3155, 0
      %v3189 = vsel %vm458, %v3156, 0
      %v3192 = vsel %vm458, %v3157, 0
      %v3195 = vsel %vm458, %v3158, 0
      %v3198 = vsel %vm458, %v3159, 0
      %v3201 = vsel %vm458, %v3160, 0
      %v3204 = vsel %vm458, %v3161, 0
      %v3207 = vsel %vm458, %v3162, 0
      %v3210 = vsel %vm458, %v3163, 0
      %v3213 = vsel %vm458, %v3164, 0
      %v3216 = vsel %vm458, %v3165, 0
      %v3219 = vsel %vm458, %v3166, 0
      %3221 = vmatpush.bf16.msra.mxu0 0
      %3222 = vmatpush.bf16.msra.mxu0 0
      %3223 = vmatpush.bf16.msra.mxu0 0
      %3224 = vmatpush.bf16.msra.mxu0 0
      %3225 = vmatpush.bf16.msra.mxu0 0
      %3226 = vmatpush.bf16.msra.mxu0 0
      %3227 = vmatpush.bf16.msra.mxu0 0
      %3228 = vmatpush.bf16.msra.mxu0 %v3171
      %3229 = vmatmul.bf16.gmra.mxu0 %v3174
      %v3230 = vpop.f32.mrf.mxu0
      %v3231 = vadd.f32 0.0, %v3230
      %v3232 = vpop.f32.mrf.mxu0
      %v3233 = vadd.f32 0.0, %v3232
      %3234 = vmatmul.bf16.gmra.mxu0 %v3177
      %v3235 = vpop.f32.mrf.mxu0
      %v3236 = vadd.f32 0.0, %v3235
      %v3237 = vpop.f32.mrf.mxu0
      %v3238 = vadd.f32 0.0, %v3237
      %3239 = vmatmul.bf16.gmra.mxu0 %v3180
      %v3240 = vpop.f32.mrf.mxu0
      %v3241 = vadd.f32 0.0, %v3240
      %v3242 = vpop.f32.mrf.mxu0
      %v3243 = vadd.f32 0.0, %v3242
      %3244 = vmatmul.bf16.gmra.mxu0 %v3183
      %v3245 = vpop.f32.mrf.mxu0
      %v3246 = vadd.f32 0.0, %v3245
      %v3247 = vpop.f32.mrf.mxu0
      %v3248 = vadd.f32 0.0, %v3247
      %3249 = vmatmul.bf16.gmra.mxu0 %v3186
      %v3250 = vpop.f32.mrf.mxu0
      %v3251 = vadd.f32 0.0, %v3250
      %v3252 = vpop.f32.mrf.mxu0
      %v3253 = vadd.f32 0.0, %v3252
      %3254 = vmatmul.bf16.gmra.mxu0 %v3189
      %v3255 = vpop.f32.mrf.mxu0
      %v3256 = vadd.f32 0.0, %v3255
      %v3257 = vpop.f32.mrf.mxu0
      %v3258 = vadd.f32 0.0, %v3257
      %3259 = vmatmul.bf16.gmra.mxu0 %v3192
      %v3260 = vpop.f32.mrf.mxu0
      %v3261 = vadd.f32 0.0, %v3260
      %v3262 = vpop.f32.mrf.mxu0
      %v3263 = vadd.f32 0.0, %v3262
      %3264 = vmatmul.bf16.gmra.mxu0 %v3195
      %v3265 = vpop.f32.mrf.mxu0
      %v3266 = vadd.f32 0.0, %v3265
      %v3267 = vpop.f32.mrf.mxu0
      %v3268 = vadd.f32 0.0, %v3267
      %3269 = vmatmul.bf16.gmra.mxu0 %v3198
      %v3270 = vpop.f32.mrf.mxu0
      %v3271 = vadd.f32 0.0, %v3270
      %v3272 = vpop.f32.mrf.mxu0
      %v3273 = vadd.f32 0.0, %v3272
      %3274 = vmatmul.bf16.gmra.mxu0 %v3201
      %v3275 = vpop.f32.mrf.mxu0
      %v3276 = vadd.f32 0.0, %v3275
      %v3277 = vpop.f32.mrf.mxu0
      %v3278 = vadd.f32 0.0, %v3277
      %3279 = vmatmul.bf16.gmra.mxu0 %v3204
      %v3280 = vpop.f32.mrf.mxu0
      %v3281 = vadd.f32 0.0, %v3280
      %v3282 = vpop.f32.mrf.mxu0
      %v3283 = vadd.f32 0.0, %v3282
      %3284 = vmatmul.bf16.gmra.mxu0 %v3207
      %v3285 = vpop.f32.mrf.mxu0
      %v3286 = vadd.f32 0.0, %v3285
      %v3287 = vpop.f32.mrf.mxu0
      %v3288 = vadd.f32 0.0, %v3287
      %3289 = vmatmul.bf16.gmra.mxu0 %v3210
      %v3290 = vpop.f32.mrf.mxu0
      %v3291 = vadd.f32 0.0, %v3290
      %v3292 = vpop.f32.mrf.mxu0
      %v3293 = vadd.f32 0.0, %v3292
      %3294 = vmatmul.bf16.gmra.mxu0 %v3213
      %v3295 = vpop.f32.mrf.mxu0
      %v3296 = vadd.f32 0.0, %v3295
      %v3297 = vpop.f32.mrf.mxu0
      %v3298 = vadd.f32 0.0, %v3297
      %3299 = vmatmul.bf16.gmra.mxu0 %v3216
      %v3300 = vpop.f32.mrf.mxu0
      %v3301 = vadd.f32 0.0, %v3300
      %v3302 = vpop.f32.mrf.mxu0
      %v3303 = vadd.f32 0.0, %v3302
      %3304 = vmatmul.bf16.gmra.mxu0 %v3219
      %v3305 = vpop.f32.mrf.mxu0
      %v3306 = vadd.f32 0.0, %v3305
      %v3307 = vpop.f32.mrf.mxu0
      %v3308 = vadd.f32 0.0, %v3307
      %3309 = vdwg.mxu0
      %v3310 = vadd.f32 %v3020, %v3231
      %v3311 = vadd.f32 %v3021, %v3233
      %v3312 = vadd.f32 %v3022, %v3236
      %v3313 = vadd.f32 %v3023, %v3238
      %v3314 = vadd.f32 %v3024, %v3241
      %v3315 = vadd.f32 %v3025, %v3243
      %v3316 = vadd.f32 %v3026, %v3246
      %v3317 = vadd.f32 %v3027, %v3248
      %v3318 = vadd.f32 %v3028, %v3251
      %v3319 = vadd.f32 %v3029, %v3253
      %v3320 = vadd.f32 %v3030, %v3256
      %v3321 = vadd.f32 %v3031, %v3258
      %v3322 = vadd.f32 %v3032, %v3261
      %v3323 = vadd.f32 %v3033, %v3263
      %v3324 = vadd.f32 %v3034, %v3266
      %v3325 = vadd.f32 %v3035, %v3268
      %v3326 = vadd.f32 %v3036, %v3271
      %v3327 = vadd.f32 %v3037, %v3273
      %v3328 = vadd.f32 %v3038, %v3276
      %v3329 = vadd.f32 %v3039, %v3278
      %v3330 = vadd.f32 %v3040, %v3281
      %v3331 = vadd.f32 %v3041, %v3283
      %v3332 = vadd.f32 %v3042, %v3286
      %v3333 = vadd.f32 %v3043, %v3288
      %v3334 = vadd.f32 %v3044, %v3291
      %v3335 = vadd.f32 %v3045, %v3293
      %v3336 = vadd.f32 %v3046, %v3296
      %v3337 = vadd.f32 %v3047, %v3298
      %v3338 = vadd.f32 %v3048, %v3301
      %v3339 = vadd.f32 %v3049, %v3303
      %v3340 = vadd.f32 %v3050, %v3306
      %v3341 = vadd.f32 %v3051, %v3308
      %v3342 = vld [vmem:[%s1694] sm:$0xf]
      %v3343 = vld [vmem:[%s1694 + $0x4] sm:$0xf]
      %v3344 = vld [vmem:[%s1694 + $0x8] sm:$0x1]
      %v3345 = vld [vmem:[%s1694 + $0xc] sm:$0xf]
      %v3346 = vld [vmem:[%s1694 + $0x10] sm:$0xf]
      %v3347 = vld [vmem:[%s1694 + $0x14] sm:$0x1]
      %v3348 = vld [vmem:[%s1694 + $0x18] sm:$0xf]
      %v3349 = vld [vmem:[%s1694 + $0x1c] sm:$0xf]
      %v3350 = vld [vmem:[%s1694 + $0x20] sm:$0x1]
      %v3351 = vld [vmem:[%s1694 + $0x24] sm:$0xf]
      %v3352 = vld [vmem:[%s1694 + $0x28] sm:$0xf]
      %v3353 = vld [vmem:[%s1694 + $0x2c] sm:$0x1]
      %v3354 = vld [vmem:[%s1694 + $0x30] sm:$0xf]
      %v3355 = vld [vmem:[%s1694 + $0x34] sm:$0xf]
      %v3356 = vld [vmem:[%s1694 + $0x38] sm:$0x1]
      %v3357 = vld [vmem:[%s1694 + $0x3c] sm:$0xf]
      %v3358 = vld [vmem:[%s1694 + $0x40] sm:$0xf]
      %v3359 = vld [vmem:[%s1694 + $0x44] sm:$0x1]
      %v3360 = vld [vmem:[%s1694 + $0x48] sm:$0xf]
      %v3361 = vld [vmem:[%s1694 + $0x4c] sm:$0xf]
      %v3362 = vld [vmem:[%s1694 + $0x50] sm:$0x1]
      %v3363 = vld [vmem:[%s1694 + $0x54] sm:$0xf]
      %v3364 = vld [vmem:[%s1694 + $0x58] sm:$0xf]
      %v3365 = vld [vmem:[%s1694 + $0x5c] sm:$0x1]
      %v3366 = vld [vmem:[%s1694 + $0x60] sm:$0xf]
      %v3367 = vld [vmem:[%s1694 + $0x64] sm:$0xf]
      %v3368 = vld [vmem:[%s1694 + $0x68] sm:$0x1]
      %v3369 = vld [vmem:[%s1694 + $0x6c] sm:$0xf]
      %v3370 = vld [vmem:[%s1694 + $0x70] sm:$0xf]
      %v3371 = vld [vmem:[%s1694 + $0x74] sm:$0x1]
      %v3372 = vld [vmem:[%s1694 + $0x78] sm:$0xf]
      %v3373 = vld [vmem:[%s1694 + $0x7c] sm:$0xf]
      %v3374 = vld [vmem:[%s1694 + $0x80] sm:$0x1]
      %v3375 = vld [vmem:[%s1694 + $0x84] sm:$0xf]
      %v3376 = vld [vmem:[%s1694 + $0x88] sm:$0xf]
      %v3377 = vld [vmem:[%s1694 + $0x8c] sm:$0x1]
      %v3378 = vld [vmem:[%s1694 + $0x90] sm:$0xf]
      %v3379 = vld [vmem:[%s1694 + $0x94] sm:$0xf]
      %v3380 = vld [vmem:[%s1694 + $0x98] sm:$0x1]
      %v3381 = vld [vmem:[%s1694 + $0x9c] sm:$0xf]
      %v3382 = vld [vmem:[%s1694 + $0xa0] sm:$0xf]
      %v3383 = vld [vmem:[%s1694 + $0xa4] sm:$0x1]
      %v3384 = vld [vmem:[%s1694 + $0xa8] sm:$0xf]
      %v3385 = vld [vmem:[%s1694 + $0xac] sm:$0xf]
      %v3386 = vld [vmem:[%s1694 + $0xb0] sm:$0x1]
      %v3387 = vld [vmem:[%s1694 + $0xb4] sm:$0xf]
      %v3388 = vld [vmem:[%s1694 + $0xb8] sm:$0xf]
      %v3389 = vld [vmem:[%s1694 + $0xbc] sm:$0x1]
      %v3391 = vshrl.u32 %v3342, 16
      %v3393 = vrot.slane %v3391, 4
      %v3394 = vshll.u32 %v3342, 16
      %v3396 = vrot.slane %v3394, 5
      %v3397 = vor.u32 %v3393, %v3396
      %v3398 = vrot.slane %v3397, 4
      %v3400 = vshll.u32 %v3343, 16
      %v3402 = vrot.slane %v3400, 5
      %v3403 = vsel %vm1861, %v3398, %v3402
      %v3404 = vshrl.u32 %v3343, 16
      %v3406 = vrot.slane %v3404, 4
      %v3407 = vor.u32 %v3406, %v3402
      %v3408 = vrot.slane %v3407, 4
      %v3410 = vshll.u32 %v3344, 16
      %v3412 = vrot.slane %v3410, 5
      %v3413 = vsel %vm1861, %v3408, %v3412
      %v3415 = vshrl.u32 %v3345, 16
      %v3417 = vrot.slane %v3415, 4
      %v3418 = vshll.u32 %v3345, 16
      %v3420 = vrot.slane %v3418, 5
      %v3421 = vor.u32 %v3417, %v3420
      %v3422 = vrot.slane %v3421, 4
      %v3424 = vshll.u32 %v3346, 16
      %v3426 = vrot.slane %v3424, 5
      %v3427 = vsel %vm1861, %v3422, %v3426
      %v3428 = vshrl.u32 %v3346, 16
      %v3430 = vrot.slane %v3428, 4
      %v3431 = vor.u32 %v3430, %v3426
      %v3432 = vrot.slane %v3431, 4
      %v3434 = vshll.u32 %v3347, 16
      %v3436 = vrot.slane %v3434, 5
      %v3437 = vsel %vm1861, %v3432, %v3436
      %v3439 = vshrl.u32 %v3348, 16
      %v3441 = vrot.slane %v3439, 4
      %v3442 = vshll.u32 %v3348, 16
      %v3444 = vrot.slane %v3442, 5
      %v3445 = vor.u32 %v3441, %v3444
      %v3446 = vrot.slane %v3445, 4
      %v3448 = vshll.u32 %v3349, 16
      %v3450 = vrot.slane %v3448, 5
      %v3451 = vsel %vm1861, %v3446, %v3450
      %v3452 = vshrl.u32 %v3349, 16
      %v3454 = vrot.slane %v3452, 4
      %v3455 = vor.u32 %v3454, %v3450
      %v3456 = vrot.slane %v3455, 4
      %v3458 = vshll.u32 %v3350, 16
      %v3460 = vrot.slane %v3458, 5
      %v3461 = vsel %vm1861, %v3456, %v3460
      %v3463 = vshrl.u32 %v3351, 16
      %v3465 = vrot.slane %v3463, 4
      %v3466 = vshll.u32 %v3351, 16
      %v3468 = vrot.slane %v3466, 5
      %v3469 = vor.u32 %v3465, %v3468
      %v3470 = vrot.slane %v3469, 4
      %v3472 = vshll.u32 %v3352, 16
      %v3474 = vrot.slane %v3472, 5
      %v3475 = vsel %vm1861, %v3470, %v3474
      %v3476 = vshrl.u32 %v3352, 16
      %v3478 = vrot.slane %v3476, 4
      %v3479 = vor.u32 %v3478, %v3474
      %v3480 = vrot.slane %v3479, 4
      %v3482 = vshll.u32 %v3353, 16
      %v3484 = vrot.slane %v3482, 5
      %v3485 = vsel %vm1861, %v3480, %v3484
      %v3487 = vshrl.u32 %v3354, 16
      %v3489 = vrot.slane %v3487, 4
      %v3490 = vshll.u32 %v3354, 16
      %v3492 = vrot.slane %v3490, 5
      %v3493 = vor.u32 %v3489, %v3492
      %v3494 = vrot.slane %v3493, 4
      %v3496 = vshll.u32 %v3355, 16
      %v3498 = vrot.slane %v3496, 5
      %v3499 = vsel %vm1861, %v3494, %v3498
      %v3500 = vshrl.u32 %v3355, 16
      %v3502 = vrot.slane %v3500, 4
      %v3503 = vor.u32 %v3502, %v3498
      %v3504 = vrot.slane %v3503, 4
      %v3506 = vshll.u32 %v3356, 16
      %v3508 = vrot.slane %v3506, 5
      %v3509 = vsel %vm1861, %v3504, %v3508
      %v3511 = vshrl.u32 %v3357, 16
      %v3513 = vrot.slane %v3511, 4
      %v3514 = vshll.u32 %v3357, 16
      %v3516 = vrot.slane %v3514, 5
      %v3517 = vor.u32 %v3513, %v3516
      %v3518 = vrot.slane %v3517, 4
      %v3520 = vshll.u32 %v3358, 16
      %v3522 = vrot.slane %v3520, 5
      %v3523 = vsel %vm1861, %v3518, %v3522
      %v3524 = vshrl.u32 %v3358, 16
      %v3526 = vrot.slane %v3524, 4
      %v3527 = vor.u32 %v3526, %v3522
      %v3528 = vrot.slane %v3527, 4
      %v3530 = vshll.u32 %v3359, 16
      %v3532 = vrot.slane %v3530, 5
      %v3533 = vsel %vm1861, %v3528, %v3532
      %v3535 = vshrl.u32 %v3360, 16
      %v3537 = vrot.slane %v3535, 4
      %v3538 = vshll.u32 %v3360, 16
      %v3540 = vrot.slane %v3538, 5
      %v3541 = vor.u32 %v3537, %v3540
      %v3542 = vrot.slane %v3541, 4
      %v3544 = vshll.u32 %v3361, 16
      %v3546 = vrot.slane %v3544, 5
      %v3547 = vsel %vm1861, %v3542, %v3546
      %v3548 = vshrl.u32 %v3361, 16
      %v3550 = vrot.slane %v3548, 4
      %v3551 = vor.u32 %v3550, %v3546
      %v3552 = vrot.slane %v3551, 4
      %v3554 = vshll.u32 %v3362, 16
      %v3556 = vrot.slane %v3554, 5
      %v3557 = vsel %vm1861, %v3552, %v3556
      %v3559 = vshrl.u32 %v3363, 16
      %v3561 = vrot.slane %v3559, 4
      %v3562 = vshll.u32 %v3363, 16
      %v3564 = vrot.slane %v3562, 5
      %v3565 = vor.u32 %v3561, %v3564
      %v3566 = vrot.slane %v3565, 4
      %v3568 = vshll.u32 %v3364, 16
      %v3570 = vrot.slane %v3568, 5
      %v3571 = vsel %vm1861, %v3566, %v3570
      %v3572 = vshrl.u32 %v3364, 16
      %v3574 = vrot.slane %v3572, 4
      %v3575 = vor.u32 %v3574, %v3570
      %v3576 = vrot.slane %v3575, 4
      %v3578 = vshll.u32 %v3365, 16
      %v3580 = vrot.slane %v3578, 5
      %v3581 = vsel %vm1861, %v3576, %v3580
      %v3583 = vshrl.u32 %v3366, 16
      %v3585 = vrot.slane %v3583, 4
      %v3586 = vshll.u32 %v3366, 16
      %v3588 = vrot.slane %v3586, 5
      %v3589 = vor.u32 %v3585, %v3588
      %v3590 = vrot.slane %v3589, 4
      %v3592 = vshll.u32 %v3367, 16
      %v3594 = vrot.slane %v3592, 5
      %v3595 = vsel %vm1861, %v3590, %v3594
      %v3596 = vshrl.u32 %v3367, 16
      %v3598 = vrot.slane %v3596, 4
      %v3599 = vor.u32 %v3598, %v3594
      %v3600 = vrot.slane %v3599, 4
      %v3602 = vshll.u32 %v3368, 16
      %v3604 = vrot.slane %v3602, 5
      %v3605 = vsel %vm1861, %v3600, %v3604
      %v3607 = vshrl.u32 %v3369, 16
      %v3609 = vrot.slane %v3607, 4
      %v3610 = vshll.u32 %v3369, 16
      %v3612 = vrot.slane %v3610, 5
      %v3613 = vor.u32 %v3609, %v3612
      %v3614 = vrot.slane %v3613, 4
      %v3616 = vshll.u32 %v3370, 16
      %v3618 = vrot.slane %v3616, 5
      %v3619 = vsel %vm1861, %v3614, %v3618
      %v3620 = vshrl.u32 %v3370, 16
      %v3622 = vrot.slane %v3620, 4
      %v3623 = vor.u32 %v3622, %v3618
      %v3624 = vrot.slane %v3623, 4
      %v3626 = vshll.u32 %v3371, 16
      %v3628 = vrot.slane %v3626, 5
      %v3629 = vsel %vm1861, %v3624, %v3628
      %v3631 = vshrl.u32 %v3372, 16
      %v3633 = vrot.slane %v3631, 4
      %v3634 = vshll.u32 %v3372, 16
      %v3636 = vrot.slane %v3634, 5
      %v3637 = vor.u32 %v3633, %v3636
      %v3638 = vrot.slane %v3637, 4
      %v3640 = vshll.u32 %v3373, 16
      %v3642 = vrot.slane %v3640, 5
      %v3643 = vsel %vm1861, %v3638, %v3642
      %v3644 = vshrl.u32 %v3373, 16
      %v3646 = vrot.slane %v3644, 4
      %v3647 = vor.u32 %v3646, %v3642
      %v3648 = vrot.slane %v3647, 4
      %v3650 = vshll.u32 %v3374, 16
      %v3652 = vrot.slane %v3650, 5
      %v3653 = vsel %vm1861, %v3648, %v3652
      %v3655 = vshrl.u32 %v3375, 16
      %v3657 = vrot.slane %v3655, 4
      %v3658 = vshll.u32 %v3375, 16
      %v3660 = vrot.slane %v3658, 5
      %v3661 = vor.u32 %v3657, %v3660
      %v3662 = vrot.slane %v3661, 4
      %v3664 = vshll.u32 %v3376, 16
      %v3666 = vrot.slane %v3664, 5
      %v3667 = vsel %vm1861, %v3662, %v3666
      %v3668 = vshrl.u32 %v3376, 16
      %v3670 = vrot.slane %v3668, 4
      %v3671 = vor.u32 %v3670, %v3666
      %v3672 = vrot.slane %v3671, 4
      %v3674 = vshll.u32 %v3377, 16
      %v3676 = vrot.slane %v3674, 5
      %v3677 = vsel %vm1861, %v3672, %v3676
      %v3679 = vshrl.u32 %v3378, 16
      %v3681 = vrot.slane %v3679, 4
      %v3682 = vshll.u32 %v3378, 16
      %v3684 = vrot.slane %v3682, 5
      %v3685 = vor.u32 %v3681, %v3684
      %v3686 = vrot.slane %v3685, 4
      %v3688 = vshll.u32 %v3379, 16
      %v3690 = vrot.slane %v3688, 5
      %v3691 = vsel %vm1861, %v3686, %v3690
      %v3692 = vshrl.u32 %v3379, 16
      %v3694 = vrot.slane %v3692, 4
      %v3695 = vor.u32 %v3694, %v3690
      %v3696 = vrot.slane %v3695, 4
      %v3698 = vshll.u32 %v3380, 16
      %v3700 = vrot.slane %v3698, 5
      %v3701 = vsel %vm1861, %v3696, %v3700
      %v3703 = vshrl.u32 %v3381, 16
      %v3705 = vrot.slane %v3703, 4
      %v3706 = vshll.u32 %v3381, 16
      %v3708 = vrot.slane %v3706, 5
      %v3709 = vor.u32 %v3705, %v3708
      %v3710 = vrot.slane %v3709, 4
      %v3712 = vshll.u32 %v3382, 16
      %v3714 = vrot.slane %v3712, 5
      %v3715 = vsel %vm1861, %v3710, %v3714
      %v3716 = vshrl.u32 %v3382, 16
      %v3718 = vrot.slane %v3716, 4
      %v3719 = vor.u32 %v3718, %v3714
      %v3720 = vrot.slane %v3719, 4
      %v3722 = vshll.u32 %v3383, 16
      %v3724 = vrot.slane %v3722, 5
      %v3725 = vsel %vm1861, %v3720, %v3724
      %v3727 = vshrl.u32 %v3384, 16
      %v3729 = vrot.slane %v3727, 4
      %v3730 = vshll.u32 %v3384, 16
      %v3732 = vrot.slane %v3730, 5
      %v3733 = vor.u32 %v3729, %v3732
      %v3734 = vrot.slane %v3733, 4
      %v3736 = vshll.u32 %v3385, 16
      %v3738 = vrot.slane %v3736, 5
      %v3739 = vsel %vm1861, %v3734, %v3738
      %v3740 = vshrl.u32 %v3385, 16
      %v3742 = vrot.slane %v3740, 4
      %v3743 = vor.u32 %v3742, %v3738
      %v3744 = vrot.slane %v3743, 4
      %v3746 = vshll.u32 %v3386, 16
      %v3748 = vrot.slane %v3746, 5
      %v3749 = vsel %vm1861, %v3744, %v3748
      %v3751 = vshrl.u32 %v3387, 16
      %v3753 = vrot.slane %v3751, 4
      %v3754 = vshll.u32 %v3387, 16
      %v3756 = vrot.slane %v3754, 5
      %v3757 = vor.u32 %v3753, %v3756
      %v3758 = vrot.slane %v3757, 4
      %v3760 = vshll.u32 %v3388, 16
      %v3762 = vrot.slane %v3760, 5
      %v3763 = vsel %vm1861, %v3758, %v3762
      %v3764 = vshrl.u32 %v3388, 16
      %v3766 = vrot.slane %v3764, 4
      %v3767 = vor.u32 %v3766, %v3762
      %v3768 = vrot.slane %v3767, 4
      %v3770 = vshll.u32 %v3389, 16
      %v3772 = vrot.slane %v3770, 5
      %v3773 = vsel %vm1861, %v3768, %v3772
      %s3774 = scalar_lea.vmem %s5, 32
      %v3775 = vld [vmem:[%s3774] sm:$0xf]
      %v3776 = vld [vmem:[%s3774 + $0x4] sm:$0xf]
      %v3777 = vunpack.c.l.b16 %v3403
      %v3778 = vunpack.c.l.b16 %v3413
      %v3779 = vunpack.c.l.b16 %v3427
      %v3780 = vunpack.c.l.b16 %v3437
      %v3781 = vunpack.c.l.b16 %v3451
      %v3782 = vunpack.c.l.b16 %v3461
      %v3783 = vunpack.c.l.b16 %v3475
      %v3784 = vunpack.c.l.b16 %v3485
      %v3785 = vunpack.c.l.b16 %v3499
      %v3786 = vunpack.c.l.b16 %v3509
      %v3787 = vunpack.c.l.b16 %v3523
      %v3788 = vunpack.c.l.b16 %v3533
      %v3789 = vunpack.c.l.b16 %v3547
      %v3790 = vunpack.c.l.b16 %v3557
      %v3791 = vunpack.c.l.b16 %v3571
      %v3792 = vunpack.c.l.b16 %v3581
      %v3793 = vunpack.c.l.b16 %v3595
      %v3794 = vunpack.c.l.b16 %v3605
      %v3795 = vunpack.c.l.b16 %v3619
      %v3796 = vunpack.c.l.b16 %v3629
      %v3797 = vunpack.c.l.b16 %v3643
      %v3798 = vunpack.c.l.b16 %v3653
      %v3799 = vunpack.c.l.b16 %v3667
      %v3800 = vunpack.c.l.b16 %v3677
      %v3801 = vunpack.c.l.b16 %v3691
      %v3802 = vunpack.c.l.b16 %v3701
      %v3803 = vunpack.c.l.b16 %v3715
      %v3804 = vunpack.c.l.b16 %v3725
      %v3805 = vunpack.c.l.b16 %v3739
      %v3806 = vunpack.c.l.b16 %v3749
      %v3807 = vunpack.c.l.b16 %v3763
      %v3808 = vunpack.c.l.b16 %v3773
      %v3809 = vpack.c.b16 %v3778, %v3777
      %v3810 = vpack.c.b16 %v3780, %v3779
      %v3811 = vpack.c.b16 %v3782, %v3781
      %v3812 = vpack.c.b16 %v3784, %v3783
      %v3813 = vpack.c.b16 %v3786, %v3785
      %v3814 = vpack.c.b16 %v3788, %v3787
      %v3815 = vpack.c.b16 %v3790, %v3789
      %v3816 = vpack.c.b16 %v3792, %v3791
      %v3817 = vpack.c.b16 %v3794, %v3793
      %v3818 = vpack.c.b16 %v3796, %v3795
      %v3819 = vpack.c.b16 %v3798, %v3797
      %v3820 = vpack.c.b16 %v3800, %v3799
      %v3821 = vpack.c.b16 %v3802, %v3801
      %v3822 = vpack.c.b16 %v3804, %v3803
      %v3823 = vpack.c.b16 %v3806, %v3805
      %v3824 = vpack.c.b16 %v3808, %v3807
      %v3827 = vunpack.c.l.b16 %v3775
      %v3828 = vunpack.c.l.b16 %v3776
      %v3829 = vpack.c.b16 %v3828, %v3827
      %v3832 = vsel %vm458, %v3809, 0
      %v3835 = vsel %vm458, %v3810, 0
      %v3838 = vsel %vm458, %v3811, 0
      %v3841 = vsel %vm458, %v3812, 0
      %v3844 = vsel %vm458, %v3813, 0
      %v3847 = vsel %vm458, %v3814, 0
      %v3850 = vsel %vm458, %v3815, 0
      %v3853 = vsel %vm458, %v3816, 0
      %v3856 = vsel %vm458, %v3817, 0
      %v3859 = vsel %vm458, %v3818, 0
      %v3862 = vsel %vm458, %v3819, 0
      %v3865 = vsel %vm458, %v3820, 0
      %v3868 = vsel %vm458, %v3821, 0
      %v3871 = vsel %vm458, %v3822, 0
      %v3874 = vsel %vm458, %v3823, 0
      %v3877 = vsel %vm458, %v3824, 0
      %3879 = vmatpush.bf16.msra.mxu0 0
      %3880 = vmatpush.bf16.msra.mxu0 0
      %3881 = vmatpush.bf16.msra.mxu0 0
      %3882 = vmatpush.bf16.msra.mxu0 0
      %3883 = vmatpush.bf16.msra.mxu0 0
      %3884 = vmatpush.bf16.msra.mxu0 0
      %3885 = vmatpush.bf16.msra.mxu0 0
      %3886 = vmatpush.bf16.msra.mxu0 %v3829
      %3887 = vmatmul.bf16.gmra.mxu0 %v3832
      %v3888 = vpop.f32.mrf.mxu0
      %v3889 = vadd.f32 0.0, %v3888
      %v3890 = vpop.f32.mrf.mxu0
      %v3891 = vadd.f32 0.0, %v3890
      %3892 = vmatmul.bf16.gmra.mxu0 %v3835
      %v3893 = vpop.f32.mrf.mxu0
      %v3894 = vadd.f32 0.0, %v3893
      %v3895 = vpop.f32.mrf.mxu0
      %v3896 = vadd.f32 0.0, %v3895
      %3897 = vmatmul.bf16.gmra.mxu0 %v3838
      %v3898 = vpop.f32.mrf.mxu0
      %v3899 = vadd.f32 0.0, %v3898
      %v3900 = vpop.f32.mrf.mxu0
      %v3901 = vadd.f32 0.0, %v3900
      %3902 = vmatmul.bf16.gmra.mxu0 %v3841
      %v3903 = vpop.f32.mrf.mxu0
      %v3904 = vadd.f32 0.0, %v3903
      %v3905 = vpop.f32.mrf.mxu0
      %v3906 = vadd.f32 0.0, %v3905
      %3907 = vmatmul.bf16.gmra.mxu0 %v3844
      %v3908 = vpop.f32.mrf.mxu0
      %v3909 = vadd.f32 0.0, %v3908
      %v3910 = vpop.f32.mrf.mxu0
      %v3911 = vadd.f32 0.0, %v3910
      %3912 = vmatmul.bf16.gmra.mxu0 %v3847
      %v3913 = vpop.f32.mrf.mxu0
      %v3914 = vadd.f32 0.0, %v3913
      %v3915 = vpop.f32.mrf.mxu0
      %v3916 = vadd.f32 0.0, %v3915
      %3917 = vmatmul.bf16.gmra.mxu0 %v3850
      %v3918 = vpop.f32.mrf.mxu0
      %v3919 = vadd.f32 0.0, %v3918
      %v3920 = vpop.f32.mrf.mxu0
      %v3921 = vadd.f32 0.0, %v3920
      %3922 = vmatmul.bf16.gmra.mxu0 %v3853
      %v3923 = vpop.f32.mrf.mxu0
      %v3924 = vadd.f32 0.0, %v3923
      %v3925 = vpop.f32.mrf.mxu0
      %v3926 = vadd.f32 0.0, %v3925
      %3927 = vmatmul.bf16.gmra.mxu0 %v3856
      %v3928 = vpop.f32.mrf.mxu0
      %v3929 = vadd.f32 0.0, %v3928
      %v3930 = vpop.f32.mrf.mxu0
      %v3931 = vadd.f32 0.0, %v3930
      %3932 = vmatmul.bf16.gmra.mxu0 %v3859
      %v3933 = vpop.f32.mrf.mxu0
      %v3934 = vadd.f32 0.0, %v3933
      %v3935 = vpop.f32.mrf.mxu0
      %v3936 = vadd.f32 0.0, %v3935
      %3937 = vmatmul.bf16.gmra.mxu0 %v3862
      %v3938 = vpop.f32.mrf.mxu0
      %v3939 = vadd.f32 0.0, %v3938
      %v3940 = vpop.f32.mrf.mxu0
      %v3941 = vadd.f32 0.0, %v3940
      %3942 = vmatmul.bf16.gmra.mxu0 %v3865
      %v3943 = vpop.f32.mrf.mxu0
      %v3944 = vadd.f32 0.0, %v3943
      %v3945 = vpop.f32.mrf.mxu0
      %v3946 = vadd.f32 0.0, %v3945
      %3947 = vmatmul.bf16.gmra.mxu0 %v3868
      %v3948 = vpop.f32.mrf.mxu0
      %v3949 = vadd.f32 0.0, %v3948
      %v3950 = vpop.f32.mrf.mxu0
      %v3951 = vadd.f32 0.0, %v3950
      %3952 = vmatmul.bf16.gmra.mxu0 %v3871
      %v3953 = vpop.f32.mrf.mxu0
      %v3954 = vadd.f32 0.0, %v3953
      %v3955 = vpop.f32.mrf.mxu0
      %v3956 = vadd.f32 0.0, %v3955
      %3957 = vmatmul.bf16.gmra.mxu0 %v3874
      %v3958 = vpop.f32.mrf.mxu0
      %v3959 = vadd.f32 0.0, %v3958
      %v3960 = vpop.f32.mrf.mxu0
      %v3961 = vadd.f32 0.0, %v3960
      %3962 = vmatmul.bf16.gmra.mxu0 %v3877
      %v3963 = vpop.f32.mrf.mxu0
      %v3964 = vadd.f32 0.0, %v3963
      %v3965 = vpop.f32.mrf.mxu0
      %v3966 = vadd.f32 0.0, %v3965
      %3967 = vdwg.mxu0
      %v3968 = vadd.f32 %v3310, %v3889
      %v3969 = vadd.f32 %v3311, %v3891
      %v3970 = vadd.f32 %v3312, %v3894
      %v3971 = vadd.f32 %v3313, %v3896
      %v3972 = vadd.f32 %v3314, %v3899
      %v3973 = vadd.f32 %v3315, %v3901
      %v3974 = vadd.f32 %v3316, %v3904
      %v3975 = vadd.f32 %v3317, %v3906
      %v3976 = vadd.f32 %v3318, %v3909
      %v3977 = vadd.f32 %v3319, %v3911
      %v3978 = vadd.f32 %v3320, %v3914
      %v3979 = vadd.f32 %v3321, %v3916
      %v3980 = vadd.f32 %v3322, %v3919
      %v3981 = vadd.f32 %v3323, %v3921
      %v3982 = vadd.f32 %v3324, %v3924
      %v3983 = vadd.f32 %v3325, %v3926
      %v3984 = vadd.f32 %v3326, %v3929
      %v3985 = vadd.f32 %v3327, %v3931
      %v3986 = vadd.f32 %v3328, %v3934
      %v3987 = vadd.f32 %v3329, %v3936
      %v3988 = vadd.f32 %v3330, %v3939
      %v3989 = vadd.f32 %v3331, %v3941
      %v3990 = vadd.f32 %v3332, %v3944
      %v3991 = vadd.f32 %v3333, %v3946
      %v3992 = vadd.f32 %v3334, %v3949
      %v3993 = vadd.f32 %v3335, %v3951
      %v3994 = vadd.f32 %v3336, %v3954
      %v3995 = vadd.f32 %v3337, %v3956
      %v3996 = vadd.f32 %v3338, %v3959
      %v3997 = vadd.f32 %v3339, %v3961
      %v3998 = vadd.f32 %v3340, %v3964
      %v3999 = vadd.f32 %v3341, %v3966
      %v4000 = vld [vmem:[%s1694] sm:$0xe]
      %v4001 = vld [vmem:[%s1694 + $0xc] sm:$0xe]
      %v4002 = vld [vmem:[%s1694 + $0x18] sm:$0xe]
      %v4003 = vld [vmem:[%s1694 + $0x24] sm:$0xe]
      %v4004 = vld [vmem:[%s1694 + $0x30] sm:$0xe]
      %v4005 = vld [vmem:[%s1694 + $0x3c] sm:$0xe]
      %v4006 = vld [vmem:[%s1694 + $0x48] sm:$0xe]
      %v4007 = vld [vmem:[%s1694 + $0x54] sm:$0xe]
      %v4008 = vld [vmem:[%s1694 + $0x60] sm:$0xe]
      %v4009 = vld [vmem:[%s1694 + $0x6c] sm:$0xe]
      %v4010 = vld [vmem:[%s1694 + $0x78] sm:$0xe]
      %v4011 = vld [vmem:[%s1694 + $0x84] sm:$0xe]
      %v4012 = vld [vmem:[%s1694 + $0x90] sm:$0xe]
      %v4013 = vld [vmem:[%s1694 + $0x9c] sm:$0xe]
      %v4014 = vld [vmem:[%s1694 + $0xa8] sm:$0xe]
      %v4015 = vld [vmem:[%s1694 + $0xb4] sm:$0xe]
      %v4064 = vrot.slane %v4000, 5
      %v4065 = vrot.slane %v4064, 4
      %v4066 = vrot.slane %v3343, 5
      %v4067 = vsel %vm2713, %v4065, %v4066
      %v4068 = vrot.slane %v4066, 4
      %v4069 = vrot.slane %v3344, 5
      %v4070 = vsel %vm2713, %v4068, %v4069
      %v4071 = vrot.slane %v4001, 5
      %v4072 = vrot.slane %v4071, 4
      %v4073 = vrot.slane %v3346, 5
      %v4074 = vsel %vm2713, %v4072, %v4073
      %v4075 = vrot.slane %v4073, 4
      %v4076 = vrot.slane %v3347, 5
      %v4077 = vsel %vm2713, %v4075, %v4076
      %v4078 = vrot.slane %v4002, 5
      %v4079 = vrot.slane %v4078, 4
      %v4080 = vrot.slane %v3349, 5
      %v4081 = vsel %vm2713, %v4079, %v4080
      %v4082 = vrot.slane %v4080, 4
      %v4083 = vrot.slane %v3350, 5
      %v4084 = vsel %vm2713, %v4082, %v4083
      %v4085 = vrot.slane %v4003, 5
      %v4086 = vrot.slane %v4085, 4
      %v4087 = vrot.slane %v3352, 5
      %v4088 = vsel %vm2713, %v4086, %v4087
      %v4089 = vrot.slane %v4087, 4
      %v4090 = vrot.slane %v3353, 5
      %v4091 = vsel %vm2713, %v4089, %v4090
      %v4092 = vrot.slane %v4004, 5
      %v4093 = vrot.slane %v4092, 4
      %v4094 = vrot.slane %v3355, 5
      %v4095 = vsel %vm2713, %v4093, %v4094
      %v4096 = vrot.slane %v4094, 4
      %v4097 = vrot.slane %v3356, 5
      %v4098 = vsel %vm2713, %v4096, %v4097
      %v4099 = vrot.slane %v4005, 5
      %v4100 = vrot.slane %v4099, 4
      %v4101 = vrot.slane %v3358, 5
      %v4102 = vsel %vm2713, %v4100, %v4101
      %v4103 = vrot.slane %v4101, 4
      %v4104 = vrot.slane %v3359, 5
      %v4105 = vsel %vm2713, %v4103, %v4104
      %v4106 = vrot.slane %v4006, 5
      %v4107 = vrot.slane %v4106, 4
      %v4108 = vrot.slane %v3361, 5
      %v4109 = vsel %vm2713, %v4107, %v4108
      %v4110 = vrot.slane %v4108, 4
      %v4111 = vrot.slane %v3362, 5
      %v4112 = vsel %vm2713, %v4110, %v4111
      %v4113 = vrot.slane %v4007, 5
      %v4114 = vrot.slane %v4113, 4
      %v4115 = vrot.slane %v3364, 5
      %v4116 = vsel %vm2713, %v4114, %v4115
      %v4117 = vrot.slane %v4115, 4
      %v4118 = vrot.slane %v3365, 5
      %v4119 = vsel %vm2713, %v4117, %v4118
      %v4120 = vrot.slane %v4008, 5
      %v4121 = vrot.slane %v4120, 4
      %v4122 = vrot.slane %v3367, 5
      %v4123 = vsel %vm2713, %v4121, %v4122
      %v4124 = vrot.slane %v4122, 4
      %v4125 = vrot.slane %v3368, 5
      %v4126 = vsel %vm2713, %v4124, %v4125
      %v4127 = vrot.slane %v4009, 5
      %v4128 = vrot.slane %v4127, 4
      %v4129 = vrot.slane %v3370, 5
      %v4130 = vsel %vm2713, %v4128, %v4129
      %v4131 = vrot.slane %v4129, 4
      %v4132 = vrot.slane %v3371, 5
      %v4133 = vsel %vm2713, %v4131, %v4132
      %v4134 = vrot.slane %v4010, 5
      %v4135 = vrot.slane %v4134, 4
      %v4136 = vrot.slane %v3373, 5
      %v4137 = vsel %vm2713, %v4135, %v4136
      %v4138 = vrot.slane %v4136, 4
      %v4139 = vrot.slane %v3374, 5
      %v4140 = vsel %vm2713, %v4138, %v4139
      %v4141 = vrot.slane %v4011, 5
      %v4142 = vrot.slane %v4141, 4
      %v4143 = vrot.slane %v3376, 5
      %v4144 = vsel %vm2713, %v4142, %v4143
      %v4145 = vrot.slane %v4143, 4
      %v4146 = vrot.slane %v3377, 5
      %v4147 = vsel %vm2713, %v4145, %v4146
      %v4148 = vrot.slane %v4012, 5
      %v4149 = vrot.slane %v4148, 4
      %v4150 = vrot.slane %v3379, 5
      %v4151 = vsel %vm2713, %v4149, %v4150
      %v4152 = vrot.slane %v4150, 4
      %v4153 = vrot.slane %v3380, 5
      %v4154 = vsel %vm2713, %v4152, %v4153
      %v4155 = vrot.slane %v4013, 5
      %v4156 = vrot.slane %v4155, 4
      %v4157 = vrot.slane %v3382, 5
      %v4158 = vsel %vm2713, %v4156, %v4157
      %v4159 = vrot.slane %v4157, 4
      %v4160 = vrot.slane %v3383, 5
      %v4161 = vsel %vm2713, %v4159, %v4160
      %v4162 = vrot.slane %v4014, 5
      %v4163 = vrot.slane %v4162, 4
      %v4164 = vrot.slane %v3385, 5
      %v4165 = vsel %vm2713, %v4163, %v4164
      %v4166 = vrot.slane %v4164, 4
      %v4167 = vrot.slane %v3386, 5
      %v4168 = vsel %vm2713, %v4166, %v4167
      %v4169 = vrot.slane %v4015, 5
      %v4170 = vrot.slane %v4169, 4
      %v4171 = vrot.slane %v3388, 5
      %v4172 = vsel %vm2713, %v4170, %v4171
      %v4173 = vrot.slane %v4171, 4
      %v4174 = vrot.slane %v3389, 5
      %v4175 = vsel %vm2713, %v4173, %v4174
      %s4176 = scalar_lea.vmem %s5, 40
      %v4177 = vld [vmem:[%s4176] sm:$0xf]
      %v4178 = vld [vmem:[%s4176 + $0x4] sm:$0xf]
      %v4179 = vunpack.c.l.b16 %v4067
      %v4180 = vunpack.c.l.b16 %v4070
      %v4181 = vunpack.c.l.b16 %v4074
      %v4182 = vunpack.c.l.b16 %v4077
      %v4183 = vunpack.c.l.b16 %v4081
      %v4184 = vunpack.c.l.b16 %v4084
      %v4185 = vunpack.c.l.b16 %v4088
      %v4186 = vunpack.c.l.b16 %v4091
      %v4187 = vunpack.c.l.b16 %v4095
      %v4188 = vunpack.c.l.b16 %v4098
      %v4189 = vunpack.c.l.b16 %v4102
      %v4190 = vunpack.c.l.b16 %v4105
      %v4191 = vunpack.c.l.b16 %v4109
      %v4192 = vunpack.c.l.b16 %v4112
      %v4193 = vunpack.c.l.b16 %v4116
      %v4194 = vunpack.c.l.b16 %v4119
      %v4195 = vunpack.c.l.b16 %v4123
      %v4196 = vunpack.c.l.b16 %v4126
      %v4197 = vunpack.c.l.b16 %v4130
      %v4198 = vunpack.c.l.b16 %v4133
      %v4199 = vunpack.c.l.b16 %v4137
      %v4200 = vunpack.c.l.b16 %v4140
      %v4201 = vunpack.c.l.b16 %v4144
      %v4202 = vunpack.c.l.b16 %v4147
      %v4203 = vunpack.c.l.b16 %v4151
      %v4204 = vunpack.c.l.b16 %v4154
      %v4205 = vunpack.c.l.b16 %v4158
      %v4206 = vunpack.c.l.b16 %v4161
      %v4207 = vunpack.c.l.b16 %v4165
      %v4208 = vunpack.c.l.b16 %v4168
      %v4209 = vunpack.c.l.b16 %v4172
      %v4210 = vunpack.c.l.b16 %v4175
      %v4211 = vpack.c.b16 %v4180, %v4179
      %v4212 = vpack.c.b16 %v4182, %v4181
      %v4213 = vpack.c.b16 %v4184, %v4183
      %v4214 = vpack.c.b16 %v4186, %v4185
      %v4215 = vpack.c.b16 %v4188, %v4187
      %v4216 = vpack.c.b16 %v4190, %v4189
      %v4217 = vpack.c.b16 %v4192, %v4191
      %v4218 = vpack.c.b16 %v4194, %v4193
      %v4219 = vpack.c.b16 %v4196, %v4195
      %v4220 = vpack.c.b16 %v4198, %v4197
      %v4221 = vpack.c.b16 %v4200, %v4199
      %v4222 = vpack.c.b16 %v4202, %v4201
      %v4223 = vpack.c.b16 %v4204, %v4203
      %v4224 = vpack.c.b16 %v4206, %v4205
      %v4225 = vpack.c.b16 %v4208, %v4207
      %v4226 = vpack.c.b16 %v4210, %v4209
      %v4229 = vunpack.c.l.b16 %v4177
      %v4230 = vunpack.c.l.b16 %v4178
      %v4231 = vpack.c.b16 %v4230, %v4229
      %v4234 = vsel %vm458, %v4211, 0
      %v4237 = vsel %vm458, %v4212, 0
      %v4240 = vsel %vm458, %v4213, 0
      %v4243 = vsel %vm458, %v4214, 0
      %v4246 = vsel %vm458, %v4215, 0
      %v4249 = vsel %vm458, %v4216, 0
      %v4252 = vsel %vm458, %v4217, 0
      %v4255 = vsel %vm458, %v4218, 0
      %v4258 = vsel %vm458, %v4219, 0
      %v4261 = vsel %vm458, %v4220, 0
      %v4264 = vsel %vm458, %v4221, 0
      %v4267 = vsel %vm458, %v4222, 0
      %v4270 = vsel %vm458, %v4223, 0
      %v4273 = vsel %vm458, %v4224, 0
      %v4276 = vsel %vm458, %v4225, 0
      %v4279 = vsel %vm458, %v4226, 0
      %4281 = vmatpush.bf16.msra.mxu0 0
      %4282 = vmatpush.bf16.msra.mxu0 0
      %4283 = vmatpush.bf16.msra.mxu0 0
      %4284 = vmatpush.bf16.msra.mxu0 0
      %4285 = vmatpush.bf16.msra.mxu0 0
      %4286 = vmatpush.bf16.msra.mxu0 0
      %4287 = vmatpush.bf16.msra.mxu0 0
      %4288 = vmatpush.bf16.msra.mxu0 %v4231
      %4289 = vmatmul.bf16.gmra.mxu0 %v4234
      %v4290 = vpop.f32.mrf.mxu0
      %v4291 = vadd.f32 0.0, %v4290
      %v4292 = vpop.f32.mrf.mxu0
      %v4293 = vadd.f32 0.0, %v4292
      %4294 = vmatmul.bf16.gmra.mxu0 %v4237
      %v4295 = vpop.f32.mrf.mxu0
      %v4296 = vadd.f32 0.0, %v4295
      %v4297 = vpop.f32.mrf.mxu0
      %v4298 = vadd.f32 0.0, %v4297
      %4299 = vmatmul.bf16.gmra.mxu0 %v4240
      %v4300 = vpop.f32.mrf.mxu0
      %v4301 = vadd.f32 0.0, %v4300
      %v4302 = vpop.f32.mrf.mxu0
      %v4303 = vadd.f32 0.0, %v4302
      %4304 = vmatmul.bf16.gmra.mxu0 %v4243
      %v4305 = vpop.f32.mrf.mxu0
      %v4306 = vadd.f32 0.0, %v4305
      %v4307 = vpop.f32.mrf.mxu0
      %v4308 = vadd.f32 0.0, %v4307
      %4309 = vmatmul.bf16.gmra.mxu0 %v4246
      %v4310 = vpop.f32.mrf.mxu0
      %v4311 = vadd.f32 0.0, %v4310
      %v4312 = vpop.f32.mrf.mxu0
      %v4313 = vadd.f32 0.0, %v4312
      %4314 = vmatmul.bf16.gmra.mxu0 %v4249
      %v4315 = vpop.f32.mrf.mxu0
      %v4316 = vadd.f32 0.0, %v4315
      %v4317 = vpop.f32.mrf.mxu0
      %v4318 = vadd.f32 0.0, %v4317
      %4319 = vmatmul.bf16.gmra.mxu0 %v4252
      %v4320 = vpop.f32.mrf.mxu0
      %v4321 = vadd.f32 0.0, %v4320
      %v4322 = vpop.f32.mrf.mxu0
      %v4323 = vadd.f32 0.0, %v4322
      %4324 = vmatmul.bf16.gmra.mxu0 %v4255
      %v4325 = vpop.f32.mrf.mxu0
      %v4326 = vadd.f32 0.0, %v4325
      %v4327 = vpop.f32.mrf.mxu0
      %v4328 = vadd.f32 0.0, %v4327
      %4329 = vmatmul.bf16.gmra.mxu0 %v4258
      %v4330 = vpop.f32.mrf.mxu0
      %v4331 = vadd.f32 0.0, %v4330
      %v4332 = vpop.f32.mrf.mxu0
      %v4333 = vadd.f32 0.0, %v4332
      %4334 = vmatmul.bf16.gmra.mxu0 %v4261
      %v4335 = vpop.f32.mrf.mxu0
      %v4336 = vadd.f32 0.0, %v4335
      %v4337 = vpop.f32.mrf.mxu0
      %v4338 = vadd.f32 0.0, %v4337
      %4339 = vmatmul.bf16.gmra.mxu0 %v4264
      %v4340 = vpop.f32.mrf.mxu0
      %v4341 = vadd.f32 0.0, %v4340
      %v4342 = vpop.f32.mrf.mxu0
      %v4343 = vadd.f32 0.0, %v4342
      %4344 = vmatmul.bf16.gmra.mxu0 %v4267
      %v4345 = vpop.f32.mrf.mxu0
      %v4346 = vadd.f32 0.0, %v4345
      %v4347 = vpop.f32.mrf.mxu0
      %v4348 = vadd.f32 0.0, %v4347
      %4349 = vmatmul.bf16.gmra.mxu0 %v4270
      %v4350 = vpop.f32.mrf.mxu0
      %v4351 = vadd.f32 0.0, %v4350
      %v4352 = vpop.f32.mrf.mxu0
      %v4353 = vadd.f32 0.0, %v4352
      %4354 = vmatmul.bf16.gmra.mxu0 %v4273
      %v4355 = vpop.f32.mrf.mxu0
      %v4356 = vadd.f32 0.0, %v4355
      %v4357 = vpop.f32.mrf.mxu0
      %v4358 = vadd.f32 0.0, %v4357
      %4359 = vmatmul.bf16.gmra.mxu0 %v4276
      %v4360 = vpop.f32.mrf.mxu0
      %v4361 = vadd.f32 0.0, %v4360
      %v4362 = vpop.f32.mrf.mxu0
      %v4363 = vadd.f32 0.0, %v4362
      %4364 = vmatmul.bf16.gmra.mxu0 %v4279
      %v4365 = vpop.f32.mrf.mxu0
      %v4366 = vadd.f32 0.0, %v4365
      %v4367 = vpop.f32.mrf.mxu0
      %v4368 = vadd.f32 0.0, %v4367
      %4369 = vdwg.mxu0
      %v4370 = vadd.f32 %v3968, %v4291
      %v4371 = vadd.f32 %v3969, %v4293
      %v4372 = vadd.f32 %v3970, %v4296
      %v4373 = vadd.f32 %v3971, %v4298
      %v4374 = vadd.f32 %v3972, %v4301
      %v4375 = vadd.f32 %v3973, %v4303
      %v4376 = vadd.f32 %v3974, %v4306
      %v4377 = vadd.f32 %v3975, %v4308
      %v4378 = vadd.f32 %v3976, %v4311
      %v4379 = vadd.f32 %v3977, %v4313
      %v4380 = vadd.f32 %v3978, %v4316
      %v4381 = vadd.f32 %v3979, %v4318
      %v4382 = vadd.f32 %v3980, %v4321
      %v4383 = vadd.f32 %v3981, %v4323
      %v4384 = vadd.f32 %v3982, %v4326
      %v4385 = vadd.f32 %v3983, %v4328
      %v4386 = vadd.f32 %v3984, %v4331
      %v4387 = vadd.f32 %v3985, %v4333
      %v4388 = vadd.f32 %v3986, %v4336
      %v4389 = vadd.f32 %v3987, %v4338
      %v4390 = vadd.f32 %v3988, %v4341
      %v4391 = vadd.f32 %v3989, %v4343
      %v4392 = vadd.f32 %v3990, %v4346
      %v4393 = vadd.f32 %v3991, %v4348
      %v4394 = vadd.f32 %v3992, %v4351
      %v4395 = vadd.f32 %v3993, %v4353
      %v4396 = vadd.f32 %v3994, %v4356
      %v4397 = vadd.f32 %v3995, %v4358
      %v4398 = vadd.f32 %v3996, %v4361
      %v4399 = vadd.f32 %v3997, %v4363
      %v4400 = vadd.f32 %v3998, %v4366
      %v4401 = vadd.f32 %v3999, %v4368
      %s4402 = scalar_lea.vmem [#allocation2], 24
      %v4403 = vld [vmem:[%s4402] sm:$0xf]
      %v4404 = vld [vmem:[%s4402 + $0x4] sm:$0xf]
      %v4405 = vld [vmem:[%s4402 + $0xc] sm:$0xf]
      %v4406 = vld [vmem:[%s4402 + $0x10] sm:$0xf]
      %v4407 = vld [vmem:[%s4402 + $0x18] sm:$0xf]
      %v4408 = vld [vmem:[%s4402 + $0x1c] sm:$0xf]
      %v4409 = vld [vmem:[%s4402 + $0x24] sm:$0xf]
      %v4410 = vld [vmem:[%s4402 + $0x28] sm:$0xf]
      %v4411 = vld [vmem:[%s4402 + $0x30] sm:$0xf]
      %v4412 = vld [vmem:[%s4402 + $0x34] sm:$0xf]
      %v4413 = vld [vmem:[%s4402 + $0x3c] sm:$0xf]
      %v4414 = vld [vmem:[%s4402 + $0x40] sm:$0xf]
      %v4415 = vld [vmem:[%s4402 + $0x48] sm:$0xf]
      %v4416 = vld [vmem:[%s4402 + $0x4c] sm:$0xf]
      %v4417 = vld [vmem:[%s4402 + $0x54] sm:$0xf]
      %v4418 = vld [vmem:[%s4402 + $0x58] sm:$0xf]
      %v4419 = vld [vmem:[%s4402 + $0x60] sm:$0xf]
      %v4420 = vld [vmem:[%s4402 + $0x64] sm:$0xf]
      %v4421 = vld [vmem:[%s4402 + $0x6c] sm:$0xf]
      %v4422 = vld [vmem:[%s4402 + $0x70] sm:$0xf]
      %v4423 = vld [vmem:[%s4402 + $0x78] sm:$0xf]
      %v4424 = vld [vmem:[%s4402 + $0x7c] sm:$0xf]
      %v4425 = vld [vmem:[%s4402 + $0x84] sm:$0xf]
      %v4426 = vld [vmem:[%s4402 + $0x88] sm:$0xf]
      %v4427 = vld [vmem:[%s4402 + $0x90] sm:$0xf]
      %v4428 = vld [vmem:[%s4402 + $0x94] sm:$0xf]
      %v4429 = vld [vmem:[%s4402 + $0x9c] sm:$0xf]
      %v4430 = vld [vmem:[%s4402 + $0xa0] sm:$0xf]
      %v4431 = vld [vmem:[%s4402 + $0xa8] sm:$0xf]
      %v4432 = vld [vmem:[%s4402 + $0xac] sm:$0xf]
      %v4433 = vld [vmem:[%s4402 + $0xb4] sm:$0xf]
      %v4434 = vld [vmem:[%s4402 + $0xb8] sm:$0xf]
      %s4435 = scalar_lea.vmem %s5, 48
      %v4436 = vld [vmem:[%s4435] sm:$0xf]
      %v4437 = vld [vmem:[%s4435 + $0x4] sm:$0xf]
      %v4470 = vunpack.c.l.b16 %v4403
      %v4471 = vunpack.c.l.b16 %v4404
      %v4472 = vunpack.c.l.b16 %v4405
      %v4473 = vunpack.c.l.b16 %v4406
      %v4474 = vunpack.c.l.b16 %v4407
      %v4475 = vunpack.c.l.b16 %v4408
      %v4476 = vunpack.c.l.b16 %v4409
      %v4477 = vunpack.c.l.b16 %v4410
      %v4478 = vunpack.c.l.b16 %v4411
      %v4479 = vunpack.c.l.b16 %v4412
      %v4480 = vunpack.c.l.b16 %v4413
      %v4481 = vunpack.c.l.b16 %v4414
      %v4482 = vunpack.c.l.b16 %v4415
      %v4483 = vunpack.c.l.b16 %v4416
      %v4484 = vunpack.c.l.b16 %v4417
      %v4485 = vunpack.c.l.b16 %v4418
      %v4486 = vunpack.c.l.b16 %v4419
      %v4487 = vunpack.c.l.b16 %v4420
      %v4488 = vunpack.c.l.b16 %v4421
      %v4489 = vunpack.c.l.b16 %v4422
      %v4490 = vunpack.c.l.b16 %v4423
      %v4491 = vunpack.c.l.b16 %v4424
      %v4492 = vunpack.c.l.b16 %v4425
      %v4493 = vunpack.c.l.b16 %v4426
      %v4494 = vunpack.c.l.b16 %v4427
      %v4495 = vunpack.c.l.b16 %v4428
      %v4496 = vunpack.c.l.b16 %v4429
      %v4497 = vunpack.c.l.b16 %v4430
      %v4498 = vunpack.c.l.b16 %v4431
      %v4499 = vunpack.c.l.b16 %v4432
      %v4500 = vunpack.c.l.b16 %v4433
      %v4501 = vunpack.c.l.b16 %v4434
      %v4502 = vpack.c.b16 %v4471, %v4470
      %v4503 = vpack.c.b16 %v4473, %v4472
      %v4504 = vpack.c.b16 %v4475, %v4474
      %v4505 = vpack.c.b16 %v4477, %v4476
      %v4506 = vpack.c.b16 %v4479, %v4478
      %v4507 = vpack.c.b16 %v4481, %v4480
      %v4508 = vpack.c.b16 %v4483, %v4482
      %v4509 = vpack.c.b16 %v4485, %v4484
      %v4510 = vpack.c.b16 %v4487, %v4486
      %v4511 = vpack.c.b16 %v4489, %v4488
      %v4512 = vpack.c.b16 %v4491, %v4490
      %v4513 = vpack.c.b16 %v4493, %v4492
      %v4514 = vpack.c.b16 %v4495, %v4494
      %v4515 = vpack.c.b16 %v4497, %v4496
      %v4516 = vpack.c.b16 %v4499, %v4498
      %v4517 = vpack.c.b16 %v4501, %v4500
      %v4520 = vunpack.c.l.b16 %v4436
      %v4521 = vunpack.c.l.b16 %v4437
      %v4522 = vpack.c.b16 %v4521, %v4520
      %v4525 = vsel %vm458, %v4502, 0
      %v4528 = vsel %vm458, %v4503, 0
      %v4531 = vsel %vm458, %v4504, 0
      %v4534 = vsel %vm458, %v4505, 0
      %v4537 = vsel %vm458, %v4506, 0
      %v4540 = vsel %vm458, %v4507, 0
      %v4543 = vsel %vm458, %v4508, 0
      %v4546 = vsel %vm458, %v4509, 0
      %v4549 = vsel %vm458, %v4510, 0
      %v4552 = vsel %vm458, %v4511, 0
      %v4555 = vsel %vm458, %v4512, 0
      %v4558 = vsel %vm458, %v4513, 0
      %v4561 = vsel %vm458, %v4514, 0
      %v4564 = vsel %vm458, %v4515, 0
      %v4567 = vsel %vm458, %v4516, 0
      %v4570 = vsel %vm458, %v4517, 0
      %4572 = vmatpush.bf16.msra.mxu0 0
      %4573 = vmatpush.bf16.msra.mxu0 0
      %4574 = vmatpush.bf16.msra.mxu0 0
      %4575 = vmatpush.bf16.msra.mxu0 0
      %4576 = vmatpush.bf16.msra.mxu0 0
      %4577 = vmatpush.bf16.msra.mxu0 0
      %4578 = vmatpush.bf16.msra.mxu0 0
      %4579 = vmatpush.bf16.msra.mxu0 %v4522
      %4580 = vmatmul.bf16.gmra.mxu0 %v4525
      %v4581 = vpop.f32.mrf.mxu0
      %v4582 = vadd.f32 0.0, %v4581
      %v4583 = vpop.f32.mrf.mxu0
      %v4584 = vadd.f32 0.0, %v4583
      %4585 = vmatmul.bf16.gmra.mxu0 %v4528
      %v4586 = vpop.f32.mrf.mxu0
      %v4587 = vadd.f32 0.0, %v4586
      %v4588 = vpop.f32.mrf.mxu0
      %v4589 = vadd.f32 0.0, %v4588
      %4590 = vmatmul.bf16.gmra.mxu0 %v4531
      %v4591 = vpop.f32.mrf.mxu0
      %v4592 = vadd.f32 0.0, %v4591
      %v4593 = vpop.f32.mrf.mxu0
      %v4594 = vadd.f32 0.0, %v4593
      %4595 = vmatmul.bf16.gmra.mxu0 %v4534
      %v4596 = vpop.f32.mrf.mxu0
      %v4597 = vadd.f32 0.0, %v4596
      %v4598 = vpop.f32.mrf.mxu0
      %v4599 = vadd.f32 0.0, %v4598
      %4600 = vmatmul.bf16.gmra.mxu0 %v4537
      %v4601 = vpop.f32.mrf.mxu0
      %v4602 = vadd.f32 0.0, %v4601
      %v4603 = vpop.f32.mrf.mxu0
      %v4604 = vadd.f32 0.0, %v4603
      %4605 = vmatmul.bf16.gmra.mxu0 %v4540
      %v4606 = vpop.f32.mrf.mxu0
      %v4607 = vadd.f32 0.0, %v4606
      %v4608 = vpop.f32.mrf.mxu0
      %v4609 = vadd.f32 0.0, %v4608
      %4610 = vmatmul.bf16.gmra.mxu0 %v4543
      %v4611 = vpop.f32.mrf.mxu0
      %v4612 = vadd.f32 0.0, %v4611
      %v4613 = vpop.f32.mrf.mxu0
      %v4614 = vadd.f32 0.0, %v4613
      %4615 = vmatmul.bf16.gmra.mxu0 %v4546
      %v4616 = vpop.f32.mrf.mxu0
      %v4617 = vadd.f32 0.0, %v4616
      %v4618 = vpop.f32.mrf.mxu0
      %v4619 = vadd.f32 0.0, %v4618
      %4620 = vmatmul.bf16.gmra.mxu0 %v4549
      %v4621 = vpop.f32.mrf.mxu0
      %v4622 = vadd.f32 0.0, %v4621
      %v4623 = vpop.f32.mrf.mxu0
      %v4624 = vadd.f32 0.0, %v4623
      %4625 = vmatmul.bf16.gmra.mxu0 %v4552
      %v4626 = vpop.f32.mrf.mxu0
      %v4627 = vadd.f32 0.0, %v4626
      %v4628 = vpop.f32.mrf.mxu0
      %v4629 = vadd.f32 0.0, %v4628
      %4630 = vmatmul.bf16.gmra.mxu0 %v4555
      %v4631 = vpop.f32.mrf.mxu0
      %v4632 = vadd.f32 0.0, %v4631
      %v4633 = vpop.f32.mrf.mxu0
      %v4634 = vadd.f32 0.0, %v4633
      %4635 = vmatmul.bf16.gmra.mxu0 %v4558
      %v4636 = vpop.f32.mrf.mxu0
      %v4637 = vadd.f32 0.0, %v4636
      %v4638 = vpop.f32.mrf.mxu0
      %v4639 = vadd.f32 0.0, %v4638
      %4640 = vmatmul.bf16.gmra.mxu0 %v4561
      %v4641 = vpop.f32.mrf.mxu0
      %v4642 = vadd.f32 0.0, %v4641
      %v4643 = vpop.f32.mrf.mxu0
      %v4644 = vadd.f32 0.0, %v4643
      %4645 = vmatmul.bf16.gmra.mxu0 %v4564
      %v4646 = vpop.f32.mrf.mxu0
      %v4647 = vadd.f32 0.0, %v4646
      %v4648 = vpop.f32.mrf.mxu0
      %v4649 = vadd.f32 0.0, %v4648
      %4650 = vmatmul.bf16.gmra.mxu0 %v4567
      %v4651 = vpop.f32.mrf.mxu0
      %v4652 = vadd.f32 0.0, %v4651
      %v4653 = vpop.f32.mrf.mxu0
      %v4654 = vadd.f32 0.0, %v4653
      %4655 = vmatmul.bf16.gmra.mxu0 %v4570
      %v4656 = vpop.f32.mrf.mxu0
      %v4657 = vadd.f32 0.0, %v4656
      %v4658 = vpop.f32.mrf.mxu0
      %v4659 = vadd.f32 0.0, %v4658
      %4660 = vdwg.mxu0
      %v4661 = vadd.f32 %v4370, %v4582
      %v4662 = vadd.f32 %v4371, %v4584
      %v4663 = vadd.f32 %v4372, %v4587
      %v4664 = vadd.f32 %v4373, %v4589
      %v4665 = vadd.f32 %v4374, %v4592
      %v4666 = vadd.f32 %v4375, %v4594
      %v4667 = vadd.f32 %v4376, %v4597
      %v4668 = vadd.f32 %v4377, %v4599
      %v4669 = vadd.f32 %v4378, %v4602
      %v4670 = vadd.f32 %v4379, %v4604
      %v4671 = vadd.f32 %v4380, %v4607
      %v4672 = vadd.f32 %v4381, %v4609
      %v4673 = vadd.f32 %v4382, %v4612
      %v4674 = vadd.f32 %v4383, %v4614
      %v4675 = vadd.f32 %v4384, %v4617
      %v4676 = vadd.f32 %v4385, %v4619
      %v4677 = vadd.f32 %v4386, %v4622
      %v4678 = vadd.f32 %v4387, %v4624
      %v4679 = vadd.f32 %v4388, %v4627
      %v4680 = vadd.f32 %v4389, %v4629
      %v4681 = vadd.f32 %v4390, %v4632
      %v4682 = vadd.f32 %v4391, %v4634
      %v4683 = vadd.f32 %v4392, %v4637
      %v4684 = vadd.f32 %v4393, %v4639
      %v4685 = vadd.f32 %v4394, %v4642
      %v4686 = vadd.f32 %v4395, %v4644
      %v4687 = vadd.f32 %v4396, %v4647
      %v4688 = vadd.f32 %v4397, %v4649
      %v4689 = vadd.f32 %v4398, %v4652
      %v4690 = vadd.f32 %v4399, %v4654
      %v4691 = vadd.f32 %v4400, %v4657
      %v4692 = vadd.f32 %v4401, %v4659
      %v4693 = vld [vmem:[%s4402] sm:$0xf]
      %v4694 = vld [vmem:[%s4402 + $0x4] sm:$0xf]
      %v4695 = vld [vmem:[%s4402 + $0x8] sm:$0x1]
      %v4696 = vld [vmem:[%s4402 + $0xc] sm:$0xf]
      %v4697 = vld [vmem:[%s4402 + $0x10] sm:$0xf]
      %v4698 = vld [vmem:[%s4402 + $0x14] sm:$0x1]
      %v4699 = vld [vmem:[%s4402 + $0x18] sm:$0xf]
      %v4700 = vld [vmem:[%s4402 + $0x1c] sm:$0xf]
      %v4701 = vld [vmem:[%s4402 + $0x20] sm:$0x1]
      %v4702 = vld [vmem:[%s4402 + $0x24] sm:$0xf]
      %v4703 = vld [vmem:[%s4402 + $0x28] sm:$0xf]
      %v4704 = vld [vmem:[%s4402 + $0x2c] sm:$0x1]
      %v4705 = vld [vmem:[%s4402 + $0x30] sm:$0xf]
      %v4706 = vld [vmem:[%s4402 + $0x34] sm:$0xf]
      %v4707 = vld [vmem:[%s4402 + $0x38] sm:$0x1]
      %v4708 = vld [vmem:[%s4402 + $0x3c] sm:$0xf]
      %v4709 = vld [vmem:[%s4402 + $0x40] sm:$0xf]
      %v4710 = vld [vmem:[%s4402 + $0x44] sm:$0x1]
      %v4711 = vld [vmem:[%s4402 + $0x48] sm:$0xf]
      %v4712 = vld [vmem:[%s4402 + $0x4c] sm:$0xf]
      %v4713 = vld [vmem:[%s4402 + $0x50] sm:$0x1]
      %v4714 = vld [vmem:[%s4402 + $0x54] sm:$0xf]
      %v4715 = vld [vmem:[%s4402 + $0x58] sm:$0xf]
      %v4716 = vld [vmem:[%s4402 + $0x5c] sm:$0x1]
      %v4717 = vld [vmem:[%s4402 + $0x60] sm:$0xf]
      %v4718 = vld [vmem:[%s4402 + $0x64] sm:$0xf]
      %v4719 = vld [vmem:[%s4402 + $0x68] sm:$0x1]
      %v4720 = vld [vmem:[%s4402 + $0x6c] sm:$0xf]
      %v4721 = vld [vmem:[%s4402 + $0x70] sm:$0xf]
      %v4722 = vld [vmem:[%s4402 + $0x74] sm:$0x1]
      %v4723 = vld [vmem:[%s4402 + $0x78] sm:$0xf]
      %v4724 = vld [vmem:[%s4402 + $0x7c] sm:$0xf]
      %v4725 = vld [vmem:[%s4402 + $0x80] sm:$0x1]
      %v4726 = vld [vmem:[%s4402 + $0x84] sm:$0xf]
      %v4727 = vld [vmem:[%s4402 + $0x88] sm:$0xf]
      %v4728 = vld [vmem:[%s4402 + $0x8c] sm:$0x1]
      %v4729 = vld [vmem:[%s4402 + $0x90] sm:$0xf]
      %v4730 = vld [vmem:[%s4402 + $0x94] sm:$0xf]
      %v4731 = vld [vmem:[%s4402 + $0x98] sm:$0x1]
      %v4732 = vld [vmem:[%s4402 + $0x9c] sm:$0xf]
      %v4733 = vld [vmem:[%s4402 + $0xa0] sm:$0xf]
      %v4734 = vld [vmem:[%s4402 + $0xa4] sm:$0x1]
      %v4735 = vld [vmem:[%s4402 + $0xa8] sm:$0xf]
      %v4736 = vld [vmem:[%s4402 + $0xac] sm:$0xf]
      %v4737 = vld [vmem:[%s4402 + $0xb0] sm:$0x1]
      %v4738 = vld [vmem:[%s4402 + $0xb4] sm:$0xf]
      %v4739 = vld [vmem:[%s4402 + $0xb8] sm:$0xf]
      %v4740 = vld [vmem:[%s4402 + $0xbc] sm:$0x1]
      %v4742 = vshrl.u32 %v4693, 16
      %v4744 = vrot.slane %v4742, 4
      %v4745 = vshll.u32 %v4693, 16
      %v4747 = vrot.slane %v4745, 5
      %v4748 = vor.u32 %v4744, %v4747
      %v4749 = vrot.slane %v4748, 4
      %v4751 = vshll.u32 %v4694, 16
      %v4753 = vrot.slane %v4751, 5
      %v4754 = vsel %vm1861, %v4749, %v4753
      %v4755 = vshrl.u32 %v4694, 16
      %v4757 = vrot.slane %v4755, 4
      %v4758 = vor.u32 %v4757, %v4753
      %v4759 = vrot.slane %v4758, 4
      %v4761 = vshll.u32 %v4695, 16
      %v4763 = vrot.slane %v4761, 5
      %v4764 = vsel %vm1861, %v4759, %v4763
      %v4766 = vshrl.u32 %v4696, 16
      %v4768 = vrot.slane %v4766, 4
      %v4769 = vshll.u32 %v4696, 16
      %v4771 = vrot.slane %v4769, 5
      %v4772 = vor.u32 %v4768, %v4771
      %v4773 = vrot.slane %v4772, 4
      %v4775 = vshll.u32 %v4697, 16
      %v4777 = vrot.slane %v4775, 5
      %v4778 = vsel %vm1861, %v4773, %v4777
      %v4779 = vshrl.u32 %v4697, 16
      %v4781 = vrot.slane %v4779, 4
      %v4782 = vor.u32 %v4781, %v4777
      %v4783 = vrot.slane %v4782, 4
      %v4785 = vshll.u32 %v4698, 16
      %v4787 = vrot.slane %v4785, 5
      %v4788 = vsel %vm1861, %v4783, %v4787
      %v4790 = vshrl.u32 %v4699, 16
      %v4792 = vrot.slane %v4790, 4
      %v4793 = vshll.u32 %v4699, 16
      %v4795 = vrot.slane %v4793, 5
      %v4796 = vor.u32 %v4792, %v4795
      %v4797 = vrot.slane %v4796, 4
      %v4799 = vshll.u32 %v4700, 16
      %v4801 = vrot.slane %v4799, 5
      %v4802 = vsel %vm1861, %v4797, %v4801
      %v4803 = vshrl.u32 %v4700, 16
      %v4805 = vrot.slane %v4803, 4
      %v4806 = vor.u32 %v4805, %v4801
      %v4807 = vrot.slane %v4806, 4
      %v4809 = vshll.u32 %v4701, 16
      %v4811 = vrot.slane %v4809, 5
      %v4812 = vsel %vm1861, %v4807, %v4811
      %v4814 = vshrl.u32 %v4702, 16
      %v4816 = vrot.slane %v4814, 4
      %v4817 = vshll.u32 %v4702, 16
      %v4819 = vrot.slane %v4817, 5
      %v4820 = vor.u32 %v4816, %v4819
      %v4821 = vrot.slane %v4820, 4
      %v4823 = vshll.u32 %v4703, 16
      %v4825 = vrot.slane %v4823, 5
      %v4826 = vsel %vm1861, %v4821, %v4825
      %v4827 = vshrl.u32 %v4703, 16
      %v4829 = vrot.slane %v4827, 4
      %v4830 = vor.u32 %v4829, %v4825
      %v4831 = vrot.slane %v4830, 4
      %v4833 = vshll.u32 %v4704, 16
      %v4835 = vrot.slane %v4833, 5
      %v4836 = vsel %vm1861, %v4831, %v4835
      %v4838 = vshrl.u32 %v4705, 16
      %v4840 = vrot.slane %v4838, 4
      %v4841 = vshll.u32 %v4705, 16
      %v4843 = vrot.slane %v4841, 5
      %v4844 = vor.u32 %v4840, %v4843
      %v4845 = vrot.slane %v4844, 4
      %v4847 = vshll.u32 %v4706, 16
      %v4849 = vrot.slane %v4847, 5
      %v4850 = vsel %vm1861, %v4845, %v4849
      %v4851 = vshrl.u32 %v4706, 16
      %v4853 = vrot.slane %v4851, 4
      %v4854 = vor.u32 %v4853, %v4849
      %v4855 = vrot.slane %v4854, 4
      %v4857 = vshll.u32 %v4707, 16
      %v4859 = vrot.slane %v4857, 5
      %v4860 = vsel %vm1861, %v4855, %v4859
      %v4862 = vshrl.u32 %v4708, 16
      %v4864 = vrot.slane %v4862, 4
      %v4865 = vshll.u32 %v4708, 16
      %v4867 = vrot.slane %v4865, 5
      %v4868 = vor.u32 %v4864, %v4867
      %v4869 = vrot.slane %v4868, 4
      %v4871 = vshll.u32 %v4709, 16
      %v4873 = vrot.slane %v4871, 5
      %v4874 = vsel %vm1861, %v4869, %v4873
      %v4875 = vshrl.u32 %v4709, 16
      %v4877 = vrot.slane %v4875, 4
      %v4878 = vor.u32 %v4877, %v4873
      %v4879 = vrot.slane %v4878, 4
      %v4881 = vshll.u32 %v4710, 16
      %v4883 = vrot.slane %v4881, 5
      %v4884 = vsel %vm1861, %v4879, %v4883
      %v4886 = vshrl.u32 %v4711, 16
      %v4888 = vrot.slane %v4886, 4
      %v4889 = vshll.u32 %v4711, 16
      %v4891 = vrot.slane %v4889, 5
      %v4892 = vor.u32 %v4888, %v4891
      %v4893 = vrot.slane %v4892, 4
      %v4895 = vshll.u32 %v4712, 16
      %v4897 = vrot.slane %v4895, 5
      %v4898 = vsel %vm1861, %v4893, %v4897
      %v4899 = vshrl.u32 %v4712, 16
      %v4901 = vrot.slane %v4899, 4
      %v4902 = vor.u32 %v4901, %v4897
      %v4903 = vrot.slane %v4902, 4
      %v4905 = vshll.u32 %v4713, 16
      %v4907 = vrot.slane %v4905, 5
      %v4908 = vsel %vm1861, %v4903, %v4907
      %v4910 = vshrl.u32 %v4714, 16
      %v4912 = vrot.slane %v4910, 4
      %v4913 = vshll.u32 %v4714, 16
      %v4915 = vrot.slane %v4913, 5
      %v4916 = vor.u32 %v4912, %v4915
      %v4917 = vrot.slane %v4916, 4
      %v4919 = vshll.u32 %v4715, 16
      %v4921 = vrot.slane %v4919, 5
      %v4922 = vsel %vm1861, %v4917, %v4921
      %v4923 = vshrl.u32 %v4715, 16
      %v4925 = vrot.slane %v4923, 4
      %v4926 = vor.u32 %v4925, %v4921
      %v4927 = vrot.slane %v4926, 4
      %v4929 = vshll.u32 %v4716, 16
      %v4931 = vrot.slane %v4929, 5
      %v4932 = vsel %vm1861, %v4927, %v4931
      %v4934 = vshrl.u32 %v4717, 16
      %v4936 = vrot.slane %v4934, 4
      %v4937 = vshll.u32 %v4717, 16
      %v4939 = vrot.slane %v4937, 5
      %v4940 = vor.u32 %v4936, %v4939
      %v4941 = vrot.slane %v4940, 4
      %v4943 = vshll.u32 %v4718, 16
      %v4945 = vrot.slane %v4943, 5
      %v4946 = vsel %vm1861, %v4941, %v4945
      %v4947 = vshrl.u32 %v4718, 16
      %v4949 = vrot.slane %v4947, 4
      %v4950 = vor.u32 %v4949, %v4945
      %v4951 = vrot.slane %v4950, 4
      %v4953 = vshll.u32 %v4719, 16
      %v4955 = vrot.slane %v4953, 5
      %v4956 = vsel %vm1861, %v4951, %v4955
      %v4958 = vshrl.u32 %v4720, 16
      %v4960 = vrot.slane %v4958, 4
      %v4961 = vshll.u32 %v4720, 16
      %v4963 = vrot.slane %v4961, 5
      %v4964 = vor.u32 %v4960, %v4963
      %v4965 = vrot.slane %v4964, 4
      %v4967 = vshll.u32 %v4721, 16
      %v4969 = vrot.slane %v4967, 5
      %v4970 = vsel %vm1861, %v4965, %v4969
      %v4971 = vshrl.u32 %v4721, 16
      %v4973 = vrot.slane %v4971, 4
      %v4974 = vor.u32 %v4973, %v4969
      %v4975 = vrot.slane %v4974, 4
      %v4977 = vshll.u32 %v4722, 16
      %v4979 = vrot.slane %v4977, 5
      %v4980 = vsel %vm1861, %v4975, %v4979
      %v4982 = vshrl.u32 %v4723, 16
      %v4984 = vrot.slane %v4982, 4
      %v4985 = vshll.u32 %v4723, 16
      %v4987 = vrot.slane %v4985, 5
      %v4988 = vor.u32 %v4984, %v4987
      %v4989 = vrot.slane %v4988, 4
      %v4991 = vshll.u32 %v4724, 16
      %v4993 = vrot.slane %v4991, 5
      %v4994 = vsel %vm1861, %v4989, %v4993
      %v4995 = vshrl.u32 %v4724, 16
      %v4997 = vrot.slane %v4995, 4
      %v4998 = vor.u32 %v4997, %v4993
      %v4999 = vrot.slane %v4998, 4
      %v5001 = vshll.u32 %v4725, 16
      %v5003 = vrot.slane %v5001, 5
      %v5004 = vsel %vm1861, %v4999, %v5003
      %v5006 = vshrl.u32 %v4726, 16
      %v5008 = vrot.slane %v5006, 4
      %v5009 = vshll.u32 %v4726, 16
      %v5011 = vrot.slane %v5009, 5
      %v5012 = vor.u32 %v5008, %v5011
      %v5013 = vrot.slane %v5012, 4
      %v5015 = vshll.u32 %v4727, 16
      %v5017 = vrot.slane %v5015, 5
      %v5018 = vsel %vm1861, %v5013, %v5017
      %v5019 = vshrl.u32 %v4727, 16
      %v5021 = vrot.slane %v5019, 4
      %v5022 = vor.u32 %v5021, %v5017
      %v5023 = vrot.slane %v5022, 4
      %v5025 = vshll.u32 %v4728, 16
      %v5027 = vrot.slane %v5025, 5
      %v5028 = vsel %vm1861, %v5023, %v5027
      %v5030 = vshrl.u32 %v4729, 16
      %v5032 = vrot.slane %v5030, 4
      %v5033 = vshll.u32 %v4729, 16
      %v5035 = vrot.slane %v5033, 5
      %v5036 = vor.u32 %v5032, %v5035
      %v5037 = vrot.slane %v5036, 4
      %v5039 = vshll.u32 %v4730, 16
      %v5041 = vrot.slane %v5039, 5
      %v5042 = vsel %vm1861, %v5037, %v5041
      %v5043 = vshrl.u32 %v4730, 16
      %v5045 = vrot.slane %v5043, 4
      %v5046 = vor.u32 %v5045, %v5041
      %v5047 = vrot.slane %v5046, 4
      %v5049 = vshll.u32 %v4731, 16
      %v5051 = vrot.slane %v5049, 5
      %v5052 = vsel %vm1861, %v5047, %v5051
      %v5054 = vshrl.u32 %v4732, 16
      %v5056 = vrot.slane %v5054, 4
      %v5057 = vshll.u32 %v4732, 16
      %v5059 = vrot.slane %v5057, 5
      %v5060 = vor.u32 %v5056, %v5059
      %v5061 = vrot.slane %v5060, 4
      %v5063 = vshll.u32 %v4733, 16
      %v5065 = vrot.slane %v5063, 5
      %v5066 = vsel %vm1861, %v5061, %v5065
      %v5067 = vshrl.u32 %v4733, 16
      %v5069 = vrot.slane %v5067, 4
      %v5070 = vor.u32 %v5069, %v5065
      %v5071 = vrot.slane %v5070, 4
      %v5073 = vshll.u32 %v4734, 16
      %v5075 = vrot.slane %v5073, 5
      %v5076 = vsel %vm1861, %v5071, %v5075
      %v5078 = vshrl.u32 %v4735, 16
      %v5080 = vrot.slane %v5078, 4
      %v5081 = vshll.u32 %v4735, 16
      %v5083 = vrot.slane %v5081, 5
      %v5084 = vor.u32 %v5080, %v5083
      %v5085 = vrot.slane %v5084, 4
      %v5087 = vshll.u32 %v4736, 16
      %v5089 = vrot.slane %v5087, 5
      %v5090 = vsel %vm1861, %v5085, %v5089
      %v5091 = vshrl.u32 %v4736, 16
      %v5093 = vrot.slane %v5091, 4
      %v5094 = vor.u32 %v5093, %v5089
      %v5095 = vrot.slane %v5094, 4
      %v5097 = vshll.u32 %v4737, 16
      %v5099 = vrot.slane %v5097, 5
      %v5100 = vsel %vm1861, %v5095, %v5099
      %v5102 = vshrl.u32 %v4738, 16
      %v5104 = vrot.slane %v5102, 4
      %v5105 = vshll.u32 %v4738, 16
      %v5107 = vrot.slane %v5105, 5
      %v5108 = vor.u32 %v5104, %v5107
      %v5109 = vrot.slane %v5108, 4
      %v5111 = vshll.u32 %v4739, 16
      %v5113 = vrot.slane %v5111, 5
      %v5114 = vsel %vm1861, %v5109, %v5113
      %v5115 = vshrl.u32 %v4739, 16
      %v5117 = vrot.slane %v5115, 4
      %v5118 = vor.u32 %v5117, %v5113
      %v5119 = vrot.slane %v5118, 4
      %v5121 = vshll.u32 %v4740, 16
      %v5123 = vrot.slane %v5121, 5
      %v5124 = vsel %vm1861, %v5119, %v5123
      %s5125 = scalar_lea.vmem %s5, 56
      %v5126 = vld [vmem:[%s5125] sm:$0xf]
      %v5127 = vld [vmem:[%s5125 + $0x4] sm:$0xf]
      %v5128 = vunpack.c.l.b16 %v4754
      %v5129 = vunpack.c.l.b16 %v4764
      %v5130 = vunpack.c.l.b16 %v4778
      %v5131 = vunpack.c.l.b16 %v4788
      %v5132 = vunpack.c.l.b16 %v4802
      %v5133 = vunpack.c.l.b16 %v4812
      %v5134 = vunpack.c.l.b16 %v4826
      %v5135 = vunpack.c.l.b16 %v4836
      %v5136 = vunpack.c.l.b16 %v4850
      %v5137 = vunpack.c.l.b16 %v4860
      %v5138 = vunpack.c.l.b16 %v4874
      %v5139 = vunpack.c.l.b16 %v4884
      %v5140 = vunpack.c.l.b16 %v4898
      %v5141 = vunpack.c.l.b16 %v4908
      %v5142 = vunpack.c.l.b16 %v4922
      %v5143 = vunpack.c.l.b16 %v4932
      %v5144 = vunpack.c.l.b16 %v4946
      %v5145 = vunpack.c.l.b16 %v4956
      %v5146 = vunpack.c.l.b16 %v4970
      %v5147 = vunpack.c.l.b16 %v4980
      %v5148 = vunpack.c.l.b16 %v4994
      %v5149 = vunpack.c.l.b16 %v5004
      %v5150 = vunpack.c.l.b16 %v5018
      %v5151 = vunpack.c.l.b16 %v5028
      %v5152 = vunpack.c.l.b16 %v5042
      %v5153 = vunpack.c.l.b16 %v5052
      %v5154 = vunpack.c.l.b16 %v5066
      %v5155 = vunpack.c.l.b16 %v5076
      %v5156 = vunpack.c.l.b16 %v5090
      %v5157 = vunpack.c.l.b16 %v5100
      %v5158 = vunpack.c.l.b16 %v5114
      %v5159 = vunpack.c.l.b16 %v5124
      %v5160 = vpack.c.b16 %v5129, %v5128
      %v5161 = vpack.c.b16 %v5131, %v5130
      %v5162 = vpack.c.b16 %v5133, %v5132
      %v5163 = vpack.c.b16 %v5135, %v5134
      %v5164 = vpack.c.b16 %v5137, %v5136
      %v5165 = vpack.c.b16 %v5139, %v5138
      %v5166 = vpack.c.b16 %v5141, %v5140
      %v5167 = vpack.c.b16 %v5143, %v5142
      %v5168 = vpack.c.b16 %v5145, %v5144
      %v5169 = vpack.c.b16 %v5147, %v5146
      %v5170 = vpack.c.b16 %v5149, %v5148
      %v5171 = vpack.c.b16 %v5151, %v5150
      %v5172 = vpack.c.b16 %v5153, %v5152
      %v5173 = vpack.c.b16 %v5155, %v5154
      %v5174 = vpack.c.b16 %v5157, %v5156
      %v5175 = vpack.c.b16 %v5159, %v5158
      %v5178 = vunpack.c.l.b16 %v5126
      %v5179 = vunpack.c.l.b16 %v5127
      %v5180 = vpack.c.b16 %v5179, %v5178
      %v5183 = vsel %vm458, %v5160, 0
      %v5186 = vsel %vm458, %v5161, 0
      %v5189 = vsel %vm458, %v5162, 0
      %v5192 = vsel %vm458, %v5163, 0
      %v5195 = vsel %vm458, %v5164, 0
      %v5198 = vsel %vm458, %v5165, 0
      %v5201 = vsel %vm458, %v5166, 0
      %v5204 = vsel %vm458, %v5167, 0
      %v5207 = vsel %vm458, %v5168, 0
      %v5210 = vsel %vm458, %v5169, 0
      %v5213 = vsel %vm458, %v5170, 0
      %v5216 = vsel %vm458, %v5171, 0
      %v5219 = vsel %vm458, %v5172, 0
      %v5222 = vsel %vm458, %v5173, 0
      %v5225 = vsel %vm458, %v5174, 0
      %v5228 = vsel %vm458, %v5175, 0
      %5230 = vmatpush.bf16.msra.mxu0 0
      %5231 = vmatpush.bf16.msra.mxu0 0
      %5232 = vmatpush.bf16.msra.mxu0 0
      %5233 = vmatpush.bf16.msra.mxu0 0
      %5234 = vmatpush.bf16.msra.mxu0 0
      %5235 = vmatpush.bf16.msra.mxu0 0
      %5236 = vmatpush.bf16.msra.mxu0 0
      %5237 = vmatpush.bf16.msra.mxu0 %v5180
      %5238 = vmatmul.bf16.gmra.mxu0 %v5183
      %v5239 = vpop.f32.mrf.mxu0
      %v5240 = vadd.f32 0.0, %v5239
      %v5241 = vpop.f32.mrf.mxu0
      %v5242 = vadd.f32 0.0, %v5241
      %5243 = vmatmul.bf16.gmra.mxu0 %v5186
      %v5244 = vpop.f32.mrf.mxu0
      %v5245 = vadd.f32 0.0, %v5244
      %v5246 = vpop.f32.mrf.mxu0
      %v5247 = vadd.f32 0.0, %v5246
      %5248 = vmatmul.bf16.gmra.mxu0 %v5189
      %v5249 = vpop.f32.mrf.mxu0
      %v5250 = vadd.f32 0.0, %v5249
      %v5251 = vpop.f32.mrf.mxu0
      %v5252 = vadd.f32 0.0, %v5251
      %5253 = vmatmul.bf16.gmra.mxu0 %v5192
      %v5254 = vpop.f32.mrf.mxu0
      %v5255 = vadd.f32 0.0, %v5254
      %v5256 = vpop.f32.mrf.mxu0
      %v5257 = vadd.f32 0.0, %v5256
      %5258 = vmatmul.bf16.gmra.mxu0 %v5195
      %v5259 = vpop.f32.mrf.mxu0
      %v5260 = vadd.f32 0.0, %v5259
      %v5261 = vpop.f32.mrf.mxu0
      %v5262 = vadd.f32 0.0, %v5261
      %5263 = vmatmul.bf16.gmra.mxu0 %v5198
      %v5264 = vpop.f32.mrf.mxu0
      %v5265 = vadd.f32 0.0, %v5264
      %v5266 = vpop.f32.mrf.mxu0
      %v5267 = vadd.f32 0.0, %v5266
      %5268 = vmatmul.bf16.gmra.mxu0 %v5201
      %v5269 = vpop.f32.mrf.mxu0
      %v5270 = vadd.f32 0.0, %v5269
      %v5271 = vpop.f32.mrf.mxu0
      %v5272 = vadd.f32 0.0, %v5271
      %5273 = vmatmul.bf16.gmra.mxu0 %v5204
      %v5274 = vpop.f32.mrf.mxu0
      %v5275 = vadd.f32 0.0, %v5274
      %v5276 = vpop.f32.mrf.mxu0
      %v5277 = vadd.f32 0.0, %v5276
      %5278 = vmatmul.bf16.gmra.mxu0 %v5207
      %v5279 = vpop.f32.mrf.mxu0
      %v5280 = vadd.f32 0.0, %v5279
      %v5281 = vpop.f32.mrf.mxu0
      %v5282 = vadd.f32 0.0, %v5281
      %5283 = vmatmul.bf16.gmra.mxu0 %v5210
      %v5284 = vpop.f32.mrf.mxu0
      %v5285 = vadd.f32 0.0, %v5284
      %v5286 = vpop.f32.mrf.mxu0
      %v5287 = vadd.f32 0.0, %v5286
      %5288 = vmatmul.bf16.gmra.mxu0 %v5213
      %v5289 = vpop.f32.mrf.mxu0
      %v5290 = vadd.f32 0.0, %v5289
      %v5291 = vpop.f32.mrf.mxu0
      %v5292 = vadd.f32 0.0, %v5291
      %5293 = vmatmul.bf16.gmra.mxu0 %v5216
      %v5294 = vpop.f32.mrf.mxu0
      %v5295 = vadd.f32 0.0, %v5294
      %v5296 = vpop.f32.mrf.mxu0
      %v5297 = vadd.f32 0.0, %v5296
      %5298 = vmatmul.bf16.gmra.mxu0 %v5219
      %v5299 = vpop.f32.mrf.mxu0
      %v5300 = vadd.f32 0.0, %v5299
      %v5301 = vpop.f32.mrf.mxu0
      %v5302 = vadd.f32 0.0, %v5301
      %5303 = vmatmul.bf16.gmra.mxu0 %v5222
      %v5304 = vpop.f32.mrf.mxu0
      %v5305 = vadd.f32 0.0, %v5304
      %v5306 = vpop.f32.mrf.mxu0
      %v5307 = vadd.f32 0.0, %v5306
      %5308 = vmatmul.bf16.gmra.mxu0 %v5225
      %v5309 = vpop.f32.mrf.mxu0
      %v5310 = vadd.f32 0.0, %v5309
      %v5311 = vpop.f32.mrf.mxu0
      %v5312 = vadd.f32 0.0, %v5311
      %5313 = vmatmul.bf16.gmra.mxu0 %v5228
      %v5314 = vpop.f32.mrf.mxu0
      %v5315 = vadd.f32 0.0, %v5314
      %v5316 = vpop.f32.mrf.mxu0
      %v5317 = vadd.f32 0.0, %v5316
      %5318 = vdwg.mxu0
      %v5319 = vadd.f32 %v4661, %v5240
      %v5320 = vadd.f32 %v4662, %v5242
      %v5321 = vadd.f32 %v4663, %v5245
      %v5322 = vadd.f32 %v4664, %v5247
      %v5323 = vadd.f32 %v4665, %v5250
      %v5324 = vadd.f32 %v4666, %v5252
      %v5325 = vadd.f32 %v4667, %v5255
      %v5326 = vadd.f32 %v4668, %v5257
      %v5327 = vadd.f32 %v4669, %v5260
      %v5328 = vadd.f32 %v4670, %v5262
      %v5329 = vadd.f32 %v4671, %v5265
      %v5330 = vadd.f32 %v4672, %v5267
      %v5331 = vadd.f32 %v4673, %v5270
      %v5332 = vadd.f32 %v4674, %v5272
      %v5333 = vadd.f32 %v4675, %v5275
      %v5334 = vadd.f32 %v4676, %v5277
      %v5335 = vadd.f32 %v4677, %v5280
      %v5336 = vadd.f32 %v4678, %v5282
      %v5337 = vadd.f32 %v4679, %v5285
      %v5338 = vadd.f32 %v4680, %v5287
      %v5339 = vadd.f32 %v4681, %v5290
      %v5340 = vadd.f32 %v4682, %v5292
      %v5341 = vadd.f32 %v4683, %v5295
      %v5342 = vadd.f32 %v4684, %v5297
      %v5343 = vadd.f32 %v4685, %v5300
      %v5344 = vadd.f32 %v4686, %v5302
      %v5345 = vadd.f32 %v4687, %v5305
      %v5346 = vadd.f32 %v4688, %v5307
      %v5347 = vadd.f32 %v4689, %v5310
      %v5348 = vadd.f32 %v4690, %v5312
      %v5349 = vadd.f32 %v4691, %v5315
      %v5350 = vadd.f32 %v4692, %v5317
      %v5351 = vld [vmem:[%s4402] sm:$0xe]
      %v5352 = vld [vmem:[%s4402 + $0xc] sm:$0xe]
      %v5353 = vld [vmem:[%s4402 + $0x18] sm:$0xe]
      %v5354 = vld [vmem:[%s4402 + $0x24] sm:$0xe]
      %v5355 = vld [vmem:[%s4402 + $0x30] sm:$0xe]
      %v5356 = vld [vmem:[%s4402 + $0x3c] sm:$0xe]
      %v5357 = vld [vmem:[%s4402 + $0x48] sm:$0xe]
      %v5358 = vld [vmem:[%s4402 + $0x54] sm:$0xe]
      %v5359 = vld [vmem:[%s4402 + $0x60] sm:$0xe]
      %v5360 = vld [vmem:[%s4402 + $0x6c] sm:$0xe]
      %v5361 = vld [vmem:[%s4402 + $0x78] sm:$0xe]
      %v5362 = vld [vmem:[%s4402 + $0x84] sm:$0xe]
      %v5363 = vld [vmem:[%s4402 + $0x90] sm:$0xe]
      %v5364 = vld [vmem:[%s4402 + $0x9c] sm:$0xe]
      %v5365 = vld [vmem:[%s4402 + $0xa8] sm:$0xe]
      %v5366 = vld [vmem:[%s4402 + $0xb4] sm:$0xe]
      %v5415 = vrot.slane %v5351, 5
      %v5416 = vrot.slane %v5415, 4
      %v5417 = vrot.slane %v4694, 5
      %v5418 = vsel %vm2713, %v5416, %v5417
      %v5419 = vrot.slane %v5417, 4
      %v5420 = vrot.slane %v4695, 5
      %v5421 = vsel %vm2713, %v5419, %v5420
      %v5422 = vrot.slane %v5352, 5
      %v5423 = vrot.slane %v5422, 4
      %v5424 = vrot.slane %v4697, 5
      %v5425 = vsel %vm2713, %v5423, %v5424
      %v5426 = vrot.slane %v5424, 4
      %v5427 = vrot.slane %v4698, 5
      %v5428 = vsel %vm2713, %v5426, %v5427
      %v5429 = vrot.slane %v5353, 5
      %v5430 = vrot.slane %v5429, 4
      %v5431 = vrot.slane %v4700, 5
      %v5432 = vsel %vm2713, %v5430, %v5431
      %v5433 = vrot.slane %v5431, 4
      %v5434 = vrot.slane %v4701, 5
      %v5435 = vsel %vm2713, %v5433, %v5434
      %v5436 = vrot.slane %v5354, 5
      %v5437 = vrot.slane %v5436, 4
      %v5438 = vrot.slane %v4703, 5
      %v5439 = vsel %vm2713, %v5437, %v5438
      %v5440 = vrot.slane %v5438, 4
      %v5441 = vrot.slane %v4704, 5
      %v5442 = vsel %vm2713, %v5440, %v5441
      %v5443 = vrot.slane %v5355, 5
      %v5444 = vrot.slane %v5443, 4
      %v5445 = vrot.slane %v4706, 5
      %v5446 = vsel %vm2713, %v5444, %v5445
      %v5447 = vrot.slane %v5445, 4
      %v5448 = vrot.slane %v4707, 5
      %v5449 = vsel %vm2713, %v5447, %v5448
      %v5450 = vrot.slane %v5356, 5
      %v5451 = vrot.slane %v5450, 4
      %v5452 = vrot.slane %v4709, 5
      %v5453 = vsel %vm2713, %v5451, %v5452
      %v5454 = vrot.slane %v5452, 4
      %v5455 = vrot.slane %v4710, 5
      %v5456 = vsel %vm2713, %v5454, %v5455
      %v5457 = vrot.slane %v5357, 5
      %v5458 = vrot.slane %v5457, 4
      %v5459 = vrot.slane %v4712, 5
      %v5460 = vsel %vm2713, %v5458, %v5459
      %v5461 = vrot.slane %v5459, 4
      %v5462 = vrot.slane %v4713, 5
      %v5463 = vsel %vm2713, %v5461, %v5462
      %v5464 = vrot.slane %v5358, 5
      %v5465 = vrot.slane %v5464, 4
      %v5466 = vrot.slane %v4715, 5
      %v5467 = vsel %vm2713, %v5465, %v5466
      %v5468 = vrot.slane %v5466, 4
      %v5469 = vrot.slane %v4716, 5
      %v5470 = vsel %vm2713, %v5468, %v5469
      %v5471 = vrot.slane %v5359, 5
      %v5472 = vrot.slane %v5471, 4
      %v5473 = vrot.slane %v4718, 5
      %v5474 = vsel %vm2713, %v5472, %v5473
      %v5475 = vrot.slane %v5473, 4
      %v5476 = vrot.slane %v4719, 5
      %v5477 = vsel %vm2713, %v5475, %v5476
      %v5478 = vrot.slane %v5360, 5
      %v5479 = vrot.slane %v5478, 4
      %v5480 = vrot.slane %v4721, 5
      %v5481 = vsel %vm2713, %v5479, %v5480
      %v5482 = vrot.slane %v5480, 4
      %v5483 = vrot.slane %v4722, 5
      %v5484 = vsel %vm2713, %v5482, %v5483
      %v5485 = vrot.slane %v5361, 5
      %v5486 = vrot.slane %v5485, 4
      %v5487 = vrot.slane %v4724, 5
      %v5488 = vsel %vm2713, %v5486, %v5487
      %v5489 = vrot.slane %v5487, 4
      %v5490 = vrot.slane %v4725, 5
      %v5491 = vsel %vm2713, %v5489, %v5490
      %v5492 = vrot.slane %v5362, 5
      %v5493 = vrot.slane %v5492, 4
      %v5494 = vrot.slane %v4727, 5
      %v5495 = vsel %vm2713, %v5493, %v5494
      %v5496 = vrot.slane %v5494, 4
      %v5497 = vrot.slane %v4728, 5
      %v5498 = vsel %vm2713, %v5496, %v5497
      %v5499 = vrot.slane %v5363, 5
      %v5500 = vrot.slane %v5499, 4
      %v5501 = vrot.slane %v4730, 5
      %v5502 = vsel %vm2713, %v5500, %v5501
      %v5503 = vrot.slane %v5501, 4
      %v5504 = vrot.slane %v4731, 5
      %v5505 = vsel %vm2713, %v5503, %v5504
      %v5506 = vrot.slane %v5364, 5
      %v5507 = vrot.slane %v5506, 4
      %v5508 = vrot.slane %v4733, 5
      %v5509 = vsel %vm2713, %v5507, %v5508
      %v5510 = vrot.slane %v5508, 4
      %v5511 = vrot.slane %v4734, 5
      %v5512 = vsel %vm2713, %v5510, %v5511
      %v5513 = vrot.slane %v5365, 5
      %v5514 = vrot.slane %v5513, 4
      %v5515 = vrot.slane %v4736, 5
      %v5516 = vsel %vm2713, %v5514, %v5515
      %v5517 = vrot.slane %v5515, 4
      %v5518 = vrot.slane %v4737, 5
      %v5519 = vsel %vm2713, %v5517, %v5518
      %v5520 = vrot.slane %v5366, 5
      %v5521 = vrot.slane %v5520, 4
      %v5522 = vrot.slane %v4739, 5
      %v5523 = vsel %vm2713, %v5521, %v5522
      %v5524 = vrot.slane %v5522, 4
      %v5525 = vrot.slane %v4740, 5
      %v5526 = vsel %vm2713, %v5524, %v5525
      %s5527 = scalar_lea.vmem %s5, 64
      %v5528 = vld [vmem:[%s5527] sm:$0xf]
      %v5529 = vld [vmem:[%s5527 + $0x4] sm:$0xf]
      %v5530 = vunpack.c.l.b16 %v5418
      %v5531 = vunpack.c.l.b16 %v5421
      %v5532 = vunpack.c.l.b16 %v5425
      %v5533 = vunpack.c.l.b16 %v5428
      %v5534 = vunpack.c.l.b16 %v5432
      %v5535 = vunpack.c.l.b16 %v5435
      %v5536 = vunpack.c.l.b16 %v5439
      %v5537 = vunpack.c.l.b16 %v5442
      %v5538 = vunpack.c.l.b16 %v5446
      %v5539 = vunpack.c.l.b16 %v5449
      %v5540 = vunpack.c.l.b16 %v5453
      %v5541 = vunpack.c.l.b16 %v5456
      %v5542 = vunpack.c.l.b16 %v5460
      %v5543 = vunpack.c.l.b16 %v5463
      %v5544 = vunpack.c.l.b16 %v5467
      %v5545 = vunpack.c.l.b16 %v5470
      %v5546 = vunpack.c.l.b16 %v5474
      %v5547 = vunpack.c.l.b16 %v5477
      %v5548 = vunpack.c.l.b16 %v5481
      %v5549 = vunpack.c.l.b16 %v5484
      %v5550 = vunpack.c.l.b16 %v5488
      %v5551 = vunpack.c.l.b16 %v5491
      %v5552 = vunpack.c.l.b16 %v5495
      %v5553 = vunpack.c.l.b16 %v5498
      %v5554 = vunpack.c.l.b16 %v5502
      %v5555 = vunpack.c.l.b16 %v5505
      %v5556 = vunpack.c.l.b16 %v5509
      %v5557 = vunpack.c.l.b16 %v5512
      %v5558 = vunpack.c.l.b16 %v5516
      %v5559 = vunpack.c.l.b16 %v5519
      %v5560 = vunpack.c.l.b16 %v5523
      %v5561 = vunpack.c.l.b16 %v5526
      %v5562 = vpack.c.b16 %v5531, %v5530
      %v5563 = vpack.c.b16 %v5533, %v5532
      %v5564 = vpack.c.b16 %v5535, %v5534
      %v5565 = vpack.c.b16 %v5537, %v5536
      %v5566 = vpack.c.b16 %v5539, %v5538
      %v5567 = vpack.c.b16 %v5541, %v5540
      %v5568 = vpack.c.b16 %v5543, %v5542
      %v5569 = vpack.c.b16 %v5545, %v5544
      %v5570 = vpack.c.b16 %v5547, %v5546
      %v5571 = vpack.c.b16 %v5549, %v5548
      %v5572 = vpack.c.b16 %v5551, %v5550
      %v5573 = vpack.c.b16 %v5553, %v5552
      %v5574 = vpack.c.b16 %v5555, %v5554
      %v5575 = vpack.c.b16 %v5557, %v5556
      %v5576 = vpack.c.b16 %v5559, %v5558
      %v5577 = vpack.c.b16 %v5561, %v5560
      %v5580 = vunpack.c.l.b16 %v5528
      %v5581 = vunpack.c.l.b16 %v5529
      %v5582 = vpack.c.b16 %v5581, %v5580
      %v5585 = vsel %vm458, %v5562, 0
      %v5588 = vsel %vm458, %v5563, 0
      %v5591 = vsel %vm458, %v5564, 0
      %v5594 = vsel %vm458, %v5565, 0
      %v5597 = vsel %vm458, %v5566, 0
      %v5600 = vsel %vm458, %v5567, 0
      %v5603 = vsel %vm458, %v5568, 0
      %v5606 = vsel %vm458, %v5569, 0
      %v5609 = vsel %vm458, %v5570, 0
      %v5612 = vsel %vm458, %v5571, 0
      %v5615 = vsel %vm458, %v5572, 0
      %v5618 = vsel %vm458, %v5573, 0
      %v5621 = vsel %vm458, %v5574, 0
      %v5624 = vsel %vm458, %v5575, 0
      %v5627 = vsel %vm458, %v5576, 0
      %v5630 = vsel %vm458, %v5577, 0
      %5632 = vmatpush.bf16.msra.mxu0 0
      %5633 = vmatpush.bf16.msra.mxu0 0
      %5634 = vmatpush.bf16.msra.mxu0 0
      %5635 = vmatpush.bf16.msra.mxu0 0
      %5636 = vmatpush.bf16.msra.mxu0 0
      %5637 = vmatpush.bf16.msra.mxu0 0
      %5638 = vmatpush.bf16.msra.mxu0 0
      %5639 = vmatpush.bf16.msra.mxu0 %v5582
      %5640 = vmatmul.bf16.gmra.mxu0 %v5585
      %v5641 = vpop.f32.mrf.mxu0
      %v5642 = vadd.f32 0.0, %v5641
      %v5643 = vpop.f32.mrf.mxu0
      %v5644 = vadd.f32 0.0, %v5643
      %5645 = vmatmul.bf16.gmra.mxu0 %v5588
      %v5646 = vpop.f32.mrf.mxu0
      %v5647 = vadd.f32 0.0, %v5646
      %v5648 = vpop.f32.mrf.mxu0
      %v5649 = vadd.f32 0.0, %v5648
      %5650 = vmatmul.bf16.gmra.mxu0 %v5591
      %v5651 = vpop.f32.mrf.mxu0
      %v5652 = vadd.f32 0.0, %v5651
      %v5653 = vpop.f32.mrf.mxu0
      %v5654 = vadd.f32 0.0, %v5653
      %5655 = vmatmul.bf16.gmra.mxu0 %v5594
      %v5656 = vpop.f32.mrf.mxu0
      %v5657 = vadd.f32 0.0, %v5656
      %v5658 = vpop.f32.mrf.mxu0
      %v5659 = vadd.f32 0.0, %v5658
      %5660 = vmatmul.bf16.gmra.mxu0 %v5597
      %v5661 = vpop.f32.mrf.mxu0
      %v5662 = vadd.f32 0.0, %v5661
      %v5663 = vpop.f32.mrf.mxu0
      %v5664 = vadd.f32 0.0, %v5663
      %5665 = vmatmul.bf16.gmra.mxu0 %v5600
      %v5666 = vpop.f32.mrf.mxu0
      %v5667 = vadd.f32 0.0, %v5666
      %v5668 = vpop.f32.mrf.mxu0
      %v5669 = vadd.f32 0.0, %v5668
      %5670 = vmatmul.bf16.gmra.mxu0 %v5603
      %v5671 = vpop.f32.mrf.mxu0
      %v5672 = vadd.f32 0.0, %v5671
      %v5673 = vpop.f32.mrf.mxu0
      %v5674 = vadd.f32 0.0, %v5673
      %5675 = vmatmul.bf16.gmra.mxu0 %v5606
      %v5676 = vpop.f32.mrf.mxu0
      %v5677 = vadd.f32 0.0, %v5676
      %v5678 = vpop.f32.mrf.mxu0
      %v5679 = vadd.f32 0.0, %v5678
      %5680 = vmatmul.bf16.gmra.mxu0 %v5609
      %v5681 = vpop.f32.mrf.mxu0
      %v5682 = vadd.f32 0.0, %v5681
      %v5683 = vpop.f32.mrf.mxu0
      %v5684 = vadd.f32 0.0, %v5683
      %5685 = vmatmul.bf16.gmra.mxu0 %v5612
      %v5686 = vpop.f32.mrf.mxu0
      %v5687 = vadd.f32 0.0, %v5686
      %v5688 = vpop.f32.mrf.mxu0
      %v5689 = vadd.f32 0.0, %v5688
      %5690 = vmatmul.bf16.gmra.mxu0 %v5615
      %v5691 = vpop.f32.mrf.mxu0
      %v5692 = vadd.f32 0.0, %v5691
      %v5693 = vpop.f32.mrf.mxu0
      %v5694 = vadd.f32 0.0, %v5693
      %5695 = vmatmul.bf16.gmra.mxu0 %v5618
      %v5696 = vpop.f32.mrf.mxu0
      %v5697 = vadd.f32 0.0, %v5696
      %v5698 = vpop.f32.mrf.mxu0
      %v5699 = vadd.f32 0.0, %v5698
      %5700 = vmatmul.bf16.gmra.mxu0 %v5621
      %v5701 = vpop.f32.mrf.mxu0
      %v5702 = vadd.f32 0.0, %v5701
      %v5703 = vpop.f32.mrf.mxu0
      %v5704 = vadd.f32 0.0, %v5703
      %5705 = vmatmul.bf16.gmra.mxu0 %v5624
      %v5706 = vpop.f32.mrf.mxu0
      %v5707 = vadd.f32 0.0, %v5706
      %v5708 = vpop.f32.mrf.mxu0
      %v5709 = vadd.f32 0.0, %v5708
      %5710 = vmatmul.bf16.gmra.mxu0 %v5627
      %v5711 = vpop.f32.mrf.mxu0
      %v5712 = vadd.f32 0.0, %v5711
      %v5713 = vpop.f32.mrf.mxu0
      %v5714 = vadd.f32 0.0, %v5713
      %5715 = vmatmul.bf16.gmra.mxu0 %v5630
      %v5716 = vpop.f32.mrf.mxu0
      %v5717 = vadd.f32 0.0, %v5716
      %v5718 = vpop.f32.mrf.mxu0
      %v5719 = vadd.f32 0.0, %v5718
      %5720 = vdwg.mxu0
      %v5721 = vadd.f32 %v5319, %v5642
      %v5722 = vadd.f32 %v5320, %v5644
      %v5723 = vadd.f32 %v5321, %v5647
      %v5724 = vadd.f32 %v5322, %v5649
      %v5725 = vadd.f32 %v5323, %v5652
      %v5726 = vadd.f32 %v5324, %v5654
      %v5727 = vadd.f32 %v5325, %v5657
      %v5728 = vadd.f32 %v5326, %v5659
      %v5729 = vadd.f32 %v5327, %v5662
      %v5730 = vadd.f32 %v5328, %v5664
      %v5731 = vadd.f32 %v5329, %v5667
      %v5732 = vadd.f32 %v5330, %v5669
      %v5733 = vadd.f32 %v5331, %v5672
      %v5734 = vadd.f32 %v5332, %v5674
      %v5735 = vadd.f32 %v5333, %v5677
      %v5736 = vadd.f32 %v5334, %v5679
      %v5737 = vadd.f32 %v5335, %v5682
      %v5738 = vadd.f32 %v5336, %v5684
      %v5739 = vadd.f32 %v5337, %v5687
      %v5740 = vadd.f32 %v5338, %v5689
      %v5741 = vadd.f32 %v5339, %v5692
      %v5742 = vadd.f32 %v5340, %v5694
      %v5743 = vadd.f32 %v5341, %v5697
      %v5744 = vadd.f32 %v5342, %v5699
      %v5745 = vadd.f32 %v5343, %v5702
      %v5746 = vadd.f32 %v5344, %v5704
      %v5747 = vadd.f32 %v5345, %v5707
      %v5748 = vadd.f32 %v5346, %v5709
      %v5749 = vadd.f32 %v5347, %v5712
      %v5750 = vadd.f32 %v5348, %v5714
      %v5751 = vadd.f32 %v5349, %v5717
      %v5752 = vadd.f32 %v5350, %v5719
      %v5753 = vld [vmem:[%s6] sm:$0x1]
      %v5755 = vperm.slane %v5753, 0
      %v5757 = vadd.f32 %v5721, %v5755
      %v5758 = vadd.f32 %v5722, %v5755
      %v5759 = vadd.f32 %v5723, %v5755
      %v5760 = vadd.f32 %v5724, %v5755
      %v5761 = vadd.f32 %v5725, %v5755
      %v5762 = vadd.f32 %v5726, %v5755
      %v5763 = vadd.f32 %v5727, %v5755
      %v5764 = vadd.f32 %v5728, %v5755
      %v5765 = vadd.f32 %v5729, %v5755
      %v5766 = vadd.f32 %v5730, %v5755
      %v5767 = vadd.f32 %v5731, %v5755
      %v5768 = vadd.f32 %v5732, %v5755
      %v5769 = vadd.f32 %v5733, %v5755
      %v5770 = vadd.f32 %v5734, %v5755
      %v5771 = vadd.f32 %v5735, %v5755
      %v5772 = vadd.f32 %v5736, %v5755
      %v5773 = vadd.f32 %v5737, %v5755
      %v5774 = vadd.f32 %v5738, %v5755
      %v5775 = vadd.f32 %v5739, %v5755
      %v5776 = vadd.f32 %v5740, %v5755
      %v5777 = vadd.f32 %v5741, %v5755
      %v5778 = vadd.f32 %v5742, %v5755
      %v5779 = vadd.f32 %v5743, %v5755
      %v5780 = vadd.f32 %v5744, %v5755
      %v5781 = vadd.f32 %v5745, %v5755
      %v5782 = vadd.f32 %v5746, %v5755
      %v5783 = vadd.f32 %v5747, %v5755
      %v5784 = vadd.f32 %v5748, %v5755
      %v5785 = vadd.f32 %v5749, %v5755
      %v5786 = vadd.f32 %v5750, %v5755
      %v5787 = vadd.f32 %v5751, %v5755
      %v5788 = vadd.f32 %v5752, %v5755
      %vm5789 = vcmp.gt.f32.partialorder %v5757, 0.0
      %vm5790 = vcmp.gt.f32.partialorder %v5758, 0.0
      %vm5791 = vcmp.gt.f32.partialorder %v5759, 0.0
      %vm5792 = vcmp.gt.f32.partialorder %v5760, 0.0
      %vm5793 = vcmp.gt.f32.partialorder %v5761, 0.0
      %vm5794 = vcmp.gt.f32.partialorder %v5762, 0.0
      %vm5795 = vcmp.gt.f32.partialorder %v5763, 0.0
      %vm5796 = vcmp.gt.f32.partialorder %v5764, 0.0
      %vm5797 = vcmp.gt.f32.partialorder %v5765, 0.0
      %vm5798 = vcmp.gt.f32.partialorder %v5766, 0.0
      %vm5799 = vcmp.gt.f32.partialorder %v5767, 0.0
      %vm5800 = vcmp.gt.f32.partialorder %v5768, 0.0
      %vm5801 = vcmp.gt.f32.partialorder %v5769, 0.0
      %vm5802 = vcmp.gt.f32.partialorder %v5770, 0.0
      %vm5803 = vcmp.gt.f32.partialorder %v5771, 0.0
      %vm5804 = vcmp.gt.f32.partialorder %v5772, 0.0
      %vm5805 = vcmp.gt.f32.partialorder %v5773, 0.0
      %vm5806 = vcmp.gt.f32.partialorder %v5774, 0.0
      %vm5807 = vcmp.gt.f32.partialorder %v5775, 0.0
      %vm5808 = vcmp.gt.f32.partialorder %v5776, 0.0
      %vm5809 = vcmp.gt.f32.partialorder %v5777, 0.0
      %vm5810 = vcmp.gt.f32.partialorder %v5778, 0.0
      %vm5811 = vcmp.gt.f32.partialorder %v5779, 0.0
      %vm5812 = vcmp.gt.f32.partialorder %v5780, 0.0
      %vm5813 = vcmp.gt.f32.partialorder %v5781, 0.0
      %vm5814 = vcmp.gt.f32.partialorder %v5782, 0.0
      %vm5815 = vcmp.gt.f32.partialorder %v5783, 0.0
      %vm5816 = vcmp.gt.f32.partialorder %v5784, 0.0
      %vm5817 = vcmp.gt.f32.partialorder %v5785, 0.0
      %vm5818 = vcmp.gt.f32.partialorder %v5786, 0.0
      %vm5819 = vcmp.gt.f32.partialorder %v5787, 0.0
      %vm5820 = vcmp.gt.f32.partialorder %v5788, 0.0
      %v5821 = vmul.f32 %v5757, 1.442695
      %v5822 = vpow.pop %v5821
      %v5823 = vmul.f32 %v5758, 1.442695
      %v5824 = vpow.pop %v5823
      %v5825 = vmul.f32 %v5759, 1.442695
      %v5826 = vpow.pop %v5825
      %v5827 = vmul.f32 %v5760, 1.442695
      %v5828 = vpow.pop %v5827
      %v5829 = vmul.f32 %v5761, 1.442695
      %v5830 = vpow.pop %v5829
      %v5831 = vmul.f32 %v5762, 1.442695
      %v5832 = vpow.pop %v5831
      %v5833 = vmul.f32 %v5763, 1.442695
      %v5834 = vpow.pop %v5833
      %v5835 = vmul.f32 %v5764, 1.442695
      %v5836 = vpow.pop %v5835
      %v5837 = vmul.f32 %v5765, 1.442695
      %v5838 = vpow.pop %v5837
      %v5839 = vmul.f32 %v5766, 1.442695
      %v5840 = vpow.pop %v5839
      %v5841 = vmul.f32 %v5767, 1.442695
      %v5842 = vpow.pop %v5841
      %v5843 = vmul.f32 %v5768, 1.442695
      %v5844 = vpow.pop %v5843
      %v5845 = vmul.f32 %v5769, 1.442695
      %v5846 = vpow.pop %v5845
      %v5847 = vmul.f32 %v5770, 1.442695
      %v5848 = vpow.pop %v5847
      %v5849 = vmul.f32 %v5771, 1.442695
      %v5850 = vpow.pop %v5849
      %v5851 = vmul.f32 %v5772, 1.442695
      %v5852 = vpow.pop %v5851
      %v5853 = vmul.f32 %v5773, 1.442695
      %v5854 = vpow.pop %v5853
      %v5855 = vmul.f32 %v5774, 1.442695
      %v5856 = vpow.pop %v5855
      %v5857 = vmul.f32 %v5775, 1.442695
      %v5858 = vpow.pop %v5857
      %v5859 = vmul.f32 %v5776, 1.442695
      %v5860 = vpow.pop %v5859
      %v5861 = vmul.f32 %v5777, 1.442695
      %v5862 = vpow.pop %v5861
      %v5863 = vmul.f32 %v5778, 1.442695
      %v5864 = vpow.pop %v5863
      %v5865 = vmul.f32 %v5779, 1.442695
      %v5866 = vpow.pop %v5865
      %v5867 = vmul.f32 %v5780, 1.442695
      %v5868 = vpow.pop %v5867
      %v5869 = vmul.f32 %v5781, 1.442695
      %v5870 = vpow.pop %v5869
      %v5871 = vmul.f32 %v5782, 1.442695
      %v5872 = vpow.pop %v5871
      %v5873 = vmul.f32 %v5783, 1.442695
      %v5874 = vpow.pop %v5873
      %v5875 = vmul.f32 %v5784, 1.442695
      %v5876 = vpow.pop %v5875
      %v5877 = vmul.f32 %v5785, 1.442695
      %v5878 = vpow.pop %v5877
      %v5879 = vmul.f32 %v5786, 1.442695
      %v5880 = vpow.pop %v5879
      %v5881 = vmul.f32 %v5787, 1.442695
      %v5882 = vpow.pop %v5881
      %v5883 = vmul.f32 %v5788, 1.442695
      %v5884 = vpow.pop %v5883
      %v5885 = vsub.f32 %v5822, 1.0
      %v5886 = vsub.f32 %v5824, 1.0
      %v5887 = vsub.f32 %v5826, 1.0
      %v5888 = vsub.f32 %v5828, 1.0
      %v5889 = vsub.f32 %v5830, 1.0
      %v5890 = vsub.f32 %v5832, 1.0
      %v5891 = vsub.f32 %v5834, 1.0
      %v5892 = vsub.f32 %v5836, 1.0
      %v5893 = vsub.f32 %v5838, 1.0
      %v5894 = vsub.f32 %v5840, 1.0
      %v5895 = vsub.f32 %v5842, 1.0
      %v5896 = vsub.f32 %v5844, 1.0
      %v5897 = vsub.f32 %v5846, 1.0
      %v5898 = vsub.f32 %v5848, 1.0
      %v5899 = vsub.f32 %v5850, 1.0
      %v5900 = vsub.f32 %v5852, 1.0
      %v5901 = vsub.f32 %v5854, 1.0
      %v5902 = vsub.f32 %v5856, 1.0
      %v5903 = vsub.f32 %v5858, 1.0
      %v5904 = vsub.f32 %v5860, 1.0
      %v5905 = vsub.f32 %v5862, 1.0
      %v5906 = vsub.f32 %v5864, 1.0
      %v5907 = vsub.f32 %v5866, 1.0
      %v5908 = vsub.f32 %v5868, 1.0
      %v5909 = vsub.f32 %v5870, 1.0
      %v5910 = vsub.f32 %v5872, 1.0
      %v5911 = vsub.f32 %v5874, 1.0
      %v5912 = vsub.f32 %v5876, 1.0
      %v5913 = vsub.f32 %v5878, 1.0
      %v5914 = vsub.f32 %v5880, 1.0
      %v5915 = vsub.f32 %v5882, 1.0
      %v5916 = vsub.f32 %v5884, 1.0
      %v5917 = vmul.f32 %v5885, 1.6732632
      %v5918 = vmul.f32 %v5886, 1.6732632
      %v5919 = vmul.f32 %v5887, 1.6732632
      %v5920 = vmul.f32 %v5888, 1.6732632
      %v5921 = vmul.f32 %v5889, 1.6732632
      %v5922 = vmul.f32 %v5890, 1.6732632
      %v5923 = vmul.f32 %v5891, 1.6732632
      %v5924 = vmul.f32 %v5892, 1.6732632
      %v5925 = vmul.f32 %v5893, 1.6732632
      %v5926 = vmul.f32 %v5894, 1.6732632
      %v5927 = vmul.f32 %v5895, 1.6732632
      %v5928 = vmul.f32 %v5896, 1.6732632
      %v5929 = vmul.f32 %v5897, 1.6732632
      %v5930 = vmul.f32 %v5898, 1.6732632
      %v5931 = vmul.f32 %v5899, 1.6732632
      %v5932 = vmul.f32 %v5900, 1.6732632
      %v5933 = vmul.f32 %v5901, 1.6732632
      %v5934 = vmul.f32 %v5902, 1.6732632
      %v5935 = vmul.f32 %v5903, 1.6732632
      %v5936 = vmul.f32 %v5904, 1.6732632
      %v5937 = vmul.f32 %v5905, 1.6732632
      %v5938 = vmul.f32 %v5906, 1.6732632
      %v5939 = vmul.f32 %v5907, 1.6732632
      %v5940 = vmul.f32 %v5908, 1.6732632
      %v5941 = vmul.f32 %v5909, 1.6732632
      %v5942 = vmul.f32 %v5910, 1.6732632
      %v5943 = vmul.f32 %v5911, 1.6732632
      %v5944 = vmul.f32 %v5912, 1.6732632
      %v5945 = vmul.f32 %v5913, 1.6732632
      %v5946 = vmul.f32 %v5914, 1.6732632
      %v5947 = vmul.f32 %v5915, 1.6732632
      %v5948 = vmul.f32 %v5916, 1.6732632
      %v5949 = vsel %vm5789, %v5757, %v5917
      %v5950 = vsel %vm5790, %v5758, %v5918
      %v5951 = vsel %vm5791, %v5759, %v5919
      %v5952 = vsel %vm5792, %v5760, %v5920
      %v5953 = vsel %vm5793, %v5761, %v5921
      %v5954 = vsel %vm5794, %v5762, %v5922
      %v5955 = vsel %vm5795, %v5763, %v5923
      %v5956 = vsel %vm5796, %v5764, %v5924
      %v5957 = vsel %vm5797, %v5765, %v5925
      %v5958 = vsel %vm5798, %v5766, %v5926
      %v5959 = vsel %vm5799, %v5767, %v5927
      %v5960 = vsel %vm5800, %v5768, %v5928
      %v5961 = vsel %vm5801, %v5769, %v5929
      %v5962 = vsel %vm5802, %v5770, %v5930
      %v5963 = vsel %vm5803, %v5771, %v5931
      %v5964 = vsel %vm5804, %v5772, %v5932
      %v5965 = vsel %vm5805, %v5773, %v5933
      %v5966 = vsel %vm5806, %v5774, %v5934
      %v5967 = vsel %vm5807, %v5775, %v5935
      %v5968 = vsel %vm5808, %v5776, %v5936
      %v5969 = vsel %vm5809, %v5777, %v5937
      %v5970 = vsel %vm5810, %v5778, %v5938
      %v5971 = vsel %vm5811, %v5779, %v5939
      %v5972 = vsel %vm5812, %v5780, %v5940
      %v5973 = vsel %vm5813, %v5781, %v5941
      %v5974 = vsel %vm5814, %v5782, %v5942
      %v5975 = vsel %vm5815, %v5783, %v5943
      %v5976 = vsel %vm5816, %v5784, %v5944
      %v5977 = vsel %vm5817, %v5785, %v5945
      %v5978 = vsel %vm5818, %v5786, %v5946
      %v5979 = vsel %vm5819, %v5787, %v5947
      %v5980 = vsel %vm5820, %v5788, %v5948
      %v5981 = vmul.f32 %v5949, 1.050701
      %v5982 = vmul.f32 %v5950, 1.050701
      %v5983 = vmul.f32 %v5951, 1.050701
      %v5984 = vmul.f32 %v5952, 1.050701
      %v5985 = vmul.f32 %v5953, 1.050701
      %v5986 = vmul.f32 %v5954, 1.050701
      %v5987 = vmul.f32 %v5955, 1.050701
      %v5988 = vmul.f32 %v5956, 1.050701
      %v5989 = vmul.f32 %v5957, 1.050701
      %v5990 = vmul.f32 %v5958, 1.050701
      %v5991 = vmul.f32 %v5959, 1.050701
      %v5992 = vmul.f32 %v5960, 1.050701
      %v5993 = vmul.f32 %v5961, 1.050701
      %v5994 = vmul.f32 %v5962, 1.050701
      %v5995 = vmul.f32 %v5963, 1.050701
      %v5996 = vmul.f32 %v5964, 1.050701
      %v5997 = vmul.f32 %v5965, 1.050701
      %v5998 = vmul.f32 %v5966, 1.050701
      %v5999 = vmul.f32 %v5967, 1.050701
      %v6000 = vmul.f32 %v5968, 1.050701
      %v6001 = vmul.f32 %v5969, 1.050701
      %v6002 = vmul.f32 %v5970, 1.050701
      %v6003 = vmul.f32 %v5971, 1.050701
      %v6004 = vmul.f32 %v5972, 1.050701
      %v6005 = vmul.f32 %v5973, 1.050701
      %v6006 = vmul.f32 %v5974, 1.050701
      %v6007 = vmul.f32 %v5975, 1.050701
      %v6008 = vmul.f32 %v5976, 1.050701
      %v6009 = vmul.f32 %v5977, 1.050701
      %v6010 = vmul.f32 %v5978, 1.050701
      %v6011 = vmul.f32 %v5979, 1.050701
      %v6012 = vmul.f32 %v5980, 1.050701
      %v6013 = vadd.f32 %v788, %v5981
      %v6014 = vadd.f32 %v789, %v5982
      %v6015 = vadd.f32 %v790, %v5983
      %v6016 = vadd.f32 %v791, %v5984
      %v6017 = vadd.f32 %v792, %v5985
      %v6018 = vadd.f32 %v793, %v5986
      %v6019 = vadd.f32 %v794, %v5987
      %v6020 = vadd.f32 %v795, %v5988
      %v6021 = vadd.f32 %v796, %v5989
      %v6022 = vadd.f32 %v797, %v5990
      %v6023 = vadd.f32 %v798, %v5991
      %v6024 = vadd.f32 %v799, %v5992
      %v6025 = vadd.f32 %v800, %v5993
      %v6026 = vadd.f32 %v801, %v5994
      %v6027 = vadd.f32 %v802, %v5995
      %v6028 = vadd.f32 %v803, %v5996
      %v6029 = vadd.f32 %v804, %v5997
      %v6030 = vadd.f32 %v805, %v5998
      %v6031 = vadd.f32 %v806, %v5999
      %v6032 = vadd.f32 %v807, %v6000
      %v6033 = vadd.f32 %v808, %v6001
      %v6034 = vadd.f32 %v809, %v6002
      %v6035 = vadd.f32 %v810, %v6003
      %v6036 = vadd.f32 %v811, %v6004
      %v6037 = vadd.f32 %v812, %v6005
      %v6038 = vadd.f32 %v813, %v6006
      %v6039 = vadd.f32 %v814, %v6007
      %v6040 = vadd.f32 %v815, %v6008
      %v6041 = vadd.f32 %v816, %v6009
      %v6042 = vadd.f32 %v817, %v6010
      %v6043 = vadd.f32 %v818, %v6011
      %v6044 = vadd.f32 %v819, %v6012
      %v6045 = vpack.c.bf16 %v6014, %v6013
      %v6046 = vpack.c.bf16 %v6016, %v6015
      %v6047 = vpack.c.bf16 %v6018, %v6017
      %v6048 = vpack.c.bf16 %v6020, %v6019
      %v6049 = vpack.c.bf16 %v6022, %v6021
      %v6050 = vpack.c.bf16 %v6024, %v6023
      %v6051 = vpack.c.bf16 %v6026, %v6025
      %v6052 = vpack.c.bf16 %v6028, %v6027
      %v6053 = vpack.c.bf16 %v6030, %v6029
      %v6054 = vpack.c.bf16 %v6032, %v6031
      %v6055 = vpack.c.bf16 %v6034, %v6033
      %v6056 = vpack.c.bf16 %v6036, %v6035
      %v6057 = vpack.c.bf16 %v6038, %v6037
      %v6058 = vpack.c.bf16 %v6040, %v6039
      %v6059 = vpack.c.bf16 %v6042, %v6041
      %v6060 = vpack.c.bf16 %v6044, %v6043
      %v6061 = vld [vmem:[%s7] sm:$0xf]
      %v6062 = vld [vmem:[%s7 + $0x4] sm:$0xf]
      %v6063 = vld [vmem:[%s7 + $0x8] sm:$0xf]
      %v6064 = vld [vmem:[%s7 + $0xc] sm:$0xf]
      %v6065 = vld [vmem:[%s8] sm:$0x1]
      %v6067 = vperm.slane %v6065, 0
      %v6073 = vunpack.c.l.b16 %v6061
      %v6074 = vunpack.c.l.b16 %v6062
      %v6075 = vunpack.c.l.b16 %v6063
      %v6076 = vunpack.c.l.b16 %v6064
      %v6077 = vpack.c.b16 %v6074, %v6073
      %v6078 = vpack.c.b16 %v6076, %v6075
      %v6082 = vsel %vm856, %v6045, 0
      %v6085 = vsel %vm856, %v6046, 0
      %v6088 = vsel %vm856, %v6047, 0
      %v6091 = vsel %vm856, %v6048, 0
      %v6094 = vsel %vm856, %v6049, 0
      %v6097 = vsel %vm856, %v6050, 0
      %v6100 = vsel %vm856, %v6051, 0
      %v6103 = vsel %vm856, %v6052, 0
      %v6106 = vsel %vm856, %v6053, 0
      %v6109 = vsel %vm856, %v6054, 0
      %v6112 = vsel %vm856, %v6055, 0
      %v6115 = vsel %vm856, %v6056, 0
      %v6118 = vsel %vm856, %v6057, 0
      %v6121 = vsel %vm856, %v6058, 0
      %v6124 = vsel %vm856, %v6059, 0
      %v6127 = vsel %vm856, %v6060, 0
      %6129 = vmatpush.bf16.msra.mxu0 0
      %6130 = vmatpush.bf16.msra.mxu0 0
      %6131 = vmatpush.bf16.msra.mxu0 0
      %6132 = vmatpush.bf16.msra.mxu0 0
      %6133 = vmatpush.bf16.msra.mxu0 0
      %6134 = vmatpush.bf16.msra.mxu0 0
      %6135 = vmatpush.bf16.msra.mxu0 %v6078
      %6136 = vmatpush.bf16.msra.mxu0 %v6077
      %6137 = vmatmul.bf16.gmra.mxu0 %v6082
      %v6138 = vpop.f32.mrf.mxu0
      %v6139 = vadd.f32 %v6067, %v6138
      %v6140 = vpop.f32.mrf.mxu0
      %v6141 = vadd.f32 %v6067, %v6140
      %6142 = vmatmul.bf16.gmra.mxu0 %v6085
      %v6143 = vpop.f32.mrf.mxu0
      %v6144 = vadd.f32 %v6067, %v6143
      %v6145 = vpop.f32.mrf.mxu0
      %v6146 = vadd.f32 %v6067, %v6145
      %6147 = vmatmul.bf16.gmra.mxu0 %v6088
      %v6148 = vpop.f32.mrf.mxu0
      %v6149 = vadd.f32 %v6067, %v6148
      %v6150 = vpop.f32.mrf.mxu0
      %v6151 = vadd.f32 %v6067, %v6150
      %6152 = vmatmul.bf16.gmra.mxu0 %v6091
      %v6153 = vpop.f32.mrf.mxu0
      %v6154 = vadd.f32 %v6067, %v6153
      %v6155 = vpop.f32.mrf.mxu0
      %v6156 = vadd.f32 %v6067, %v6155
      %6157 = vmatmul.bf16.gmra.mxu0 %v6094
      %v6158 = vpop.f32.mrf.mxu0
      %v6159 = vadd.f32 %v6067, %v6158
      %v6160 = vpop.f32.mrf.mxu0
      %v6161 = vadd.f32 %v6067, %v6160
      %6162 = vmatmul.bf16.gmra.mxu0 %v6097
      %v6163 = vpop.f32.mrf.mxu0
      %v6164 = vadd.f32 %v6067, %v6163
      %v6165 = vpop.f32.mrf.mxu0
      %v6166 = vadd.f32 %v6067, %v6165
      %6167 = vmatmul.bf16.gmra.mxu0 %v6100
      %v6168 = vpop.f32.mrf.mxu0
      %v6169 = vadd.f32 %v6067, %v6168
      %v6170 = vpop.f32.mrf.mxu0
      %v6171 = vadd.f32 %v6067, %v6170
      %6172 = vmatmul.bf16.gmra.mxu0 %v6103
      %v6173 = vpop.f32.mrf.mxu0
      %v6174 = vadd.f32 %v6067, %v6173
      %v6175 = vpop.f32.mrf.mxu0
      %v6176 = vadd.f32 %v6067, %v6175
      %6177 = vmatmul.bf16.gmra.mxu0 %v6106
      %v6178 = vpop.f32.mrf.mxu0
      %v6179 = vadd.f32 %v6067, %v6178
      %v6180 = vpop.f32.mrf.mxu0
      %v6181 = vadd.f32 %v6067, %v6180
      %6182 = vmatmul.bf16.gmra.mxu0 %v6109
      %v6183 = vpop.f32.mrf.mxu0
      %v6184 = vadd.f32 %v6067, %v6183
      %v6185 = vpop.f32.mrf.mxu0
      %v6186 = vadd.f32 %v6067, %v6185
      %6187 = vmatmul.bf16.gmra.mxu0 %v6112
      %v6188 = vpop.f32.mrf.mxu0
      %v6189 = vadd.f32 %v6067, %v6188
      %v6190 = vpop.f32.mrf.mxu0
      %v6191 = vadd.f32 %v6067, %v6190
      %6192 = vmatmul.bf16.gmra.mxu0 %v6115
      %v6193 = vpop.f32.mrf.mxu0
      %v6194 = vadd.f32 %v6067, %v6193
      %v6195 = vpop.f32.mrf.mxu0
      %v6196 = vadd.f32 %v6067, %v6195
      %6197 = vmatmul.bf16.gmra.mxu0 %v6118
      %v6198 = vpop.f32.mrf.mxu0
      %v6199 = vadd.f32 %v6067, %v6198
      %v6200 = vpop.f32.mrf.mxu0
      %v6201 = vadd.f32 %v6067, %v6200
      %6202 = vmatmul.bf16.gmra.mxu0 %v6121
      %v6203 = vpop.f32.mrf.mxu0
      %v6204 = vadd.f32 %v6067, %v6203
      %v6205 = vpop.f32.mrf.mxu0
      %v6206 = vadd.f32 %v6067, %v6205
      %6207 = vmatmul.bf16.gmra.mxu0 %v6124
      %v6208 = vpop.f32.mrf.mxu0
      %v6209 = vadd.f32 %v6067, %v6208
      %v6210 = vpop.f32.mrf.mxu0
      %v6211 = vadd.f32 %v6067, %v6210
      %6212 = vmatmul.bf16.gmra.mxu0 %v6127
      %v6213 = vpop.f32.mrf.mxu0
      %v6214 = vadd.f32 %v6067, %v6213
      %v6215 = vpop.f32.mrf.mxu0
      %v6216 = vadd.f32 %v6067, %v6215
      %6217 = vdwg.mxu0
      %vm6218 = vcmp.gt.f32.partialorder %v6139, 0.0
      %vm6219 = vcmp.gt.f32.partialorder %v6141, 0.0
      %vm6220 = vcmp.gt.f32.partialorder %v6144, 0.0
      %vm6221 = vcmp.gt.f32.partialorder %v6146, 0.0
      %vm6222 = vcmp.gt.f32.partialorder %v6149, 0.0
      %vm6223 = vcmp.gt.f32.partialorder %v6151, 0.0
      %vm6224 = vcmp.gt.f32.partialorder %v6154, 0.0
      %vm6225 = vcmp.gt.f32.partialorder %v6156, 0.0
      %vm6226 = vcmp.gt.f32.partialorder %v6159, 0.0
      %vm6227 = vcmp.gt.f32.partialorder %v6161, 0.0
      %vm6228 = vcmp.gt.f32.partialorder %v6164, 0.0
      %vm6229 = vcmp.gt.f32.partialorder %v6166, 0.0
      %vm6230 = vcmp.gt.f32.partialorder %v6169, 0.0
      %vm6231 = vcmp.gt.f32.partialorder %v6171, 0.0
      %vm6232 = vcmp.gt.f32.partialorder %v6174, 0.0
      %vm6233 = vcmp.gt.f32.partialorder %v6176, 0.0
      %vm6234 = vcmp.gt.f32.partialorder %v6179, 0.0
      %vm6235 = vcmp.gt.f32.partialorder %v6181, 0.0
      %vm6236 = vcmp.gt.f32.partialorder %v6184, 0.0
      %vm6237 = vcmp.gt.f32.partialorder %v6186, 0.0
      %vm6238 = vcmp.gt.f32.partialorder %v6189, 0.0
      %vm6239 = vcmp.gt.f32.partialorder %v6191, 0.0
      %vm6240 = vcmp.gt.f32.partialorder %v6194, 0.0
      %vm6241 = vcmp.gt.f32.partialorder %v6196, 0.0
      %vm6242 = vcmp.gt.f32.partialorder %v6199, 0.0
      %vm6243 = vcmp.gt.f32.partialorder %v6201, 0.0
      %vm6244 = vcmp.gt.f32.partialorder %v6204, 0.0
      %vm6245 = vcmp.gt.f32.partialorder %v6206, 0.0
      %vm6246 = vcmp.gt.f32.partialorder %v6209, 0.0
      %vm6247 = vcmp.gt.f32.partialorder %v6211, 0.0
      %vm6248 = vcmp.gt.f32.partialorder %v6214, 0.0
      %vm6249 = vcmp.gt.f32.partialorder %v6216, 0.0
      %v6250 = vmul.f32 %v6139, 1.442695
      %v6251 = vpow.pop %v6250
      %v6252 = vmul.f32 %v6141, 1.442695
      %v6253 = vpow.pop %v6252
      %v6254 = vmul.f32 %v6144, 1.442695
      %v6255 = vpow.pop %v6254
      %v6256 = vmul.f32 %v6146, 1.442695
      %v6257 = vpow.pop %v6256
      %v6258 = vmul.f32 %v6149, 1.442695
      %v6259 = vpow.pop %v6258
      %v6260 = vmul.f32 %v6151, 1.442695
      %v6261 = vpow.pop %v6260
      %v6262 = vmul.f32 %v6154, 1.442695
      %v6263 = vpow.pop %v6262
      %v6264 = vmul.f32 %v6156, 1.442695
      %v6265 = vpow.pop %v6264
      %v6266 = vmul.f32 %v6159, 1.442695
      %v6267 = vpow.pop %v6266
      %v6268 = vmul.f32 %v6161, 1.442695
      %v6269 = vpow.pop %v6268
      %v6270 = vmul.f32 %v6164, 1.442695
      %v6271 = vpow.pop %v6270
      %v6272 = vmul.f32 %v6166, 1.442695
      %v6273 = vpow.pop %v6272
      %v6274 = vmul.f32 %v6169, 1.442695
      %v6275 = vpow.pop %v6274
      %v6276 = vmul.f32 %v6171, 1.442695
      %v6277 = vpow.pop %v6276
      %v6278 = vmul.f32 %v6174, 1.442695
      %v6279 = vpow.pop %v6278
      %v6280 = vmul.f32 %v6176, 1.442695
      %v6281 = vpow.pop %v6280
      %v6282 = vmul.f32 %v6179, 1.442695
      %v6283 = vpow.pop %v6282
      %v6284 = vmul.f32 %v6181, 1.442695
      %v6285 = vpow.pop %v6284
      %v6286 = vmul.f32 %v6184, 1.442695
      %v6287 = vpow.pop %v6286
      %v6288 = vmul.f32 %v6186, 1.442695
      %v6289 = vpow.pop %v6288
      %v6290 = vmul.f32 %v6189, 1.442695
      %v6291 = vpow.pop %v6290
      %v6292 = vmul.f32 %v6191, 1.442695
      %v6293 = vpow.pop %v6292
      %v6294 = vmul.f32 %v6194, 1.442695
      %v6295 = vpow.pop %v6294
      %v6296 = vmul.f32 %v6196, 1.442695
      %v6297 = vpow.pop %v6296
      %v6298 = vmul.f32 %v6199, 1.442695
      %v6299 = vpow.pop %v6298
      %v6300 = vmul.f32 %v6201, 1.442695
      %v6301 = vpow.pop %v6300
      %v6302 = vmul.f32 %v6204, 1.442695
      %v6303 = vpow.pop %v6302
      %v6304 = vmul.f32 %v6206, 1.442695
      %v6305 = vpow.pop %v6304
      %v6306 = vmul.f32 %v6209, 1.442695
      %v6307 = vpow.pop %v6306
      %v6308 = vmul.f32 %v6211, 1.442695
      %v6309 = vpow.pop %v6308
      %v6310 = vmul.f32 %v6214, 1.442695
      %v6311 = vpow.pop %v6310
      %v6312 = vmul.f32 %v6216, 1.442695
      %v6313 = vpow.pop %v6312
      %v6314 = vsub.f32 %v6251, 1.0
      %v6315 = vsub.f32 %v6253, 1.0
      %v6316 = vsub.f32 %v6255, 1.0
      %v6317 = vsub.f32 %v6257, 1.0
      %v6318 = vsub.f32 %v6259, 1.0
      %v6319 = vsub.f32 %v6261, 1.0
      %v6320 = vsub.f32 %v6263, 1.0
      %v6321 = vsub.f32 %v6265, 1.0
      %v6322 = vsub.f32 %v6267, 1.0
      %v6323 = vsub.f32 %v6269, 1.0
      %v6324 = vsub.f32 %v6271, 1.0
      %v6325 = vsub.f32 %v6273, 1.0
      %v6326 = vsub.f32 %v6275, 1.0
      %v6327 = vsub.f32 %v6277, 1.0
      %v6328 = vsub.f32 %v6279, 1.0
      %v6329 = vsub.f32 %v6281, 1.0
      %v6330 = vsub.f32 %v6283, 1.0
      %v6331 = vsub.f32 %v6285, 1.0
      %v6332 = vsub.f32 %v6287, 1.0
      %v6333 = vsub.f32 %v6289, 1.0
      %v6334 = vsub.f32 %v6291, 1.0
      %v6335 = vsub.f32 %v6293, 1.0
      %v6336 = vsub.f32 %v6295, 1.0
      %v6337 = vsub.f32 %v6297, 1.0
      %v6338 = vsub.f32 %v6299, 1.0
      %v6339 = vsub.f32 %v6301, 1.0
      %v6340 = vsub.f32 %v6303, 1.0
      %v6341 = vsub.f32 %v6305, 1.0
      %v6342 = vsub.f32 %v6307, 1.0
      %v6343 = vsub.f32 %v6309, 1.0
      %v6344 = vsub.f32 %v6311, 1.0
      %v6345 = vsub.f32 %v6313, 1.0
      %v6346 = vmul.f32 %v6314, 1.6732632
      %v6347 = vmul.f32 %v6315, 1.6732632
      %v6348 = vmul.f32 %v6316, 1.6732632
      %v6349 = vmul.f32 %v6317, 1.6732632
      %v6350 = vmul.f32 %v6318, 1.6732632
      %v6351 = vmul.f32 %v6319, 1.6732632
      %v6352 = vmul.f32 %v6320, 1.6732632
      %v6353 = vmul.f32 %v6321, 1.6732632
      %v6354 = vmul.f32 %v6322, 1.6732632
      %v6355 = vmul.f32 %v6323, 1.6732632
      %v6356 = vmul.f32 %v6324, 1.6732632
      %v6357 = vmul.f32 %v6325, 1.6732632
      %v6358 = vmul.f32 %v6326, 1.6732632
      %v6359 = vmul.f32 %v6327, 1.6732632
      %v6360 = vmul.f32 %v6328, 1.6732632
      %v6361 = vmul.f32 %v6329, 1.6732632
      %v6362 = vmul.f32 %v6330, 1.6732632
      %v6363 = vmul.f32 %v6331, 1.6732632
      %v6364 = vmul.f32 %v6332, 1.6732632
      %v6365 = vmul.f32 %v6333, 1.6732632
      %v6366 = vmul.f32 %v6334, 1.6732632
      %v6367 = vmul.f32 %v6335, 1.6732632
      %v6368 = vmul.f32 %v6336, 1.6732632
      %v6369 = vmul.f32 %v6337, 1.6732632
      %v6370 = vmul.f32 %v6338, 1.6732632
      %v6371 = vmul.f32 %v6339, 1.6732632
      %v6372 = vmul.f32 %v6340, 1.6732632
      %v6373 = vmul.f32 %v6341, 1.6732632
      %v6374 = vmul.f32 %v6342, 1.6732632
      %v6375 = vmul.f32 %v6343, 1.6732632
      %v6376 = vmul.f32 %v6344, 1.6732632
      %v6377 = vmul.f32 %v6345, 1.6732632
      %v6378 = vsel %vm6218, %v6139, %v6346
      %v6379 = vsel %vm6219, %v6141, %v6347
      %v6380 = vsel %vm6220, %v6144, %v6348
      %v6381 = vsel %vm6221, %v6146, %v6349
      %v6382 = vsel %vm6222, %v6149, %v6350
      %v6383 = vsel %vm6223, %v6151, %v6351
      %v6384 = vsel %vm6224, %v6154, %v6352
      %v6385 = vsel %vm6225, %v6156, %v6353
      %v6386 = vsel %vm6226, %v6159, %v6354
      %v6387 = vsel %vm6227, %v6161, %v6355
      %v6388 = vsel %vm6228, %v6164, %v6356
      %v6389 = vsel %vm6229, %v6166, %v6357
      %v6390 = vsel %vm6230, %v6169, %v6358
      %v6391 = vsel %vm6231, %v6171, %v6359
      %v6392 = vsel %vm6232, %v6174, %v6360
      %v6393 = vsel %vm6233, %v6176, %v6361
      %v6394 = vsel %vm6234, %v6179, %v6362
      %v6395 = vsel %vm6235, %v6181, %v6363
      %v6396 = vsel %vm6236, %v6184, %v6364
      %v6397 = vsel %vm6237, %v6186, %v6365
      %v6398 = vsel %vm6238, %v6189, %v6366
      %v6399 = vsel %vm6239, %v6191, %v6367
      %v6400 = vsel %vm6240, %v6194, %v6368
      %v6401 = vsel %vm6241, %v6196, %v6369
      %v6402 = vsel %vm6242, %v6199, %v6370
      %v6403 = vsel %vm6243, %v6201, %v6371
      %v6404 = vsel %vm6244, %v6204, %v6372
      %v6405 = vsel %vm6245, %v6206, %v6373
      %v6406 = vsel %vm6246, %v6209, %v6374
      %v6407 = vsel %vm6247, %v6211, %v6375
      %v6408 = vsel %vm6248, %v6214, %v6376
      %v6409 = vsel %vm6249, %v6216, %v6377
      %v6410 = vmul.f32 %v6378, 1.050701
      %v6411 = vmul.f32 %v6379, 1.050701
      %v6412 = vmul.f32 %v6380, 1.050701
      %v6413 = vmul.f32 %v6381, 1.050701
      %v6414 = vmul.f32 %v6382, 1.050701
      %v6415 = vmul.f32 %v6383, 1.050701
      %v6416 = vmul.f32 %v6384, 1.050701
      %v6417 = vmul.f32 %v6385, 1.050701
      %v6418 = vmul.f32 %v6386, 1.050701
      %v6419 = vmul.f32 %v6387, 1.050701
      %v6420 = vmul.f32 %v6388, 1.050701
      %v6421 = vmul.f32 %v6389, 1.050701
      %v6422 = vmul.f32 %v6390, 1.050701
      %v6423 = vmul.f32 %v6391, 1.050701
      %v6424 = vmul.f32 %v6392, 1.050701
      %v6425 = vmul.f32 %v6393, 1.050701
      %v6426 = vmul.f32 %v6394, 1.050701
      %v6427 = vmul.f32 %v6395, 1.050701
      %v6428 = vmul.f32 %v6396, 1.050701
      %v6429 = vmul.f32 %v6397, 1.050701
      %v6430 = vmul.f32 %v6398, 1.050701
      %v6431 = vmul.f32 %v6399, 1.050701
      %v6432 = vmul.f32 %v6400, 1.050701
      %v6433 = vmul.f32 %v6401, 1.050701
      %v6434 = vmul.f32 %v6402, 1.050701
      %v6435 = vmul.f32 %v6403, 1.050701
      %v6436 = vmul.f32 %v6404, 1.050701
      %v6437 = vmul.f32 %v6405, 1.050701
      %v6438 = vmul.f32 %v6406, 1.050701
      %v6439 = vmul.f32 %v6407, 1.050701
      %v6440 = vmul.f32 %v6408, 1.050701
      %v6441 = vmul.f32 %v6409, 1.050701
      %v6442 = vpack.c.bf16 %v6410, %v6410
      %v6443 = vpack.c.bf16 %v6411, %v6411
      %v6444 = vpack.c.bf16 %v6412, %v6412
      %v6445 = vpack.c.bf16 %v6413, %v6413
      %v6446 = vpack.c.bf16 %v6414, %v6414
      %v6447 = vpack.c.bf16 %v6415, %v6415
      %v6448 = vpack.c.bf16 %v6416, %v6416
      %v6449 = vpack.c.bf16 %v6417, %v6417
      %v6450 = vpack.c.bf16 %v6418, %v6418
      %v6451 = vpack.c.bf16 %v6419, %v6419
      %v6452 = vpack.c.bf16 %v6420, %v6420
      %v6453 = vpack.c.bf16 %v6421, %v6421
      %v6454 = vpack.c.bf16 %v6422, %v6422
      %v6455 = vpack.c.bf16 %v6423, %v6423
      %v6456 = vpack.c.bf16 %v6424, %v6424
      %v6457 = vpack.c.bf16 %v6425, %v6425
      %v6458 = vpack.c.bf16 %v6426, %v6426
      %v6459 = vpack.c.bf16 %v6427, %v6427
      %v6460 = vpack.c.bf16 %v6428, %v6428
      %v6461 = vpack.c.bf16 %v6429, %v6429
      %v6462 = vpack.c.bf16 %v6430, %v6430
      %v6463 = vpack.c.bf16 %v6431, %v6431
      %v6464 = vpack.c.bf16 %v6432, %v6432
      %v6465 = vpack.c.bf16 %v6433, %v6433
      %v6466 = vpack.c.bf16 %v6434, %v6434
      %v6467 = vpack.c.bf16 %v6435, %v6435
      %v6468 = vpack.c.bf16 %v6436, %v6436
      %v6469 = vpack.c.bf16 %v6437, %v6437
      %v6470 = vpack.c.bf16 %v6438, %v6438
      %v6471 = vpack.c.bf16 %v6439, %v6439
      %v6472 = vpack.c.bf16 %v6440, %v6440
      %v6473 = vpack.c.bf16 %v6441, %v6441
      %6474 = vst.msk [vmem:[%s332] sm:$0xf] %vm1218, %v6442
      %6475 = vst.msk [vmem:[%s332 + $0x4] sm:$0xf] %vm1218, %v6443
      %6476 = vst.msk [vmem:[%s332 + $0x8] sm:$0xf] %vm1218, %v6444
      %6477 = vst.msk [vmem:[%s332 + $0xc] sm:$0xf] %vm1218, %v6445
      %6478 = vst.msk [vmem:[%s332 + $0x10] sm:$0xf] %vm1218, %v6446
      %6479 = vst.msk [vmem:[%s332 + $0x14] sm:$0xf] %vm1218, %v6447
      %6480 = vst.msk [vmem:[%s332 + $0x18] sm:$0xf] %vm1218, %v6448
      %6481 = vst.msk [vmem:[%s332 + $0x1c] sm:$0xf] %vm1218, %v6449
      %6482 = vst.msk [vmem:[%s332 + $0x20] sm:$0xf] %vm1218, %v6450
      %6483 = vst.msk [vmem:[%s332 + $0x24] sm:$0xf] %vm1218, %v6451
      %6484 = vst.msk [vmem:[%s332 + $0x28] sm:$0xf] %vm1218, %v6452
      %6485 = vst.msk [vmem:[%s332 + $0x2c] sm:$0xf] %vm1218, %v6453
      %6486 = vst.msk [vmem:[%s332 + $0x30] sm:$0xf] %vm1218, %v6454
      %6487 = vst.msk [vmem:[%s332 + $0x34] sm:$0xf] %vm1218, %v6455
      %6488 = vst.msk [vmem:[%s332 + $0x38] sm:$0xf] %vm1218, %v6456
      %6489 = vst.msk [vmem:[%s332 + $0x3c] sm:$0xf] %vm1218, %v6457
      %6490 = vst.msk [vmem:[%s332 + $0x40] sm:$0xf] %vm1218, %v6458
      %6491 = vst.msk [vmem:[%s332 + $0x44] sm:$0xf] %vm1218, %v6459
      %6492 = vst.msk [vmem:[%s332 + $0x48] sm:$0xf] %vm1218, %v6460
      %6493 = vst.msk [vmem:[%s332 + $0x4c] sm:$0xf] %vm1218, %v6461
      %6494 = vst.msk [vmem:[%s332 + $0x50] sm:$0xf] %vm1218, %v6462
      %6495 = vst.msk [vmem:[%s332 + $0x54] sm:$0xf] %vm1218, %v6463
      %6496 = vst.msk [vmem:[%s332 + $0x58] sm:$0xf] %vm1218, %v6464
      %6497 = vst.msk [vmem:[%s332 + $0x5c] sm:$0xf] %vm1218, %v6465
      %6498 = vst.msk [vmem:[%s332 + $0x60] sm:$0xf] %vm1218, %v6466
      %6499 = vst.msk [vmem:[%s332 + $0x64] sm:$0xf] %vm1218, %v6467
      %6500 = vst.msk [vmem:[%s332 + $0x68] sm:$0xf] %vm1218, %v6468
      %6501 = vst.msk [vmem:[%s332 + $0x6c] sm:$0xf] %vm1218, %v6469
      %6502 = vst.msk [vmem:[%s332 + $0x70] sm:$0xf] %vm1218, %v6470
      %6503 = vst.msk [vmem:[%s332 + $0x74] sm:$0xf] %vm1218, %v6471
      %6504 = vst.msk [vmem:[%s332 + $0x78] sm:$0xf] %vm1218, %v6472
      %6505 = vst.msk [vmem:[%s332 + $0x7c] sm:$0xf] %vm1218, %v6473
      %p6506 = scmp.lt.s32.totalorder %s20, 1
      %s6507 = scalar_select %p6506, %s20, 1
      %s6508 = smul.addr %s6507, 32
      %s6509 = smul.addr %s6508, 4
      %s6510 = scalar_lea.vmem %s9, %s6509
      // Predicated region
      $region57: #{c3_forward.1} parent=55 // pred_check
        %p6511 = pneg %p232
      $region58: #{c3_forward.1} parent=55 // pred_check_branch
        %6513 = sbr.rel (%p6511) target = $region60
      $region59: #{c3_forward.1} parent=55 // pred_region
        _
      $region60: #{c3_forward.1} parent=55 // pred_fallthru
        _
    $region56: #{c3_forward.1} parent=5 // pred_fallthru
      _
    %p6514 = scmp.le.s32.totalorder 2, %s15
    // Predicated region
    $region61: #{c3_forward.1} parent=5 // pred_check
      %p6515 = pneg %p6514
    $region62: #{c3_forward.1} parent=5 // pred_check_branch
      %6517 = sbr.rel (%p6515) target = $region64
    $region63: #{c3_forward.1} parent=5 // pred_region
      %s6518 = ssub.s32 %s15, 2
      // Predicated region
      $region65: #{c3_forward.1} parent=63 // pred_check
        %p6519 = pneg %p238
      $region66: #{c3_forward.1} parent=63 // pred_check_branch
        %6521 = sbr.rel (%p6519) target = $region68
      $region67: #{c3_forward.1} parent=63 // pred_region
        %p6522 = scmp.lt.s32.totalorder %s21, 1
        %s6523 = scalar_select %p6522, %s21, 1
        %s6524 = smul.addr %s6523, 32
        %s6525 = smul.addr %s6524, 4
        %s6526 = scalar_lea.vmem %s9, %s6525
      $region68: #{c3_forward.1} parent=63 // pred_fallthru
        _
    $region64: #{c3_forward.1} parent=5 // pred_fallthru
      _
  $region6: #{c3_forward.1} parent=0 // loop_footer
    %s19 = sadd.s32 1, %s15
  $region7: #{c3_forward.1} parent=0 // loop_footer_branch
    %14 = sbr.rel target = $region3
  $region8: #{c3_forward.1} parent=0 // loop_exit
    _

</llo_original>
